<compile_context>
chip_gen: v5e
topology: v5e:2x2
jax: 0.10.0
libtpu: 0.0.40
codegen_flags: <defaults>
</compile_context>

<pallas_src>
import functools

import jax
import jax.numpy as jnp
from jax.experimental import pallas as pl
from jax.experimental.pallas import tpu as pltpu

LANE = 128                       # TPU lane width (output-channel pad)
SUB = 16                         # bf16 sublane granule (contraction pad)
EPS = 1e-5                       # nn.BatchNorm2d default eps
NEG_SLOPE = 0.2                  # nn.LeakyReLU(0.2)
VMEM_LIMIT = 32 * 1024 * 1024    # explicit budget; fits v7x's 64 MiB VMEM


def _round_up(x, m):
    return ((x + m - 1) // m) * m


# ----------------------------- Pallas kernels ------------------------------ #

def _mm_act_kernel(a_ref, b_ref, o_ref, *, act):
    """(TM, Kp) x (Kp, Np) bf16 GEMM, f32 accumulate, fused LeakyReLU."""
    acc = jnp.dot(a_ref[...], b_ref[...], preferred_element_type=jnp.float32)
    if act == "leaky":
        acc = jnp.maximum(acc, NEG_SLOPE * acc)
    o_ref[...] = acc.astype(o_ref.dtype)


def _mm_bn_act_kernel(a_ref, b_ref, g_ref, bt_ref, o_ref, *, m_true):
    """Whole-layer GEMM + training-mode BatchNorm + LeakyReLU, fully fused.

    Padded rows of A are all-zero, so they contribute nothing to the
    per-channel sums; dividing by the true row count m_true yields exact
    batch statistics (biased variance, as PyTorch uses for normalization).
    """
    conv = jnp.dot(a_ref[...], b_ref[...], preferred_element_type=jnp.float32)
    inv_m = 1.0 / m_true
    mean = jnp.sum(conv, axis=0, keepdims=True) * inv_m          # (1, Np)
    var = jnp.sum(conv * conv, axis=0, keepdims=True) * inv_m - mean * mean
    scale = g_ref[...] * jax.lax.rsqrt(var + EPS)                # EUP rsqrt
    shift = bt_ref[...] - mean * scale
    y = conv * scale + shift
    o_ref[...] = jnp.maximum(y, NEG_SLOPE * y).astype(o_ref.dtype)


# ----------------------------- GEMM wrappers -------------------------------- #

def gemm_act(a, w_mat, act, m_blocks, out_dtype):
    """a: (M, Kc) bf16, w_mat: (Kc, Co) bf16 -> (M, Co), fused activation."""
    M, Kc = a.shape
    Co = w_mat.shape[1]
    tm = _round_up(pl.cdiv(M, m_blocks), SUB)
    Mp = tm * m_blocks
    Kp = _round_up(Kc, SUB)          # block covers full K -> only sublane pad
    Np = _round_up(Co, LANE)         # lane-dense output
    a_p = jnp.pad(a, ((0, Mp - M), (0, Kp - Kc)))
    b_p = jnp.pad(w_mat, ((0, Kp - Kc), (0, Np - Co)))
    out = pl.pallas_call(
        functools.partial(_mm_act_kernel, act=act),
        out_shape=jax.ShapeDtypeStruct((Mp, Np), out_dtype),
        grid=(m_blocks,),
        in_specs=[pl.BlockSpec((tm, Kp), lambda i: (i, 0)),
                  pl.BlockSpec((Kp, Np), lambda i: (0, 0))],
        out_specs=pl.BlockSpec((tm, Np), lambda i: (i, 0)),
        compiler_params=pltpu.CompilerParams(
            dimension_semantics=("parallel",),
            vmem_limit_bytes=VMEM_LIMIT),
    )(a_p, b_p)
    return out[:M, :Co]


def gemm_bn_act(a, w_mat, gamma, beta, out_dtype):
    """Single-block fused conv GEMM + BatchNorm(batch stats) + LeakyReLU."""
    M, Kc = a.shape
    Co = w_mat.shape[1]
    Mp, Kp, Np = _round_up(M, SUB), _round_up(Kc, SUB), _round_up(Co, LANE)
    a_p = jnp.pad(a, ((0, Mp - M), (0, Kp - Kc)))
    b_p = jnp.pad(w_mat, ((0, Kp - Kc), (0, Np - Co)))
    g_row = jnp.pad(gamma, (0, Np - Co)).reshape(1, Np)
    b_row = jnp.pad(beta, (0, Np - Co)).reshape(1, Np)
    out = pl.pallas_call(
        functools.partial(_mm_bn_act_kernel, m_true=float(M)),
        out_shape=jax.ShapeDtypeStruct((Mp, Np), out_dtype),
        grid=(1,),
        in_specs=[pl.BlockSpec((Mp, Kp), lambda i: (0, 0)),
                  pl.BlockSpec((Kp, Np), lambda i: (0, 0)),
                  pl.BlockSpec((1, Np), lambda i: (0, 0)),
                  pl.BlockSpec((1, Np), lambda i: (0, 0))],
        out_specs=pl.BlockSpec((Mp, Np), lambda i: (0, 0)),
        compiler_params=pltpu.CompilerParams(
            dimension_semantics=("arbitrary",),
            vmem_limit_bytes=VMEM_LIMIT),
    )(a_p, b_p, g_row, b_row)
    return out[:M, :Co]


# ------------------------------ Conv2d layer -------------------------------- #

def _im2col(x_nhwc, K, stride, pad):
    N, H, W, Ci = x_nhwc.shape
    OH = (H + 2 * pad - K) // stride + 1
    OW = (W + 2 * pad - K) // stride + 1
    xp = jnp.pad(x_nhwc, ((0, 0), (pad, pad), (pad, pad), (0, 0)))
    # TODO(synk): the strided (kh, kw) gather below stays as XLA glue; fusing
    # it into the GEMM via BlockSpec is not expressible for stride-2 windows
    # (would need a manual DMA gather).
    cols = [xp[:, kh:kh + stride * (OH - 1) + 1:stride,
               kw:kw + stride * (OW - 1) + 1:stride, :]
            for kh in range(K) for kw in range(K)]
    a = jnp.stack(cols, axis=3).reshape(N * OH * OW, K * K * Ci)
    return a, OH, OW


def conv_layer(x_nhwc, w, stride, pad, gamma=None, beta=None,
               act="leaky", m_blocks=1, out_dtype=jnp.bfloat16):
    """Conv2d (OIHW weight, no bias) [+ BatchNorm2d] [+ LeakyReLU(0.2)]."""
    N, H, W, Ci = x_nhwc.shape
    Co, _, K, _ = w.shape
    a, OH, OW = _im2col(x_nhwc.astype(jnp.bfloat16), K, stride, pad)
    # w_mat[(kh, kw, ci), co] = w[co, ci, kh, kw]
    w_mat = jnp.transpose(w, (2, 3, 1, 0)).reshape(K * K * Ci, Co)
    w_mat = w_mat.astype(jnp.bfloat16)
    if gamma is None:
        y = gemm_act(a, w_mat, act, m_blocks, out_dtype)
    else:
        y = gemm_bn_act(a, w_mat, gamma, beta, out_dtype)
    return y.reshape(N, OH, OW, Co)


# --------------------------------- Encoder ---------------------------------- #

def init_params(key, in_channels=1):
    ks = jax.random.split(key, 8)

    def w(k, co, ci):
        return 0.05 * jax.random.normal(k, (co, ci, 4, 4), jnp.float32)

    return {
        "w1": w(ks[0], 32, in_channels),
        "w2": w(ks[1], 64, 32),
        "g2": 1.0 + 0.1 * jax.random.normal(ks[2], (64,), jnp.float32),
        "b2": 0.1 * jax.random.normal(ks[3], (64,), jnp.float32),
        "w3": w(ks[4], 64, 64),
        "g3": 1.0 + 0.1 * jax.random.normal(ks[5], (64,), jnp.float32),
        "b3": 0.1 * jax.random.normal(ks[6], (64,), jnp.float32),
        "w4": w(ks[7], 64, 64),
    }


def encoder_forward(x_nchw, p):
    x = jnp.transpose(x_nchw, (0, 2, 3, 1))                            # NHWC
    x = conv_layer(x, p["w1"], 2, 1, act="leaky", m_blocks=2)          # 56->28
    x = conv_layer(x, p["w2"], 2, 1, p["g2"], p["b2"])                 # 28->14
    x = conv_layer(x, p["w3"], 2, 1, p["g3"], p["b3"])                 # 14->7
    x = conv_layer(x, p["w4"], 1, 0, act=None, m_blocks=1,
                   out_dtype=jnp.float32)                              # 7 ->4
    return jnp.transpose(x, (0, 3, 1, 2))                              # NCHW


# --------------------------- pure-JAX reference ------------------------------ #

def _conv_ref(x, w, stride, pad):
    # Same numerics as the Pallas path: bf16 operands, f32 accumulation.
    return jax.lax.conv_general_dilated(
        x.astype(jnp.bfloat16), w.astype(jnp.bfloat16),
        window_strides=(stride, stride),
        padding=[(pad, pad), (pad, pad)],
        dimension_numbers=("NCHW", "OIHW", "NCHW"),
        preferred_element_type=jnp.float32)


def _bn_ref(x, gamma, beta):
    mean = jnp.mean(x, axis=(0, 2, 3), keepdims=True)
    var = jnp.var(x, axis=(0, 2, 3), keepdims=True)       # biased, like PyTorch
    xn = (x - mean) / jnp.sqrt(var + EPS)
    return xn * gamma.reshape(1, -1, 1, 1) + beta.reshape(1, -1, 1, 1)


def _leaky_ref(x):
    return jnp.maximum(x, NEG_SLOPE * x)


def encoder_ref(x, p):
    x = _leaky_ref(_conv_ref(x, p["w1"], 2, 1))
    x = _leaky_ref(_bn_ref(_conv_ref(x, p["w2"], 2, 1), p["g2"], p["b2"]))
    x = _leaky_ref(_bn_ref(_conv_ref(x, p["w3"], 2, 1), p["g3"], p["b3"]))
    return _conv_ref(x, p["w4"], 1, 0)


# ----------------------------------- main ------------------------------------ #

if __name__ == "__main__":
    key = jax.random.PRNGKey(0)
    k_x, k_p = jax.random.split(key)
    x = jax.random.normal(k_x, (2, 1, 56, 56), jnp.float32)   # lesion image
    params = init_params(k_p, in_channels=1)

    out = jax.block_until_ready(jax.jit(encoder_forward)(x, params))
    assert out.shape == (2, 64, 4, 4), out.shape

    ref = jax.block_until_ready(jax.jit(encoder_ref)(x, params))
    assert jnp.allclose(out, ref, atol=1e-2, rtol=1e-2), (
        float(jnp.max(jnp.abs(out - ref))))

    print("KERNEL_OK")
</pallas_src>

<mosaic_0001>
module attributes {stable_mosaic.version = 11 : i64} {
  func.func @_mm_act_kernel(%arg0: i32, %arg1: memref<784x16xbf16, #tpu.memory_space<vmem>>, %arg2: memref<16x128xbf16, #tpu.memory_space<vmem>>, %arg3: memref<784x128xbf16, #tpu.memory_space<vmem>>) attributes {dimension_semantics = [#tpu.dimension_semantics<parallel>], iteration_bounds = array<i64: 2>, scalar_prefetch = 0 : i64, scratch_operands = 0 : i64, tpu.core_type = #tpu.core_type<tc>, window_params = [{transform_indices = @transform_0, window_bounds = array<i64: 784, 16>}, {pipeline_mode = #tpu.pipeline_mode<synchronous>, transform_indices = @transform_1, window_bounds = array<i64: 16, 128>}, {transform_indices = @transform_2, window_bounds = array<i64: 784, 128>}]} {
    %c0 = arith.constant 0 : index
    %c0_0 = arith.constant 0 : index
    %0 = vector.load %arg1[%c0, %c0_0] : memref<784x16xbf16, #tpu.memory_space<vmem>>, vector<784x16xbf16>
    %c0_1 = arith.constant 0 : index
    %c0_2 = arith.constant 0 : index
    %1 = vector.load %arg2[%c0_1, %c0_2] : memref<16x128xbf16, #tpu.memory_space<vmem>>, vector<16x128xbf16>
    %cst = arith.constant dense<0.000000e+00> : vector<784x128xf32>
    %2 = tpu.matmul %0, %1, %cst {dimension_numbers = #tpu.dot_dimension_numbers<[1], [0], [0], [1], [0, 0, 1, 1], [], []>} : vector<784x16xbf16>, vector<16x128xbf16>, vector<784x128xf32> -> vector<784x128xf32>
    %cst_3 = arith.constant 2.000000e-01 : f32
    %3 = vector.broadcast %cst_3 : f32 to vector<784x128xf32>
    %4 = arith.mulf %3, %2 : vector<784x128xf32>
    %5 = arith.maximumf %2, %4 : vector<784x128xf32>
    %6 = arith.truncf %5 : vector<784x128xf32> to vector<784x128xbf16>
    %c0_4 = arith.constant 0 : index
    %c0_5 = arith.constant 0 : index
    %7 = vector.load %arg3[%c0_4, %c0_5] : memref<784x128xbf16, #tpu.memory_space<vmem>>, vector<784x128xbf16>
    tpu.vector_store %arg3[%c0_4, %c0_5], %6 {strides = array<i32>} : memref<784x128xbf16, #tpu.memory_space<vmem>>, vector<784x128xbf16>,
    return
  }
  func.func @transform_0(%arg0: i32) -> (i32, i32) {
    %c0_i32 = arith.constant 0 : i32
    %c0_i32_0 = arith.constant 0 : i32
    return %arg0, %c0_i32 : i32, i32
  }
  func.func @transform_1(%arg0: i32) -> (i32, i32) {
    %c0_i32 = arith.constant 0 : i32
    %c0_i32_0 = arith.constant 0 : i32
    %c0_i32_1 = arith.constant 0 : i32
    return %c0_i32, %c0_i32_0 : i32, i32
  }
  func.func @transform_2(%arg0: i32) -> (i32, i32) {
    %c0_i32 = arith.constant 0 : i32
    %c0_i32_0 = arith.constant 0 : i32
    return %arg0, %c0_i32 : i32, i32
  }
}

module attributes {stable_mosaic.version = 11 : i64} {
  func.func @_mm_bn_act_kernel(%arg0: i32, %arg1: memref<400x512xbf16, #tpu.memory_space<vmem>>, %arg2: memref<512x128xbf16, #tpu.memory_space<vmem>>, %arg3: memref<1x128xf32, #tpu.memory_space<vmem>>, %arg4: memref<1x128xf32, #tpu.memory_space<vmem>>, %arg5: memref<400x128xbf16, #tpu.memory_space<vmem>>) attributes {dimension_semantics = [#tpu.dimension_semantics<arbitrary>], iteration_bounds = array<i64: 1>, scalar_prefetch = 0 : i64, scratch_operands = 0 : i64, tpu.core_type = #tpu.core_type<tc>, window_params = [{pipeline_mode = #tpu.pipeline_mode<synchronous>, transform_indices = @transform_0, window_bounds = array<i64: 400, 512>}, {pipeline_mode = #tpu.pipeline_mode<synchronous>, transform_indices = @transform_1, window_bounds = array<i64: 512, 128>}, {pipeline_mode = #tpu.pipeline_mode<synchronous>, transform_indices = @transform_2, window_bounds = array<i64: 1, 128>}, {pipeline_mode = #tpu.pipeline_mode<synchronous>, transform_indices = @transform_3, window_bounds = array<i64: 1, 128>}, {pipeline_mode = #tpu.pipeline_mode<synchronous>, transform_indices = @transform_4, window_bounds = array<i64: 400, 128>}]} {
    %c0 = arith.constant 0 : index
    %c0_0 = arith.constant 0 : index
    %0 = vector.load %arg1[%c0, %c0_0] : memref<400x512xbf16, #tpu.memory_space<vmem>>, vector<400x512xbf16>
    %c0_1 = arith.constant 0 : index
    %c0_2 = arith.constant 0 : index
    %1 = vector.load %arg2[%c0_1, %c0_2] : memref<512x128xbf16, #tpu.memory_space<vmem>>, vector<512x128xbf16>
    %cst = arith.constant dense<0.000000e+00> : vector<400x128xf32>
    %2 = tpu.matmul %0, %1, %cst {dimension_numbers = #tpu.dot_dimension_numbers<[1], [0], [0], [1], [0, 0, 1, 1], [], []>} : vector<400x512xbf16>, vector<512x128xbf16>, vector<400x128xf32> -> vector<400x128xf32>
    %cst_3 = arith.constant dense<0.000000e+00> : vector<128xf32>
    %3 = vector.multi_reduction <add>, %2, %cst_3 [0] : vector<400x128xf32> to vector<128xf32>
    %4 = vector.shape_cast %3 : vector<128xf32> to vector<1x128xf32>
    %cst_4 = arith.constant 0.00255102036 : f32
    %5 = vector.broadcast %cst_4 : f32 to vector<1x128xf32>
    %6 = arith.mulf %4, %5 : vector<1x128xf32>
    %7 = arith.mulf %2, %2 : vector<400x128xf32>
    %cst_5 = arith.constant dense<0.000000e+00> : vector<128xf32>
    %8 = vector.multi_reduction <add>, %7, %cst_5 [0] : vector<400x128xf32> to vector<128xf32>
    %9 = vector.shape_cast %8 : vector<128xf32> to vector<1x128xf32>
    %cst_6 = arith.constant 0.00255102036 : f32
    %10 = vector.broadcast %cst_6 : f32 to vector<1x128xf32>
    %11 = arith.mulf %9, %10 : vector<1x128xf32>
    %12 = arith.mulf %6, %6 : vector<1x128xf32>
    %13 = arith.subf %11, %12 : vector<1x128xf32>
    %c0_7 = arith.constant 0 : index
    %c0_8 = arith.constant 0 : index
    %14 = vector.load %arg3[%c0_7, %c0_8] : memref<1x128xf32, #tpu.memory_space<vmem>>, vector<1x128xf32>
    %cst_9 = arith.constant 9.99999974E-6 : f32
    %15 = vector.broadcast %cst_9 : f32 to vector<1x128xf32>
    %16 = arith.addf %13, %15 : vector<1x128xf32>
    %17 = math.rsqrt %16 : vector<1x128xf32>
    %18 = arith.mulf %14, %17 : vector<1x128xf32>
    %c0_10 = arith.constant 0 : index
    %c0_11 = arith.constant 0 : index
    %19 = vector.load %arg4[%c0_10, %c0_11] : memref<1x128xf32, #tpu.memory_space<vmem>>, vector<1x128xf32>
    %20 = arith.mulf %6, %18 : vector<1x128xf32>
    %21 = arith.subf %19, %20 : vector<1x128xf32>
    %22 = vector.broadcast %18 : vector<1x128xf32> to vector<400x128xf32>
    %23 = arith.mulf %2, %22 : vector<400x128xf32>
    %24 = vector.broadcast %21 : vector<1x128xf32> to vector<400x128xf32>
    %25 = arith.addf %23, %24 : vector<400x128xf32>
    %cst_12 = arith.constant 2.000000e-01 : f32
    %26 = vector.broadcast %cst_12 : f32 to vector<400x128xf32>
    %27 = arith.mulf %26, %25 : vector<400x128xf32>
    %28 = arith.maximumf %25, %27 : vector<400x128xf32>
    %29 = arith.truncf %28 : vector<400x128xf32> to vector<400x128xbf16>
    %c0_13 = arith.constant 0 : index
    %c0_14 = arith.constant 0 : index
    %30 = vector.load %arg5[%c0_13, %c0_14] : memref<400x128xbf16, #tpu.memory_space<vmem>>, vector<400x128xbf16>
    tpu.vector_store %arg5[%c0_13, %c0_14], %29 {strides = array<i32>} : memref<400x128xbf16, #tpu.memory_space<vmem>>, vector<400x128xbf16>,
    return
  }
  func.func @transform_0(%arg0: i32) -> (i32, i32) {
    %c0_i32 = arith.constant 0 : i32
    %c0_i32_0 = arith.constant 0 : i32
    %c0_i32_1 = arith.constant 0 : i32
    return %c0_i32, %c0_i32_0 : i32, i32
  }
  func.func @transform_1(%arg0: i32) -> (i32, i32) {
    %c0_i32 = arith.constant 0 : i32
    %c0_i32_0 = arith.constant 0 : i32
    %c0_i32_1 = arith.constant 0 : i32
    return %c0_i32, %c0_i32_0 : i32, i32
  }
  func.func @transform_2(%arg0: i32) -> (i32, i32) {
    %c0_i32 = arith.constant 0 : i32
    %c0_i32_0 = arith.constant 0 : i32
    %c0_i32_1 = arith.constant 0 : i32
    return %c0_i32, %c0_i32_0 : i32, i32
  }
  func.func @transform_3(%arg0: i32) -> (i32, i32) {
    %c0_i32 = arith.constant 0 : i32
    %c0_i32_0 = arith.constant 0 : i32
    %c0_i32_1 = arith.constant 0 : i32
    return %c0_i32, %c0_i32_0 : i32, i32
  }
  func.func @transform_4(%arg0: i32) -> (i32, i32) {
    %c0_i32 = arith.constant 0 : i32
    %c0_i32_0 = arith.constant 0 : i32
    %c0_i32_1 = arith.constant 0 : i32
    return %c0_i32, %c0_i32_0 : i32, i32
  }
}

module attributes {stable_mosaic.version = 11 : i64} {
  func.func @_mm_bn_act_kernel(%arg0: i32, %arg1: memref<112x1024xbf16, #tpu.memory_space<vmem>>, %arg2: memref<1024x128xbf16, #tpu.memory_space<vmem>>, %arg3: memref<1x128xf32, #tpu.memory_space<vmem>>, %arg4: memref<1x128xf32, #tpu.memory_space<vmem>>, %arg5: memref<112x128xbf16, #tpu.memory_space<vmem>>) attributes {dimension_semantics = [#tpu.dimension_semantics<arbitrary>], iteration_bounds = array<i64: 1>, scalar_prefetch = 0 : i64, scratch_operands = 0 : i64, tpu.core_type = #tpu.core_type<tc>, window_params = [{pipeline_mode = #tpu.pipeline_mode<synchronous>, transform_indices = @transform_0, window_bounds = array<i64: 112, 1024>}, {pipeline_mode = #tpu.pipeline_mode<synchronous>, transform_indices = @transform_1, window_bounds = array<i64: 1024, 128>}, {pipeline_mode = #tpu.pipeline_mode<synchronous>, transform_indices = @transform_2, window_bounds = array<i64: 1, 128>}, {pipeline_mode = #tpu.pipeline_mode<synchronous>, transform_indices = @transform_3, window_bounds = array<i64: 1, 128>}, {pipeline_mode = #tpu.pipeline_mode<synchronous>, transform_indices = @transform_4, window_bounds = array<i64: 112, 128>}]} {
    %c0 = arith.constant 0 : index
    %c0_0 = arith.constant 0 : index
    %0 = vector.load %arg1[%c0, %c0_0] : memref<112x1024xbf16, #tpu.memory_space<vmem>>, vector<112x1024xbf16>
    %c0_1 = arith.constant 0 : index
    %c0_2 = arith.constant 0 : index
    %1 = vector.load %arg2[%c0_1, %c0_2] : memref<1024x128xbf16, #tpu.memory_space<vmem>>, vector<1024x128xbf16>
    %cst = arith.constant dense<0.000000e+00> : vector<112x128xf32>
    %2 = tpu.matmul %0, %1, %cst {dimension_numbers = #tpu.dot_dimension_numbers<[1], [0], [0], [1], [0, 0, 1, 1], [], []>} : vector<112x1024xbf16>, vector<1024x128xbf16>, vector<112x128xf32> -> vector<112x128xf32>
    %cst_3 = arith.constant dense<0.000000e+00> : vector<128xf32>
    %3 = vector.multi_reduction <add>, %2, %cst_3 [0] : vector<112x128xf32> to vector<128xf32>
    %4 = vector.shape_cast %3 : vector<128xf32> to vector<1x128xf32>
    %cst_4 = arith.constant 0.0102040814 : f32
    %5 = vector.broadcast %cst_4 : f32 to vector<1x128xf32>
    %6 = arith.mulf %4, %5 : vector<1x128xf32>
    %7 = arith.mulf %2, %2 : vector<112x128xf32>
    %cst_5 = arith.constant dense<0.000000e+00> : vector<128xf32>
    %8 = vector.multi_reduction <add>, %7, %cst_5 [0] : vector<112x128xf32> to vector<128xf32>
    %9 = vector.shape_cast %8 : vector<128xf32> to vector<1x128xf32>
    %cst_6 = arith.constant 0.0102040814 : f32
    %10 = vector.broadcast %cst_6 : f32 to vector<1x128xf32>
    %11 = arith.mulf %9, %10 : vector<1x128xf32>
    %12 = arith.mulf %6, %6 : vector<1x128xf32>
    %13 = arith.subf %11, %12 : vector<1x128xf32>
    %c0_7 = arith.constant 0 : index
    %c0_8 = arith.constant 0 : index
    %14 = vector.load %arg3[%c0_7, %c0_8] : memref<1x128xf32, #tpu.memory_space<vmem>>, vector<1x128xf32>
    %cst_9 = arith.constant 9.99999974E-6 : f32
    %15 = vector.broadcast %cst_9 : f32 to vector<1x128xf32>
    %16 = arith.addf %13, %15 : vector<1x128xf32>
    %17 = math.rsqrt %16 : vector<1x128xf32>
    %18 = arith.mulf %14, %17 : vector<1x128xf32>
    %c0_10 = arith.constant 0 : index
    %c0_11 = arith.constant 0 : index
    %19 = vector.load %arg4[%c0_10, %c0_11] : memref<1x128xf32, #tpu.memory_space<vmem>>, vector<1x128xf32>
    %20 = arith.mulf %6, %18 : vector<1x128xf32>
    %21 = arith.subf %19, %20 : vector<1x128xf32>
    %22 = vector.broadcast %18 : vector<1x128xf32> to vector<112x128xf32>
    %23 = arith.mulf %2, %22 : vector<112x128xf32>
    %24 = vector.broadcast %21 : vector<1x128xf32> to vector<112x128xf32>
    %25 = arith.addf %23, %24 : vector<112x128xf32>
    %cst_12 = arith.constant 2.000000e-01 : f32
    %26 = vector.broadcast %cst_12 : f32 to vector<112x128xf32>
    %27 = arith.mulf %26, %25 : vector<112x128xf32>
    %28 = arith.maximumf %25, %27 : vector<112x128xf32>
    %29 = arith.truncf %28 : vector<112x128xf32> to vector<112x128xbf16>
    %c0_13 = arith.constant 0 : index
    %c0_14 = arith.constant 0 : index
    %30 = vector.load %arg5[%c0_13, %c0_14] : memref<112x128xbf16, #tpu.memory_space<vmem>>, vector<112x128xbf16>
    tpu.vector_store %arg5[%c0_13, %c0_14], %29 {strides = array<i32>} : memref<112x128xbf16, #tpu.memory_space<vmem>>, vector<112x128xbf16>,
    return
  }
  func.func @transform_0(%arg0: i32) -> (i32, i32) {
    %c0_i32 = arith.constant 0 : i32
    %c0_i32_0 = arith.constant 0 : i32
    %c0_i32_1 = arith.constant 0 : i32
    return %c0_i32, %c0_i32_0 : i32, i32
  }
  func.func @transform_1(%arg0: i32) -> (i32, i32) {
    %c0_i32 = arith.constant 0 : i32
    %c0_i32_0 = arith.constant 0 : i32
    %c0_i32_1 = arith.constant 0 : i32
    return %c0_i32, %c0_i32_0 : i32, i32
  }
  func.func @transform_2(%arg0: i32) -> (i32, i32) {
    %c0_i32 = arith.constant 0 : i32
    %c0_i32_0 = arith.constant 0 : i32
    %c0_i32_1 = arith.constant 0 : i32
    return %c0_i32, %c0_i32_0 : i32, i32
  }
  func.func @transform_3(%arg0: i32) -> (i32, i32) {
    %c0_i32 = arith.constant 0 : i32
    %c0_i32_0 = arith.constant 0 : i32
    %c0_i32_1 = arith.constant 0 : i32
    return %c0_i32, %c0_i32_0 : i32, i32
  }
  func.func @transform_4(%arg0: i32) -> (i32, i32) {
    %c0_i32 = arith.constant 0 : i32
    %c0_i32_0 = arith.constant 0 : i32
    %c0_i32_1 = arith.constant 0 : i32
    return %c0_i32, %c0_i32_0 : i32, i32
  }
}

module attributes {stable_mosaic.version = 11 : i64} {
  func.func @_mm_act_kernel(%arg0: i32, %arg1: memref<32x1024xbf16, #tpu.memory_space<vmem>>, %arg2: memref<1024x128xbf16, #tpu.memory_space<vmem>>, %arg3: memref<32x128xf32, #tpu.memory_space<vmem>>) attributes {dimension_semantics = [#tpu.dimension_semantics<parallel>], iteration_bounds = array<i64: 1>, scalar_prefetch = 0 : i64, scratch_operands = 0 : i64, tpu.core_type = #tpu.core_type<tc>, window_params = [{transform_indices = @transform_0, window_bounds = array<i64: 32, 1024>}, {pipeline_mode = #tpu.pipeline_mode<synchronous>, transform_indices = @transform_1, window_bounds = array<i64: 1024, 128>}, {transform_indices = @transform_2, window_bounds = array<i64: 32, 128>}]} {
    %c0 = arith.constant 0 : index
    %c0_0 = arith.constant 0 : index
    %0 = vector.load %arg1[%c0, %c0_0] : memref<32x1024xbf16, #tpu.memory_space<vmem>>, vector<32x1024xbf16>
    %c0_1 = arith.constant 0 : index
    %c0_2 = arith.constant 0 : index
    %1 = vector.load %arg2[%c0_1, %c0_2] : memref<1024x128xbf16, #tpu.memory_space<vmem>>, vector<1024x128xbf16>
    %cst = arith.constant dense<0.000000e+00> : vector<32x128xf32>
    %2 = tpu.matmul %0, %1, %cst {dimension_numbers = #tpu.dot_dimension_numbers<[1], [0], [0], [1], [0, 0, 1, 1], [], []>} : vector<32x1024xbf16>, vector<1024x128xbf16>, vector<32x128xf32> -> vector<32x128xf32>
    %c0_3 = arith.constant 0 : index
    %c0_4 = arith.constant 0 : index
    %3 = vector.load %arg3[%c0_3, %c0_4] : memref<32x128xf32, #tpu.memory_space<vmem>>, vector<32x128xf32>
    tpu.vector_store %arg3[%c0_3, %c0_4], %2 {strides = array<i32>} : memref<32x128xf32, #tpu.memory_space<vmem>>, vector<32x128xf32>,
    return
  }
  func.func @transform_0(%arg0: i32) -> (i32, i32) {
    %c0_i32 = arith.constant 0 : i32
    %c0_i32_0 = arith.constant 0 : i32
    return %arg0, %c0_i32 : i32, i32
  }
  func.func @transform_1(%arg0: i32) -> (i32, i32) {
    %c0_i32 = arith.constant 0 : i32
    %c0_i32_0 = arith.constant 0 : i32
    %c0_i32_1 = arith.constant 0 : i32
    return %c0_i32, %c0_i32_0 : i32, i32
  }
  func.func @transform_2(%arg0: i32) -> (i32, i32) {
    %c0_i32 = arith.constant 0 : i32
    %c0_i32_0 = arith.constant 0 : i32
    return %arg0, %c0_i32 : i32, i32
  }
}

</mosaic_0001>

<llo_original>
// kernel: encoder_forward.4
$region0: #{encoder_forward.4}
  #allocation0 [shape = 'u32[]', space=smem, size = 0x4, offset = 0x4, fixed_abs, tag = 'smem constant byte address 0x4 - core index']
  #allocation1 [shape = 'u32[72,128]{1,0:T(1,128)}', space=vmem, size = 0x9000, scoped, tag = 'internal scratch']
  %s0 = inlined_call_operand.vmem [shape: bf16[1568,16], index: 0, kind: input, shape index: {}]
  %s1 = inlined_call_operand.vmem [shape: bf16[16,128], index: 1, kind: input, shape index: {}]
  %s2 = inlined_call_operand.vmem [shape: bf16[1568,128], index: 2, kind: output, shape index: {}]
  %s3 = sld [smem:[#allocation0]]
  $region41: #{encoder_forward.4} parent=0
    _
  %s5 = ssub.s32 1, %s3
  %s6 = scalar_select 0, %s5, %s3
  loop: start=0, step=1, limit=4
  $region2: #{encoder_forward.4} parent=0 // loop_pre_header
    _
  $region3: #{encoder_forward.4} parent=0 // loop_header
    %s8 = sphi 0, %s12
    %p9 = scmp.ge.s32.totalorder %s8, 4
    %s18 = sphi 0, %s20
    %s21 = sphi 0, %s18
    %s22 = sphi 0, %s21
    %s38 = sphi 0, %s22
    %s42 = sphi 0, %s42
    %s44 = sphi 0, %s42
    %s45 = sphi 0, %s44
    %s59 = sphi 0, %s45
    %s65 = sphi 0, %s67
    %s68 = sphi 0, %s65
    %s69 = sphi 0, %s68
    %s85 = sphi 0, %s69
  $region4: #{encoder_forward.4} parent=0 // loop_header_branch
    %11 = sbr.rel (%p9) target = $region8
  $region5: #{encoder_forward.4} parent=0 // loop_body
    %s13 = ssub.s32 %s8, 1
    %s14 = ssub.s32 %s8, 2
    %s15 = sadd.s32 %s8, 1
    %s16 = ssub.s32 %s8, %s15
    %p17 = scmp.eq.s32.totalorder %s16, 0
    %s19 = sadd.s32 %s18, 1
    %s20 = scalar_select %p17, %s18, %s19
    %p23 = pneg %p17
    %p24 = scmp.eq.s32.totalorder %s8, 1
    %p25 = por %p23, %p24
    %p26 = scmp.ne.s32.totalorder %s18, %s21
    %p27 = scmp.eq.s32.totalorder %s8, 0
    %p28 = por %p26, %p27
    %p29 = scmp.ne.s32.totalorder %s18, %s21
    %p30 = scmp.eq.s32.totalorder %s13, 1
    %p31 = por %p29, %p30
    %p32 = scmp.ne.s32.totalorder %s21, %s22
    %p33 = scmp.eq.s32.totalorder %s13, 0
    %p34 = por %p32, %p33
    %p35 = scmp.ne.s32.totalorder %s21, %s22
    %p36 = scmp.eq.s32.totalorder %s14, 1
    %p37 = por %p35, %p36
    %p39 = scmp.ne.s32.totalorder %s22, %s38
    %p40 = scmp.eq.s32.totalorder %s14, 0
    %p41 = por %p39, %p40
    %s43 = sadd.s32 %s42, 1
    %p46 = scmp.eq.s32.totalorder %s8, 1
    %p47 = scmp.ne.s32.totalorder %s42, %s44
    %p48 = scmp.eq.s32.totalorder %s8, 0
    %p49 = por %p47, %p48
    %p50 = scmp.ne.s32.totalorder %s42, %s44
    %p51 = scmp.eq.s32.totalorder %s13, 1
    %p52 = por %p50, %p51
    %p53 = scmp.ne.s32.totalorder %s44, %s45
    %p54 = scmp.eq.s32.totalorder %s13, 0
    %p55 = por %p53, %p54
    %p56 = scmp.ne.s32.totalorder %s44, %s45
    %p57 = scmp.eq.s32.totalorder %s14, 1
    %p58 = por %p56, %p57
    %p60 = scmp.ne.s32.totalorder %s45, %s59
    %p61 = scmp.eq.s32.totalorder %s14, 0
    %p62 = por %p60, %p61
    %s63 = ssub.s32 %s8, %s15
    %p64 = scmp.eq.s32.totalorder %s63, 0
    %s66 = sadd.s32 %s65, 1
    %s67 = scalar_select %p64, %s65, %s66
    %p70 = pneg %p64
    %p71 = scmp.eq.s32.totalorder %s8, 1
    %p72 = por %p70, %p71
    %p73 = scmp.ne.s32.totalorder %s65, %s68
    %p74 = scmp.eq.s32.totalorder %s8, 0
    %p75 = por %p73, %p74
    %p76 = scmp.ne.s32.totalorder %s65, %s68
    %p77 = scmp.eq.s32.totalorder %s13, 1
    %p78 = por %p76, %p77
    %p79 = scmp.ne.s32.totalorder %s68, %s69
    %p80 = scmp.eq.s32.totalorder %s13, 0
    %p81 = por %p79, %p80
    %p82 = scmp.ne.s32.totalorder %s68, %s69
    %p83 = scmp.eq.s32.totalorder %s14, 1
    %p84 = por %p82, %p83
    %p86 = scmp.ne.s32.totalorder %s69, %s85
    %p87 = scmp.eq.s32.totalorder %s14, 0
    %p88 = por %p86, %p87
    %p89 = scmp.le.s32.totalorder 1, %s8
    %p90 = scmp.lt.s32.totalorder %s8, 3
    %p91 = pnand %p89, %p90
    %p92 = pneg %p91
    // Predicated region
    $region9: #{encoder_forward.4} parent=5 // pred_check
      _
    $region10: #{encoder_forward.4} parent=5 // pred_check_branch
      %94 = sbr.rel (%p91) target = $region12
    $region11: #{encoder_forward.4} parent=5 // pred_region
      %s95 = ssub.s32 %s8, 1
      // Predicated region
      $region13: #{encoder_forward.4} parent=11 // pred_check
        %p96 = pneg %p55
      $region14: #{encoder_forward.4} parent=11 // pred_check_branch
        %98 = sbr.rel (%p96) target = $region16
      $region15: #{encoder_forward.4} parent=11 // pred_region
        _
      $region16: #{encoder_forward.4} parent=11 // pred_fallthru
        _
    $region12: #{encoder_forward.4} parent=5 // pred_fallthru
      _
    %p99 = scmp.lt.s32.totalorder %s8, 2
    // Predicated region
    $region17: #{encoder_forward.4} parent=5 // pred_check
      %p100 = pneg %p99
    $region18: #{encoder_forward.4} parent=5 // pred_check_branch
      %102 = sbr.rel (%p100) target = $region20
    $region19: #{encoder_forward.4} parent=5 // pred_region
      // Predicated region
      $region21: #{encoder_forward.4} parent=19 // pred_check
        %p103 = pneg %p28
      $region22: #{encoder_forward.4} parent=19 // pred_check_branch
        %105 = sbr.rel (%p103) target = $region24
      $region23: #{encoder_forward.4} parent=19 // pred_region
        %s106 = smul.u32 98, %s8
        %p107 = scmp.lt.s32.totalorder %s106, 195
        %s108 = scalar_select %p107, %s106, 195
        %s109 = smul.addr %s108, 4
        %s110 = scalar_lea.vmem %s0, %s109
        %s111 = smul.u32 98, %s8
      $region24: #{encoder_forward.4} parent=19 // pred_fallthru
        _
    $region20: #{encoder_forward.4} parent=5 // pred_fallthru
      _
    %p112 = scmp.le.s32.totalorder 1, %s8
    %p113 = scmp.lt.s32.totalorder %s8, 3
    %p114 = pnand %p112, %p113
    %p115 = pneg %p114
    // Predicated region
    $region25: #{encoder_forward.4} parent=5 // pred_check
      _
    $region26: #{encoder_forward.4} parent=5 // pred_check_branch
      %117 = sbr.rel (%p114) target = $region28
    $region27: #{encoder_forward.4} parent=5 // pred_region
      %s118 = ssub.s32 %s8, 1
      %s119 = smul.u32 98, %s13
      %p120 = scmp.lt.s32.totalorder %s119, 195
      %s121 = scalar_select %p120, %s119, 195
      %s122 = smul.addr %s121, 4
      %s123 = scalar_lea.vmem %s0, %s122
      %p124 = pneg %p34
      %p125 = pneg %p31
      %p126 = pneg %p55
      %p127 = pneg %p52
      %p128 = pneg %p81
      %p129 = pneg %p78
      %s130 = smul.u32 98, %s13
      %p131 = scmp.lt.s32.totalorder %s130, 195
      %s132 = scalar_select %p131, %s130, 195
      %s133 = smul.addr %s132, 4
      %s134 = scalar_lea.vmem %s2, %s133
      %s135 = smul.u32 98, %s13
      %p136 = scmp.lt.s32.totalorder %s135, 195
      %s137 = scalar_select %p136, %s135, 195
      %s138 = smul.addr %s137, 4
      %s139 = scalar_lea.vmem %s0, %s138
      %s140 = smul.u32 98, %s13
      %s141 = smul.u32 98, %s13
      %p142 = scmp.lt.s32.totalorder %s141, 195
      %s143 = scalar_select %p142, %s141, 195
      %s144 = smul.addr %s143, 4
      %s145 = scalar_lea.vmem %s2, %s144
      %s146 = smul.u32 98, %s13
      %v148 = vld [vmem:[%s139] sm:$0xf]
      %v149 = vld [vmem:[%s139 + $0x4] sm:$0xf]
      %v150 = vld [vmem:[%s139 + $0x8] sm:$0xf]
      %v151 = vld [vmem:[%s139 + $0xc] sm:$0xf]
      %v152 = vld [vmem:[%s139 + $0x10] sm:$0xf]
      %v153 = vld [vmem:[%s139 + $0x14] sm:$0xf]
      %v154 = vld [vmem:[%s139 + $0x18] sm:$0xf]
      %v155 = vld [vmem:[%s139 + $0x1c] sm:$0xf]
      %v156 = vld [vmem:[%s139 + $0x20] sm:$0xf]
      %v157 = vld [vmem:[%s139 + $0x24] sm:$0xf]
      %v158 = vld [vmem:[%s139 + $0x28] sm:$0xf]
      %v159 = vld [vmem:[%s139 + $0x2c] sm:$0xf]
      %v160 = vld [vmem:[%s139 + $0x30] sm:$0xf]
      %v161 = vld [vmem:[%s139 + $0x34] sm:$0xf]
      %v162 = vld [vmem:[%s139 + $0x38] sm:$0xf]
      %v163 = vld [vmem:[%s139 + $0x3c] sm:$0xf]
      %v164 = vld [vmem:[%s139 + $0x40] sm:$0xf]
      %v165 = vld [vmem:[%s139 + $0x44] sm:$0xf]
      %v166 = vld [vmem:[%s139 + $0x48] sm:$0xf]
      %v167 = vld [vmem:[%s139 + $0x4c] sm:$0xf]
      %v168 = vld [vmem:[%s139 + $0x50] sm:$0xf]
      %v169 = vld [vmem:[%s139 + $0x54] sm:$0xf]
      %v170 = vld [vmem:[%s139 + $0x58] sm:$0xf]
      %v171 = vld [vmem:[%s139 + $0x5c] sm:$0xf]
      %v172 = vld [vmem:[%s139 + $0x60] sm:$0xf]
      %v173 = vld [vmem:[%s139 + $0x64] sm:$0xf]
      %v174 = vld [vmem:[%s139 + $0x68] sm:$0xf]
      %v175 = vld [vmem:[%s139 + $0x6c] sm:$0xf]
      %v176 = vld [vmem:[%s139 + $0x70] sm:$0xf]
      %v177 = vld [vmem:[%s139 + $0x74] sm:$0xf]
      %v178 = vld [vmem:[%s139 + $0x78] sm:$0xf]
      %v179 = vld [vmem:[%s139 + $0x7c] sm:$0xf]
      %v180 = vld [vmem:[%s139 + $0x80] sm:$0xf]
      %v181 = vld [vmem:[%s139 + $0x84] sm:$0xf]
      %v182 = vld [vmem:[%s139 + $0x88] sm:$0xf]
      %v183 = vld [vmem:[%s139 + $0x8c] sm:$0xf]
      %v184 = vld [vmem:[%s139 + $0x90] sm:$0xf]
      %v185 = vld [vmem:[%s139 + $0x94] sm:$0xf]
      %v186 = vld [vmem:[%s139 + $0x98] sm:$0xf]
      %v187 = vld [vmem:[%s139 + $0x9c] sm:$0xf]
      %v188 = vld [vmem:[%s139 + $0xa0] sm:$0xf]
      %v189 = vld [vmem:[%s139 + $0xa4] sm:$0xf]
      %v190 = vld [vmem:[%s139 + $0xa8] sm:$0xf]
      %v191 = vld [vmem:[%s139 + $0xac] sm:$0xf]
      %v192 = vld [vmem:[%s139 + $0xb0] sm:$0xf]
      %v193 = vld [vmem:[%s139 + $0xb4] sm:$0xf]
      %v194 = vld [vmem:[%s139 + $0xb8] sm:$0xf]
      %v195 = vld [vmem:[%s139 + $0xbc] sm:$0xf]
      %v196 = vld [vmem:[%s139 + $0xc0] sm:$0xf]
      %v197 = vld [vmem:[%s139 + $0xc4] sm:$0xf]
      %v198 = vld [vmem:[%s139 + $0xc8] sm:$0xf]
      %v199 = vld [vmem:[%s139 + $0xcc] sm:$0xf]
      %v200 = vld [vmem:[%s139 + $0xd0] sm:$0xf]
      %v201 = vld [vmem:[%s139 + $0xd4] sm:$0xf]
      %v202 = vld [vmem:[%s139 + $0xd8] sm:$0xf]
      %v203 = vld [vmem:[%s139 + $0xdc] sm:$0xf]
      %v204 = vld [vmem:[%s139 + $0xe0] sm:$0xf]
      %v205 = vld [vmem:[%s139 + $0xe4] sm:$0xf]
      %v206 = vld [vmem:[%s139 + $0xe8] sm:$0xf]
      %v207 = vld [vmem:[%s139 + $0xec] sm:$0xf]
      %v208 = vld [vmem:[%s139 + $0xf0] sm:$0xf]
      %v209 = vld [vmem:[%s139 + $0xf4] sm:$0xf]
      %v210 = vld [vmem:[%s139 + $0xf8] sm:$0xf]
      %v211 = vld [vmem:[%s139 + $0xfc] sm:$0xf]
      %v212 = vld [vmem:[%s139 + $0x100] sm:$0xf]
      %v213 = vld [vmem:[%s139 + $0x104] sm:$0xf]
      %v214 = vld [vmem:[%s139 + $0x108] sm:$0xf]
      %v215 = vld [vmem:[%s139 + $0x10c] sm:$0xf]
      %v216 = vld [vmem:[%s139 + $0x110] sm:$0xf]
      %v217 = vld [vmem:[%s139 + $0x114] sm:$0xf]
      %v218 = vld [vmem:[%s139 + $0x118] sm:$0xf]
      %v219 = vld [vmem:[%s139 + $0x11c] sm:$0xf]
      %v220 = vld [vmem:[%s139 + $0x120] sm:$0xf]
      %v221 = vld [vmem:[%s139 + $0x124] sm:$0xf]
      %v222 = vld [vmem:[%s139 + $0x128] sm:$0xf]
      %v223 = vld [vmem:[%s139 + $0x12c] sm:$0xf]
      %v224 = vld [vmem:[%s139 + $0x130] sm:$0xf]
      %v225 = vld [vmem:[%s139 + $0x134] sm:$0xf]
      %v226 = vld [vmem:[%s139 + $0x138] sm:$0xf]
      %v227 = vld [vmem:[%s139 + $0x13c] sm:$0xf]
      %v228 = vld [vmem:[%s139 + $0x140] sm:$0xf]
      %v229 = vld [vmem:[%s139 + $0x144] sm:$0xf]
      %v230 = vld [vmem:[%s139 + $0x148] sm:$0xf]
      %v231 = vld [vmem:[%s139 + $0x14c] sm:$0xf]
      %v232 = vld [vmem:[%s139 + $0x150] sm:$0xf]
      %v233 = vld [vmem:[%s139 + $0x154] sm:$0xf]
      %v234 = vld [vmem:[%s139 + $0x158] sm:$0xf]
      %v235 = vld [vmem:[%s139 + $0x15c] sm:$0xf]
      %v236 = vld [vmem:[%s139 + $0x160] sm:$0xf]
      %v237 = vld [vmem:[%s139 + $0x164] sm:$0xf]
      %v238 = vld [vmem:[%s139 + $0x168] sm:$0xf]
      %v239 = vld [vmem:[%s139 + $0x16c] sm:$0xf]
      %v240 = vld [vmem:[%s139 + $0x170] sm:$0xf]
      %v241 = vld [vmem:[%s139 + $0x174] sm:$0xf]
      %v242 = vld [vmem:[%s139 + $0x178] sm:$0xf]
      %v243 = vld [vmem:[%s139 + $0x17c] sm:$0xf]
      %v244 = vld [vmem:[%s139 + $0x180] sm:$0xf]
      %v245 = vld [vmem:[%s139 + $0x184] sm:$0xf]
      %v246 = vld [vmem:[%s1] sm:$0xf]
      %v247 = vld [vmem:[%s1 + $0x4] sm:$0xf]
      %v346 = vunpack.c.l.b16 %v148
      %v347 = vunpack.c.l.b16 %v149
      %v348 = vunpack.c.l.b16 %v150
      %v349 = vunpack.c.l.b16 %v151
      %v350 = vunpack.c.l.b16 %v152
      %v351 = vunpack.c.l.b16 %v153
      %v352 = vunpack.c.l.b16 %v154
      %v353 = vunpack.c.l.b16 %v155
      %v354 = vunpack.c.l.b16 %v156
      %v355 = vunpack.c.l.b16 %v157
      %v356 = vunpack.c.l.b16 %v158
      %v357 = vunpack.c.l.b16 %v159
      %v358 = vunpack.c.l.b16 %v160
      %v359 = vunpack.c.l.b16 %v161
      %v360 = vunpack.c.l.b16 %v162
      %v361 = vunpack.c.l.b16 %v163
      %v362 = vunpack.c.l.b16 %v164
      %v363 = vunpack.c.l.b16 %v165
      %v364 = vunpack.c.l.b16 %v166
      %v365 = vunpack.c.l.b16 %v167
      %v366 = vunpack.c.l.b16 %v168
      %v367 = vunpack.c.l.b16 %v169
      %v368 = vunpack.c.l.b16 %v170
      %v369 = vunpack.c.l.b16 %v171
      %v370 = vunpack.c.l.b16 %v172
      %v371 = vunpack.c.l.b16 %v173
      %v372 = vunpack.c.l.b16 %v174
      %v373 = vunpack.c.l.b16 %v175
      %v374 = vunpack.c.l.b16 %v176
      %v375 = vunpack.c.l.b16 %v177
      %v376 = vunpack.c.l.b16 %v178
      %v377 = vunpack.c.l.b16 %v179
      %v378 = vunpack.c.l.b16 %v180
      %v379 = vunpack.c.l.b16 %v181
      %v380 = vunpack.c.l.b16 %v182
      %v381 = vunpack.c.l.b16 %v183
      %v382 = vunpack.c.l.b16 %v184
      %v383 = vunpack.c.l.b16 %v185
      %v384 = vunpack.c.l.b16 %v186
      %v385 = vunpack.c.l.b16 %v187
      %v386 = vunpack.c.l.b16 %v188
      %v387 = vunpack.c.l.b16 %v189
      %v388 = vunpack.c.l.b16 %v190
      %v389 = vunpack.c.l.b16 %v191
      %v390 = vunpack.c.l.b16 %v192
      %v391 = vunpack.c.l.b16 %v193
      %v392 = vunpack.c.l.b16 %v194
      %v393 = vunpack.c.l.b16 %v195
      %v394 = vunpack.c.l.b16 %v196
      %v395 = vunpack.c.l.b16 %v197
      %v396 = vunpack.c.l.b16 %v198
      %v397 = vunpack.c.l.b16 %v199
      %v398 = vunpack.c.l.b16 %v200
      %v399 = vunpack.c.l.b16 %v201
      %v400 = vunpack.c.l.b16 %v202
      %v401 = vunpack.c.l.b16 %v203
      %v402 = vunpack.c.l.b16 %v204
      %v403 = vunpack.c.l.b16 %v205
      %v404 = vunpack.c.l.b16 %v206
      %v405 = vunpack.c.l.b16 %v207
      %v406 = vunpack.c.l.b16 %v208
      %v407 = vunpack.c.l.b16 %v209
      %v408 = vunpack.c.l.b16 %v210
      %v409 = vunpack.c.l.b16 %v211
      %v410 = vunpack.c.l.b16 %v212
      %v411 = vunpack.c.l.b16 %v213
      %v412 = vunpack.c.l.b16 %v214
      %v413 = vunpack.c.l.b16 %v215
      %v414 = vunpack.c.l.b16 %v216
      %v415 = vunpack.c.l.b16 %v217
      %v416 = vunpack.c.l.b16 %v218
      %v417 = vunpack.c.l.b16 %v219
      %v418 = vunpack.c.l.b16 %v220
      %v419 = vunpack.c.l.b16 %v221
      %v420 = vunpack.c.l.b16 %v222
      %v421 = vunpack.c.l.b16 %v223
      %v422 = vunpack.c.l.b16 %v224
      %v423 = vunpack.c.l.b16 %v225
      %v424 = vunpack.c.l.b16 %v226
      %v425 = vunpack.c.l.b16 %v227
      %v426 = vunpack.c.l.b16 %v228
      %v427 = vunpack.c.l.b16 %v229
      %v428 = vunpack.c.l.b16 %v230
      %v429 = vunpack.c.l.b16 %v231
      %v430 = vunpack.c.l.b16 %v232
      %v431 = vunpack.c.l.b16 %v233
      %v432 = vunpack.c.l.b16 %v234
      %v433 = vunpack.c.l.b16 %v235
      %v434 = vunpack.c.l.b16 %v236
      %v435 = vunpack.c.l.b16 %v237
      %v436 = vunpack.c.l.b16 %v238
      %v437 = vunpack.c.l.b16 %v239
      %v438 = vunpack.c.l.b16 %v240
      %v439 = vunpack.c.l.b16 %v241
      %v440 = vunpack.c.l.b16 %v242
      %v441 = vunpack.c.l.b16 %v243
      %v442 = vunpack.c.l.b16 %v244
      %v443 = vunpack.c.l.b16 %v245
      %v444 = vpack.c.b16 %v347, %v346
      %v445 = vpack.c.b16 %v349, %v348
      %v446 = vpack.c.b16 %v351, %v350
      %v447 = vpack.c.b16 %v353, %v352
      %v448 = vpack.c.b16 %v355, %v354
      %v449 = vpack.c.b16 %v357, %v356
      %v450 = vpack.c.b16 %v359, %v358
      %v451 = vpack.c.b16 %v361, %v360
      %v452 = vpack.c.b16 %v363, %v362
      %v453 = vpack.c.b16 %v365, %v364
      %v454 = vpack.c.b16 %v367, %v366
      %v455 = vpack.c.b16 %v369, %v368
      %v456 = vpack.c.b16 %v371, %v370
      %v457 = vpack.c.b16 %v373, %v372
      %v458 = vpack.c.b16 %v375, %v374
      %v459 = vpack.c.b16 %v377, %v376
      %v460 = vpack.c.b16 %v379, %v378
      %v461 = vpack.c.b16 %v381, %v380
      %v462 = vpack.c.b16 %v383, %v382
      %v463 = vpack.c.b16 %v385, %v384
      %v464 = vpack.c.b16 %v387, %v386
      %v465 = vpack.c.b16 %v389, %v388
      %v466 = vpack.c.b16 %v391, %v390
      %v467 = vpack.c.b16 %v393, %v392
      %v468 = vpack.c.b16 %v395, %v394
      %v469 = vpack.c.b16 %v397, %v396
      %v470 = vpack.c.b16 %v399, %v398
      %v471 = vpack.c.b16 %v401, %v400
      %v472 = vpack.c.b16 %v403, %v402
      %v473 = vpack.c.b16 %v405, %v404
      %v474 = vpack.c.b16 %v407, %v406
      %v475 = vpack.c.b16 %v409, %v408
      %v476 = vpack.c.b16 %v411, %v410
      %v477 = vpack.c.b16 %v413, %v412
      %v478 = vpack.c.b16 %v415, %v414
      %v479 = vpack.c.b16 %v417, %v416
      %v480 = vpack.c.b16 %v419, %v418
      %v481 = vpack.c.b16 %v421, %v420
      %v482 = vpack.c.b16 %v423, %v422
      %v483 = vpack.c.b16 %v425, %v424
      %v484 = vpack.c.b16 %v427, %v426
      %v485 = vpack.c.b16 %v429, %v428
      %v486 = vpack.c.b16 %v431, %v430
      %v487 = vpack.c.b16 %v433, %v432
      %v488 = vpack.c.b16 %v435, %v434
      %v489 = vpack.c.b16 %v437, %v436
      %v490 = vpack.c.b16 %v439, %v438
      %v491 = vpack.c.b16 %v441, %v440
      %v492 = vpack.c.b16 %v443, %v442
      %v495 = vunpack.c.l.b16 %v246
      %v496 = vunpack.c.l.b16 %v247
      %v497 = vpack.c.b16 %v496, %v495
      %vm499 = vcmask 130048
      %v501 = vsel %vm499, %v444, 0
      %v504 = vsel %vm499, %v445, 0
      %v507 = vsel %vm499, %v446, 0
      %v510 = vsel %vm499, %v447, 0
      %v513 = vsel %vm499, %v448, 0
      %v516 = vsel %vm499, %v449, 0
      %v519 = vsel %vm499, %v450, 0
      %v522 = vsel %vm499, %v451, 0
      %v525 = vsel %vm499, %v452, 0
      %v528 = vsel %vm499, %v453, 0
      %v531 = vsel %vm499, %v454, 0
      %v534 = vsel %vm499, %v455, 0
      %v537 = vsel %vm499, %v456, 0
      %v540 = vsel %vm499, %v457, 0
      %v543 = vsel %vm499, %v458, 0
      %v546 = vsel %vm499, %v459, 0
      %v549 = vsel %vm499, %v460, 0
      %v552 = vsel %vm499, %v461, 0
      %v555 = vsel %vm499, %v462, 0
      %v558 = vsel %vm499, %v463, 0
      %v561 = vsel %vm499, %v464, 0
      %v564 = vsel %vm499, %v465, 0
      %v567 = vsel %vm499, %v466, 0
      %v570 = vsel %vm499, %v467, 0
      %v573 = vsel %vm499, %v468, 0
      %v576 = vsel %vm499, %v469, 0
      %v579 = vsel %vm499, %v470, 0
      %v582 = vsel %vm499, %v471, 0
      %v585 = vsel %vm499, %v472, 0
      %v588 = vsel %vm499, %v473, 0
      %v591 = vsel %vm499, %v474, 0
      %v594 = vsel %vm499, %v475, 0
      %v597 = vsel %vm499, %v476, 0
      %v600 = vsel %vm499, %v477, 0
      %v603 = vsel %vm499, %v478, 0
      %v606 = vsel %vm499, %v479, 0
      %v609 = vsel %vm499, %v480, 0
      %v612 = vsel %vm499, %v481, 0
      %v615 = vsel %vm499, %v482, 0
      %v618 = vsel %vm499, %v483, 0
      %v621 = vsel %vm499, %v484, 0
      %v624 = vsel %vm499, %v485, 0
      %v627 = vsel %vm499, %v486, 0
      %v630 = vsel %vm499, %v487, 0
      %v633 = vsel %vm499, %v488, 0
      %v636 = vsel %vm499, %v489, 0
      %v639 = vsel %vm499, %v490, 0
      %v642 = vsel %vm499, %v491, 0
      %v645 = vsel %vm499, %v492, 0
      %647 = vmatpush.bf16.msra.mxu0 0
      %648 = vmatpush.bf16.msra.mxu0 0
      %649 = vmatpush.bf16.msra.mxu0 0
      %650 = vmatpush.bf16.msra.mxu0 0
      %651 = vmatpush.bf16.msra.mxu0 0
      %652 = vmatpush.bf16.msra.mxu0 0
      %653 = vmatpush.bf16.msra.mxu0 0
      %654 = vmatpush.bf16.msra.mxu0 %v497
      %655 = vmatmul.bf16.gmra.mxu0 %v501
      %v656 = vpop.f32.mrf.mxu0
      %v657 = vadd.f32 0.0, %v656
      %v658 = vpop.f32.mrf.mxu0
      %v659 = vadd.f32 0.0, %v658
      %660 = vmatmul.bf16.gmra.mxu0 %v504
      %v661 = vpop.f32.mrf.mxu0
      %v662 = vadd.f32 0.0, %v661
      %v663 = vpop.f32.mrf.mxu0
      %v664 = vadd.f32 0.0, %v663
      %665 = vmatmul.bf16.gmra.mxu0 %v507
      %v666 = vpop.f32.mrf.mxu0
      %v667 = vadd.f32 0.0, %v666
      %v668 = vpop.f32.mrf.mxu0
      %v669 = vadd.f32 0.0, %v668
      %670 = vmatmul.bf16.gmra.mxu0 %v510
      %v671 = vpop.f32.mrf.mxu0
      %v672 = vadd.f32 0.0, %v671
      %v673 = vpop.f32.mrf.mxu0
      %v674 = vadd.f32 0.0, %v673
      %675 = vmatmul.bf16.gmra.mxu0 %v513
      %v676 = vpop.f32.mrf.mxu0
      %v677 = vadd.f32 0.0, %v676
      %v678 = vpop.f32.mrf.mxu0
      %v679 = vadd.f32 0.0, %v678
      %680 = vmatmul.bf16.gmra.mxu0 %v516
      %v681 = vpop.f32.mrf.mxu0
      %v682 = vadd.f32 0.0, %v681
      %v683 = vpop.f32.mrf.mxu0
      %v684 = vadd.f32 0.0, %v683
      %685 = vmatmul.bf16.gmra.mxu0 %v519
      %v686 = vpop.f32.mrf.mxu0
      %v687 = vadd.f32 0.0, %v686
      %v688 = vpop.f32.mrf.mxu0
      %v689 = vadd.f32 0.0, %v688
      %690 = vmatmul.bf16.gmra.mxu0 %v522
      %v691 = vpop.f32.mrf.mxu0
      %v692 = vadd.f32 0.0, %v691
      %v693 = vpop.f32.mrf.mxu0
      %v694 = vadd.f32 0.0, %v693
      %695 = vmatmul.bf16.gmra.mxu0 %v525
      %v696 = vpop.f32.mrf.mxu0
      %v697 = vadd.f32 0.0, %v696
      %v698 = vpop.f32.mrf.mxu0
      %v699 = vadd.f32 0.0, %v698
      %700 = vmatmul.bf16.gmra.mxu0 %v528
      %v701 = vpop.f32.mrf.mxu0
      %v702 = vadd.f32 0.0, %v701
      %v703 = vpop.f32.mrf.mxu0
      %v704 = vadd.f32 0.0, %v703
      %705 = vmatmul.bf16.gmra.mxu0 %v531
      %v706 = vpop.f32.mrf.mxu0
      %v707 = vadd.f32 0.0, %v706
      %v708 = vpop.f32.mrf.mxu0
      %v709 = vadd.f32 0.0, %v708
      %710 = vmatmul.bf16.gmra.mxu0 %v534
      %v711 = vpop.f32.mrf.mxu0
      %v712 = vadd.f32 0.0, %v711
      %v713 = vpop.f32.mrf.mxu0
      %v714 = vadd.f32 0.0, %v713
      %715 = vmatmul.bf16.gmra.mxu0 %v537
      %v716 = vpop.f32.mrf.mxu0
      %v717 = vadd.f32 0.0, %v716
      %v718 = vpop.f32.mrf.mxu0
      %v719 = vadd.f32 0.0, %v718
      %720 = vmatmul.bf16.gmra.mxu0 %v540
      %v721 = vpop.f32.mrf.mxu0
      %v722 = vadd.f32 0.0, %v721
      %v723 = vpop.f32.mrf.mxu0
      %v724 = vadd.f32 0.0, %v723
      %725 = vmatmul.bf16.gmra.mxu0 %v543
      %v726 = vpop.f32.mrf.mxu0
      %v727 = vadd.f32 0.0, %v726
      %v728 = vpop.f32.mrf.mxu0
      %v729 = vadd.f32 0.0, %v728
      %730 = vmatmul.bf16.gmra.mxu0 %v546
      %v731 = vpop.f32.mrf.mxu0
      %v732 = vadd.f32 0.0, %v731
      %v733 = vpop.f32.mrf.mxu0
      %v734 = vadd.f32 0.0, %v733
      %735 = vmatmul.bf16.gmra.mxu0 %v549
      %v736 = vpop.f32.mrf.mxu0
      %v737 = vadd.f32 0.0, %v736
      %v738 = vpop.f32.mrf.mxu0
      %v739 = vadd.f32 0.0, %v738
      %740 = vmatmul.bf16.gmra.mxu0 %v552
      %v741 = vpop.f32.mrf.mxu0
      %v742 = vadd.f32 0.0, %v741
      %v743 = vpop.f32.mrf.mxu0
      %v744 = vadd.f32 0.0, %v743
      %745 = vmatmul.bf16.gmra.mxu0 %v555
      %v746 = vpop.f32.mrf.mxu0
      %v747 = vadd.f32 0.0, %v746
      %v748 = vpop.f32.mrf.mxu0
      %v749 = vadd.f32 0.0, %v748
      %750 = vmatmul.bf16.gmra.mxu0 %v558
      %v751 = vpop.f32.mrf.mxu0
      %v752 = vadd.f32 0.0, %v751
      %v753 = vpop.f32.mrf.mxu0
      %v754 = vadd.f32 0.0, %v753
      %755 = vmatmul.bf16.gmra.mxu0 %v561
      %v756 = vpop.f32.mrf.mxu0
      %v757 = vadd.f32 0.0, %v756
      %v758 = vpop.f32.mrf.mxu0
      %v759 = vadd.f32 0.0, %v758
      %760 = vmatmul.bf16.gmra.mxu0 %v564
      %v761 = vpop.f32.mrf.mxu0
      %v762 = vadd.f32 0.0, %v761
      %v763 = vpop.f32.mrf.mxu0
      %v764 = vadd.f32 0.0, %v763
      %765 = vmatmul.bf16.gmra.mxu0 %v567
      %v766 = vpop.f32.mrf.mxu0
      %v767 = vadd.f32 0.0, %v766
      %v768 = vpop.f32.mrf.mxu0
      %v769 = vadd.f32 0.0, %v768
      %770 = vmatmul.bf16.gmra.mxu0 %v570
      %v771 = vpop.f32.mrf.mxu0
      %v772 = vadd.f32 0.0, %v771
      %v773 = vpop.f32.mrf.mxu0
      %v774 = vadd.f32 0.0, %v773
      %775 = vmatmul.bf16.gmra.mxu0 %v573
      %v776 = vpop.f32.mrf.mxu0
      %v777 = vadd.f32 0.0, %v776
      %v778 = vpop.f32.mrf.mxu0
      %v779 = vadd.f32 0.0, %v778
      %780 = vmatmul.bf16.gmra.mxu0 %v576
      %v781 = vpop.f32.mrf.mxu0
      %v782 = vadd.f32 0.0, %v781
      %v783 = vpop.f32.mrf.mxu0
      %v784 = vadd.f32 0.0, %v783
      %785 = vmatmul.bf16.gmra.mxu0 %v579
      %v786 = vpop.f32.mrf.mxu0
      %v787 = vadd.f32 0.0, %v786
      %v788 = vpop.f32.mrf.mxu0
      %v789 = vadd.f32 0.0, %v788
      %790 = vmatmul.bf16.gmra.mxu0 %v582
      %v791 = vpop.f32.mrf.mxu0
      %v792 = vadd.f32 0.0, %v791
      %v793 = vpop.f32.mrf.mxu0
      %v794 = vadd.f32 0.0, %v793
      %795 = vmatmul.bf16.gmra.mxu0 %v585
      %v796 = vpop.f32.mrf.mxu0
      %v797 = vadd.f32 0.0, %v796
      %v798 = vpop.f32.mrf.mxu0
      %v799 = vadd.f32 0.0, %v798
      %800 = vmatmul.bf16.gmra.mxu0 %v588
      %v801 = vpop.f32.mrf.mxu0
      %v802 = vadd.f32 0.0, %v801
      %v803 = vpop.f32.mrf.mxu0
      %v804 = vadd.f32 0.0, %v803
      %805 = vmatmul.bf16.gmra.mxu0 %v591
      %v806 = vpop.f32.mrf.mxu0
      %v807 = vadd.f32 0.0, %v806
      %v808 = vpop.f32.mrf.mxu0
      %v809 = vadd.f32 0.0, %v808
      %810 = vmatmul.bf16.gmra.mxu0 %v594
      %v811 = vpop.f32.mrf.mxu0
      %v812 = vadd.f32 0.0, %v811
      %v813 = vpop.f32.mrf.mxu0
      %v814 = vadd.f32 0.0, %v813
      %815 = vmatmul.bf16.gmra.mxu0 %v597
      %v816 = vpop.f32.mrf.mxu0
      %v817 = vadd.f32 0.0, %v816
      %v818 = vpop.f32.mrf.mxu0
      %v819 = vadd.f32 0.0, %v818
      %820 = vmatmul.bf16.gmra.mxu0 %v600
      %v821 = vpop.f32.mrf.mxu0
      %v822 = vadd.f32 0.0, %v821
      %v823 = vpop.f32.mrf.mxu0
      %v824 = vadd.f32 0.0, %v823
      %825 = vmatmul.bf16.gmra.mxu0 %v603
      %v826 = vpop.f32.mrf.mxu0
      %v827 = vadd.f32 0.0, %v826
      %v828 = vpop.f32.mrf.mxu0
      %v829 = vadd.f32 0.0, %v828
      %830 = vmatmul.bf16.gmra.mxu0 %v606
      %v831 = vpop.f32.mrf.mxu0
      %v832 = vadd.f32 0.0, %v831
      %v833 = vpop.f32.mrf.mxu0
      %v834 = vadd.f32 0.0, %v833
      %835 = vmatmul.bf16.gmra.mxu0 %v609
      %v836 = vpop.f32.mrf.mxu0
      %v837 = vadd.f32 0.0, %v836
      %v838 = vpop.f32.mrf.mxu0
      %v839 = vadd.f32 0.0, %v838
      %840 = vmatmul.bf16.gmra.mxu0 %v612
      %v841 = vpop.f32.mrf.mxu0
      %v842 = vadd.f32 0.0, %v841
      %v843 = vpop.f32.mrf.mxu0
      %v844 = vadd.f32 0.0, %v843
      %845 = vmatmul.bf16.gmra.mxu0 %v615
      %v846 = vpop.f32.mrf.mxu0
      %v847 = vadd.f32 0.0, %v846
      %v848 = vpop.f32.mrf.mxu0
      %v849 = vadd.f32 0.0, %v848
      %850 = vmatmul.bf16.gmra.mxu0 %v618
      %v851 = vpop.f32.mrf.mxu0
      %v852 = vadd.f32 0.0, %v851
      %v853 = vpop.f32.mrf.mxu0
      %v854 = vadd.f32 0.0, %v853
      %855 = vmatmul.bf16.gmra.mxu0 %v621
      %v856 = vpop.f32.mrf.mxu0
      %v857 = vadd.f32 0.0, %v856
      %v858 = vpop.f32.mrf.mxu0
      %v859 = vadd.f32 0.0, %v858
      %860 = vmatmul.bf16.gmra.mxu0 %v624
      %v861 = vpop.f32.mrf.mxu0
      %v862 = vadd.f32 0.0, %v861
      %v863 = vpop.f32.mrf.mxu0
      %v864 = vadd.f32 0.0, %v863
      %865 = vmatmul.bf16.gmra.mxu0 %v627
      %v866 = vpop.f32.mrf.mxu0
      %v867 = vadd.f32 0.0, %v866
      %v868 = vpop.f32.mrf.mxu0
      %v869 = vadd.f32 0.0, %v868
      %870 = vmatmul.bf16.gmra.mxu0 %v630
      %v871 = vpop.f32.mrf.mxu0
      %v872 = vadd.f32 0.0, %v871
      %v873 = vpop.f32.mrf.mxu0
      %v874 = vadd.f32 0.0, %v873
      %875 = vmatmul.bf16.gmra.mxu0 %v633
      %v876 = vpop.f32.mrf.mxu0
      %v877 = vadd.f32 0.0, %v876
      %v878 = vpop.f32.mrf.mxu0
      %v879 = vadd.f32 0.0, %v878
      %880 = vmatmul.bf16.gmra.mxu0 %v636
      %v881 = vpop.f32.mrf.mxu0
      %v882 = vadd.f32 0.0, %v881
      %v883 = vpop.f32.mrf.mxu0
      %v884 = vadd.f32 0.0, %v883
      %885 = vmatmul.bf16.gmra.mxu0 %v639
      %v886 = vpop.f32.mrf.mxu0
      %v887 = vadd.f32 0.0, %v886
      %v888 = vpop.f32.mrf.mxu0
      %v889 = vadd.f32 0.0, %v888
      %890 = vmatmul.bf16.gmra.mxu0 %v642
      %v891 = vpop.f32.mrf.mxu0
      %v892 = vadd.f32 0.0, %v891
      %v893 = vpop.f32.mrf.mxu0
      %v894 = vadd.f32 0.0, %v893
      %895 = vmatmul.bf16.gmra.mxu0 %v645
      %v896 = vpop.f32.mrf.mxu0
      %v897 = vadd.f32 0.0, %v896
      %v898 = vpop.f32.mrf.mxu0
      %v899 = vadd.f32 0.0, %v898
      %900 = vdwg.mxu0
      %v901 = vmul.f32 %v657, 0.2
      %v902 = vmul.f32 %v659, 0.2
      %v903 = vmul.f32 %v662, 0.2
      %v904 = vmul.f32 %v664, 0.2
      %v905 = vmul.f32 %v667, 0.2
      %v906 = vmul.f32 %v669, 0.2
      %v907 = vmul.f32 %v672, 0.2
      %v908 = vmul.f32 %v674, 0.2
      %v909 = vmul.f32 %v677, 0.2
      %v910 = vmul.f32 %v679, 0.2
      %v911 = vmul.f32 %v682, 0.2
      %v912 = vmul.f32 %v684, 0.2
      %v913 = vmul.f32 %v687, 0.2
      %v914 = vmul.f32 %v689, 0.2
      %v915 = vmul.f32 %v692, 0.2
      %v916 = vmul.f32 %v694, 0.2
      %v917 = vmul.f32 %v697, 0.2
      %v918 = vmul.f32 %v699, 0.2
      %v919 = vmul.f32 %v702, 0.2
      %v920 = vmul.f32 %v704, 0.2
      %v921 = vmul.f32 %v707, 0.2
      %v922 = vmul.f32 %v709, 0.2
      %v923 = vmul.f32 %v712, 0.2
      %v924 = vmul.f32 %v714, 0.2
      %v925 = vmul.f32 %v717, 0.2
      %v926 = vmul.f32 %v719, 0.2
      %v927 = vmul.f32 %v722, 0.2
      %v928 = vmul.f32 %v724, 0.2
      %v929 = vmul.f32 %v727, 0.2
      %v930 = vmul.f32 %v729, 0.2
      %v931 = vmul.f32 %v732, 0.2
      %v932 = vmul.f32 %v734, 0.2
      %v933 = vmul.f32 %v737, 0.2
      %v934 = vmul.f32 %v739, 0.2
      %v935 = vmul.f32 %v742, 0.2
      %v936 = vmul.f32 %v744, 0.2
      %v937 = vmul.f32 %v747, 0.2
      %v938 = vmul.f32 %v749, 0.2
      %v939 = vmul.f32 %v752, 0.2
      %v940 = vmul.f32 %v754, 0.2
      %v941 = vmul.f32 %v757, 0.2
      %v942 = vmul.f32 %v759, 0.2
      %v943 = vmul.f32 %v762, 0.2
      %v944 = vmul.f32 %v764, 0.2
      %v945 = vmul.f32 %v767, 0.2
      %v946 = vmul.f32 %v769, 0.2
      %v947 = vmul.f32 %v772, 0.2
      %v948 = vmul.f32 %v774, 0.2
      %v949 = vmul.f32 %v777, 0.2
      %v950 = vmul.f32 %v779, 0.2
      %v951 = vmul.f32 %v782, 0.2
      %v952 = vmul.f32 %v784, 0.2
      %v953 = vmul.f32 %v787, 0.2
      %v954 = vmul.f32 %v789, 0.2
      %v955 = vmul.f32 %v792, 0.2
      %v956 = vmul.f32 %v794, 0.2
      %v957 = vmul.f32 %v797, 0.2
      %v958 = vmul.f32 %v799, 0.2
      %v959 = vmul.f32 %v802, 0.2
      %v960 = vmul.f32 %v804, 0.2
      %v961 = vmul.f32 %v807, 0.2
      %v962 = vmul.f32 %v809, 0.2
      %v963 = vmul.f32 %v812, 0.2
      %v964 = vmul.f32 %v814, 0.2
      %v965 = vmul.f32 %v817, 0.2
      %v966 = vmul.f32 %v819, 0.2
      %v967 = vmul.f32 %v822, 0.2
      %v968 = vmul.f32 %v824, 0.2
      %v969 = vmul.f32 %v827, 0.2
      %v970 = vmul.f32 %v829, 0.2
      %v971 = vmul.f32 %v832, 0.2
      %v972 = vmul.f32 %v834, 0.2
      %v973 = vmul.f32 %v837, 0.2
      %v974 = vmul.f32 %v839, 0.2
      %v975 = vmul.f32 %v842, 0.2
      %v976 = vmul.f32 %v844, 0.2
      %v977 = vmul.f32 %v847, 0.2
      %v978 = vmul.f32 %v849, 0.2
      %v979 = vmul.f32 %v852, 0.2
      %v980 = vmul.f32 %v854, 0.2
      %v981 = vmul.f32 %v857, 0.2
      %v982 = vmul.f32 %v859, 0.2
      %v983 = vmul.f32 %v862, 0.2
      %v984 = vmul.f32 %v864, 0.2
      %v985 = vmul.f32 %v867, 0.2
      %v986 = vmul.f32 %v869, 0.2
      %v987 = vmul.f32 %v872, 0.2
      %v988 = vmul.f32 %v874, 0.2
      %v989 = vmul.f32 %v877, 0.2
      %v990 = vmul.f32 %v879, 0.2
      %v991 = vmul.f32 %v882, 0.2
      %v992 = vmul.f32 %v884, 0.2
      %v993 = vmul.f32 %v887, 0.2
      %v994 = vmul.f32 %v889, 0.2
      %v995 = vmul.f32 %v892, 0.2
      %v996 = vmul.f32 %v894, 0.2
      %v997 = vmul.f32 %v897, 0.2
      %v998 = vmul.f32 %v899, 0.2
      %v999 = vmax.f32 %v657, %v901
      %v1000 = vmax.f32 %v659, %v902
      %v1001 = vmax.f32 %v662, %v903
      %v1002 = vmax.f32 %v664, %v904
      %v1003 = vmax.f32 %v667, %v905
      %v1004 = vmax.f32 %v669, %v906
      %v1005 = vmax.f32 %v672, %v907
      %v1006 = vmax.f32 %v674, %v908
      %v1007 = vmax.f32 %v677, %v909
      %v1008 = vmax.f32 %v679, %v910
      %v1009 = vmax.f32 %v682, %v911
      %v1010 = vmax.f32 %v684, %v912
      %v1011 = vmax.f32 %v687, %v913
      %v1012 = vmax.f32 %v689, %v914
      %v1013 = vmax.f32 %v692, %v915
      %v1014 = vmax.f32 %v694, %v916
      %v1015 = vmax.f32 %v697, %v917
      %v1016 = vmax.f32 %v699, %v918
      %v1017 = vmax.f32 %v702, %v919
      %v1018 = vmax.f32 %v704, %v920
      %v1019 = vmax.f32 %v707, %v921
      %v1020 = vmax.f32 %v709, %v922
      %v1021 = vmax.f32 %v712, %v923
      %v1022 = vmax.f32 %v714, %v924
      %v1023 = vmax.f32 %v717, %v925
      %v1024 = vmax.f32 %v719, %v926
      %v1025 = vmax.f32 %v722, %v927
      %v1026 = vmax.f32 %v724, %v928
      %v1027 = vmax.f32 %v727, %v929
      %v1028 = vmax.f32 %v729, %v930
      %v1029 = vmax.f32 %v732, %v931
      %v1030 = vmax.f32 %v734, %v932
      %v1031 = vmax.f32 %v737, %v933
      %v1032 = vmax.f32 %v739, %v934
      %v1033 = vmax.f32 %v742, %v935
      %v1034 = vmax.f32 %v744, %v936
      %v1035 = vmax.f32 %v747, %v937
      %v1036 = vmax.f32 %v749, %v938
      %v1037 = vmax.f32 %v752, %v939
      %v1038 = vmax.f32 %v754, %v940
      %v1039 = vmax.f32 %v757, %v941
      %v1040 = vmax.f32 %v759, %v942
      %v1041 = vmax.f32 %v762, %v943
      %v1042 = vmax.f32 %v764, %v944
      %v1043 = vmax.f32 %v767, %v945
      %v1044 = vmax.f32 %v769, %v946
      %v1045 = vmax.f32 %v772, %v947
      %v1046 = vmax.f32 %v774, %v948
      %v1047 = vmax.f32 %v777, %v949
      %v1048 = vmax.f32 %v779, %v950
      %v1049 = vmax.f32 %v782, %v951
      %v1050 = vmax.f32 %v784, %v952
      %v1051 = vmax.f32 %v787, %v953
      %v1052 = vmax.f32 %v789, %v954
      %v1053 = vmax.f32 %v792, %v955
      %v1054 = vmax.f32 %v794, %v956
      %v1055 = vmax.f32 %v797, %v957
      %v1056 = vmax.f32 %v799, %v958
      %v1057 = vmax.f32 %v802, %v959
      %v1058 = vmax.f32 %v804, %v960
      %v1059 = vmax.f32 %v807, %v961
      %v1060 = vmax.f32 %v809, %v962
      %v1061 = vmax.f32 %v812, %v963
      %v1062 = vmax.f32 %v814, %v964
      %v1063 = vmax.f32 %v817, %v965
      %v1064 = vmax.f32 %v819, %v966
      %v1065 = vmax.f32 %v822, %v967
      %v1066 = vmax.f32 %v824, %v968
      %v1067 = vmax.f32 %v827, %v969
      %v1068 = vmax.f32 %v829, %v970
      %v1069 = vmax.f32 %v832, %v971
      %v1070 = vmax.f32 %v834, %v972
      %v1071 = vmax.f32 %v837, %v973
      %v1072 = vmax.f32 %v839, %v974
      %v1073 = vmax.f32 %v842, %v975
      %v1074 = vmax.f32 %v844, %v976
      %v1075 = vmax.f32 %v847, %v977
      %v1076 = vmax.f32 %v849, %v978
      %v1077 = vmax.f32 %v852, %v979
      %v1078 = vmax.f32 %v854, %v980
      %v1079 = vmax.f32 %v857, %v981
      %v1080 = vmax.f32 %v859, %v982
      %v1081 = vmax.f32 %v862, %v983
      %v1082 = vmax.f32 %v864, %v984
      %v1083 = vmax.f32 %v867, %v985
      %v1084 = vmax.f32 %v869, %v986
      %v1085 = vmax.f32 %v872, %v987
      %v1086 = vmax.f32 %v874, %v988
      %v1087 = vmax.f32 %v877, %v989
      %v1088 = vmax.f32 %v879, %v990
      %v1089 = vmax.f32 %v882, %v991
      %v1090 = vmax.f32 %v884, %v992
      %v1091 = vmax.f32 %v887, %v993
      %v1092 = vmax.f32 %v889, %v994
      %v1093 = vmax.f32 %v892, %v995
      %v1094 = vmax.f32 %v894, %v996
      %v1095 = vmax.f32 %v897, %v997
      %v1096 = vmax.f32 %v899, %v998
      %v1097 = vpack.c.bf16 %v999, %v999
      %v1098 = vpack.c.bf16 %v1000, %v1000
      %v1099 = vpack.c.bf16 %v1001, %v1001
      %v1100 = vpack.c.bf16 %v1002, %v1002
      %v1101 = vpack.c.bf16 %v1003, %v1003
      %v1102 = vpack.c.bf16 %v1004, %v1004
      %v1103 = vpack.c.bf16 %v1005, %v1005
      %v1104 = vpack.c.bf16 %v1006, %v1006
      %v1105 = vpack.c.bf16 %v1007, %v1007
      %v1106 = vpack.c.bf16 %v1008, %v1008
      %v1107 = vpack.c.bf16 %v1009, %v1009
      %v1108 = vpack.c.bf16 %v1010, %v1010
      %v1109 = vpack.c.bf16 %v1011, %v1011
      %v1110 = vpack.c.bf16 %v1012, %v1012
      %v1111 = vpack.c.bf16 %v1013, %v1013
      %v1112 = vpack.c.bf16 %v1014, %v1014
      %v1113 = vpack.c.bf16 %v1015, %v1015
      %v1114 = vpack.c.bf16 %v1016, %v1016
      %v1115 = vpack.c.bf16 %v1017, %v1017
      %v1116 = vpack.c.bf16 %v1018, %v1018
      %v1117 = vpack.c.bf16 %v1019, %v1019
      %v1118 = vpack.c.bf16 %v1020, %v1020
      %v1119 = vpack.c.bf16 %v1021, %v1021
      %v1120 = vpack.c.bf16 %v1022, %v1022
      %v1121 = vpack.c.bf16 %v1023, %v1023
      %v1122 = vpack.c.bf16 %v1024, %v1024
      %v1123 = vpack.c.bf16 %v1025, %v1025
      %v1124 = vpack.c.bf16 %v1026, %v1026
      %v1125 = vpack.c.bf16 %v1027, %v1027
      %v1126 = vpack.c.bf16 %v1028, %v1028
      %v1127 = vpack.c.bf16 %v1029, %v1029
      %v1128 = vpack.c.bf16 %v1030, %v1030
      %v1129 = vpack.c.bf16 %v1031, %v1031
      %v1130 = vpack.c.bf16 %v1032, %v1032
      %v1131 = vpack.c.bf16 %v1033, %v1033
      %v1132 = vpack.c.bf16 %v1034, %v1034
      %v1133 = vpack.c.bf16 %v1035, %v1035
      %v1134 = vpack.c.bf16 %v1036, %v1036
      %v1135 = vpack.c.bf16 %v1037, %v1037
      %v1136 = vpack.c.bf16 %v1038, %v1038
      %v1137 = vpack.c.bf16 %v1039, %v1039
      %v1138 = vpack.c.bf16 %v1040, %v1040
      %v1139 = vpack.c.bf16 %v1041, %v1041
      %v1140 = vpack.c.bf16 %v1042, %v1042
      %v1141 = vpack.c.bf16 %v1043, %v1043
      %v1142 = vpack.c.bf16 %v1044, %v1044
      %v1143 = vpack.c.bf16 %v1045, %v1045
      %v1144 = vpack.c.bf16 %v1046, %v1046
      %v1145 = vpack.c.bf16 %v1047, %v1047
      %v1146 = vpack.c.bf16 %v1048, %v1048
      %v1147 = vpack.c.bf16 %v1049, %v1049
      %v1148 = vpack.c.bf16 %v1050, %v1050
      %v1149 = vpack.c.bf16 %v1051, %v1051
      %v1150 = vpack.c.bf16 %v1052, %v1052
      %v1151 = vpack.c.bf16 %v1053, %v1053
      %v1152 = vpack.c.bf16 %v1054, %v1054
      %v1153 = vpack.c.bf16 %v1055, %v1055
      %v1154 = vpack.c.bf16 %v1056, %v1056
      %v1155 = vpack.c.bf16 %v1057, %v1057
      %v1156 = vpack.c.bf16 %v1058, %v1058
      %v1157 = vpack.c.bf16 %v1059, %v1059
      %v1158 = vpack.c.bf16 %v1060, %v1060
      %v1159 = vpack.c.bf16 %v1061, %v1061
      %v1160 = vpack.c.bf16 %v1062, %v1062
      %v1161 = vpack.c.bf16 %v1063, %v1063
      %v1162 = vpack.c.bf16 %v1064, %v1064
      %v1163 = vpack.c.bf16 %v1065, %v1065
      %v1164 = vpack.c.bf16 %v1066, %v1066
      %v1165 = vpack.c.bf16 %v1067, %v1067
      %v1166 = vpack.c.bf16 %v1068, %v1068
      %v1167 = vpack.c.bf16 %v1069, %v1069
      %v1168 = vpack.c.bf16 %v1070, %v1070
      %v1169 = vpack.c.bf16 %v1071, %v1071
      %v1170 = vpack.c.bf16 %v1072, %v1072
      %v1171 = vpack.c.bf16 %v1073, %v1073
      %v1172 = vpack.c.bf16 %v1074, %v1074
      %v1173 = vpack.c.bf16 %v1075, %v1075
      %v1174 = vpack.c.bf16 %v1076, %v1076
      %v1175 = vpack.c.bf16 %v1077, %v1077
      %v1176 = vpack.c.bf16 %v1078, %v1078
      %v1177 = vpack.c.bf16 %v1079, %v1079
      %v1178 = vpack.c.bf16 %v1080, %v1080
      %v1179 = vpack.c.bf16 %v1081, %v1081
      %v1180 = vpack.c.bf16 %v1082, %v1082
      %v1181 = vpack.c.bf16 %v1083, %v1083
      %v1182 = vpack.c.bf16 %v1084, %v1084
      %v1183 = vpack.c.bf16 %v1085, %v1085
      %v1184 = vpack.c.bf16 %v1086, %v1086
      %v1185 = vpack.c.bf16 %v1087, %v1087
      %v1186 = vpack.c.bf16 %v1088, %v1088
      %v1187 = vpack.c.bf16 %v1089, %v1089
      %v1188 = vpack.c.bf16 %v1090, %v1090
      %v1189 = vpack.c.bf16 %v1091, %v1091
      %v1190 = vpack.c.bf16 %v1092, %v1092
      %v1191 = vpack.c.bf16 %v1093, %v1093
      %v1192 = vpack.c.bf16 %v1094, %v1094
      %v1193 = vpack.c.bf16 %v1095, %v1095
      %v1194 = vpack.c.bf16 %v1096, %v1096
      %1195 = vst [vmem:[%s145] sm:$0xf] %v1097
      %1196 = vst [vmem:[%s145 + $0x4] sm:$0xf] %v1098
      %1197 = vst [vmem:[%s145 + $0x8] sm:$0xf] %v1099
      %1198 = vst [vmem:[%s145 + $0xc] sm:$0xf] %v1100
      %1199 = vst [vmem:[%s145 + $0x10] sm:$0xf] %v1101
      %1200 = vst [vmem:[%s145 + $0x14] sm:$0xf] %v1102
      %1201 = vst [vmem:[%s145 + $0x18] sm:$0xf] %v1103
      %1202 = vst [vmem:[%s145 + $0x1c] sm:$0xf] %v1104
      %1203 = vst [vmem:[%s145 + $0x20] sm:$0xf] %v1105
      %1204 = vst [vmem:[%s145 + $0x24] sm:$0xf] %v1106
      %1205 = vst [vmem:[%s145 + $0x28] sm:$0xf] %v1107
      %1206 = vst [vmem:[%s145 + $0x2c] sm:$0xf] %v1108
      %1207 = vst [vmem:[%s145 + $0x30] sm:$0xf] %v1109
      %1208 = vst [vmem:[%s145 + $0x34] sm:$0xf] %v1110
      %1209 = vst [vmem:[%s145 + $0x38] sm:$0xf] %v1111
      %1210 = vst [vmem:[%s145 + $0x3c] sm:$0xf] %v1112
      %1211 = vst [vmem:[%s145 + $0x40] sm:$0xf] %v1113
      %1212 = vst [vmem:[%s145 + $0x44] sm:$0xf] %v1114
      %1213 = vst [vmem:[%s145 + $0x48] sm:$0xf] %v1115
      %1214 = vst [vmem:[%s145 + $0x4c] sm:$0xf] %v1116
      %1215 = vst [vmem:[%s145 + $0x50] sm:$0xf] %v1117
      %1216 = vst [vmem:[%s145 + $0x54] sm:$0xf] %v1118
      %1217 = vst [vmem:[%s145 + $0x58] sm:$0xf] %v1119
      %1218 = vst [vmem:[%s145 + $0x5c] sm:$0xf] %v1120
      %1219 = vst [vmem:[%s145 + $0x60] sm:$0xf] %v1121
      %1220 = vst [vmem:[%s145 + $0x64] sm:$0xf] %v1122
      %1221 = vst [vmem:[%s145 + $0x68] sm:$0xf] %v1123
      %1222 = vst [vmem:[%s145 + $0x6c] sm:$0xf] %v1124
      %1223 = vst [vmem:[%s145 + $0x70] sm:$0xf] %v1125
      %1224 = vst [vmem:[%s145 + $0x74] sm:$0xf] %v1126
      %1225 = vst [vmem:[%s145 + $0x78] sm:$0xf] %v1127
      %1226 = vst [vmem:[%s145 + $0x7c] sm:$0xf] %v1128
      %1227 = vst [vmem:[%s145 + $0x80] sm:$0xf] %v1129
      %1228 = vst [vmem:[%s145 + $0x84] sm:$0xf] %v1130
      %1229 = vst [vmem:[%s145 + $0x88] sm:$0xf] %v1131
      %1230 = vst [vmem:[%s145 + $0x8c] sm:$0xf] %v1132
      %1231 = vst [vmem:[%s145 + $0x90] sm:$0xf] %v1133
      %1232 = vst [vmem:[%s145 + $0x94] sm:$0xf] %v1134
      %1233 = vst [vmem:[%s145 + $0x98] sm:$0xf] %v1135
      %1234 = vst [vmem:[%s145 + $0x9c] sm:$0xf] %v1136
      %1235 = vst [vmem:[%s145 + $0xa0] sm:$0xf] %v1137
      %1236 = vst [vmem:[%s145 + $0xa4] sm:$0xf] %v1138
      %1237 = vst [vmem:[%s145 + $0xa8] sm:$0xf] %v1139
      %1238 = vst [vmem:[%s145 + $0xac] sm:$0xf] %v1140
      %1239 = vst [vmem:[%s145 + $0xb0] sm:$0xf] %v1141
      %1240 = vst [vmem:[%s145 + $0xb4] sm:$0xf] %v1142
      %1241 = vst [vmem:[%s145 + $0xb8] sm:$0xf] %v1143
      %1242 = vst [vmem:[%s145 + $0xbc] sm:$0xf] %v1144
      %1243 = vst [vmem:[%s145 + $0xc0] sm:$0xf] %v1145
      %1244 = vst [vmem:[%s145 + $0xc4] sm:$0xf] %v1146
      %1245 = vst [vmem:[%s145 + $0xc8] sm:$0xf] %v1147
      %1246 = vst [vmem:[%s145 + $0xcc] sm:$0xf] %v1148
      %1247 = vst [vmem:[%s145 + $0xd0] sm:$0xf] %v1149
      %1248 = vst [vmem:[%s145 + $0xd4] sm:$0xf] %v1150
      %1249 = vst [vmem:[%s145 + $0xd8] sm:$0xf] %v1151
      %1250 = vst [vmem:[%s145 + $0xdc] sm:$0xf] %v1152
      %1251 = vst [vmem:[%s145 + $0xe0] sm:$0xf] %v1153
      %1252 = vst [vmem:[%s145 + $0xe4] sm:$0xf] %v1154
      %1253 = vst [vmem:[%s145 + $0xe8] sm:$0xf] %v1155
      %1254 = vst [vmem:[%s145 + $0xec] sm:$0xf] %v1156
      %1255 = vst [vmem:[%s145 + $0xf0] sm:$0xf] %v1157
      %1256 = vst [vmem:[%s145 + $0xf4] sm:$0xf] %v1158
      %1257 = vst [vmem:[%s145 + $0xf8] sm:$0xf] %v1159
      %1258 = vst [vmem:[%s145 + $0xfc] sm:$0xf] %v1160
      %1259 = vst [vmem:[%s145 + $0x100] sm:$0xf] %v1161
      %1260 = vst [vmem:[%s145 + $0x104] sm:$0xf] %v1162
      %1261 = vst [vmem:[%s145 + $0x108] sm:$0xf] %v1163
      %1262 = vst [vmem:[%s145 + $0x10c] sm:$0xf] %v1164
      %1263 = vst [vmem:[%s145 + $0x110] sm:$0xf] %v1165
      %1264 = vst [vmem:[%s145 + $0x114] sm:$0xf] %v1166
      %1265 = vst [vmem:[%s145 + $0x118] sm:$0xf] %v1167
      %1266 = vst [vmem:[%s145 + $0x11c] sm:$0xf] %v1168
      %1267 = vst [vmem:[%s145 + $0x120] sm:$0xf] %v1169
      %1268 = vst [vmem:[%s145 + $0x124] sm:$0xf] %v1170
      %1269 = vst [vmem:[%s145 + $0x128] sm:$0xf] %v1171
      %1270 = vst [vmem:[%s145 + $0x12c] sm:$0xf] %v1172
      %1271 = vst [vmem:[%s145 + $0x130] sm:$0xf] %v1173
      %1272 = vst [vmem:[%s145 + $0x134] sm:$0xf] %v1174
      %1273 = vst [vmem:[%s145 + $0x138] sm:$0xf] %v1175
      %1274 = vst [vmem:[%s145 + $0x13c] sm:$0xf] %v1176
      %1275 = vst [vmem:[%s145 + $0x140] sm:$0xf] %v1177
      %1276 = vst [vmem:[%s145 + $0x144] sm:$0xf] %v1178
      %1277 = vst [vmem:[%s145 + $0x148] sm:$0xf] %v1179
      %1278 = vst [vmem:[%s145 + $0x14c] sm:$0xf] %v1180
      %1279 = vst [vmem:[%s145 + $0x150] sm:$0xf] %v1181
      %1280 = vst [vmem:[%s145 + $0x154] sm:$0xf] %v1182
      %1281 = vst [vmem:[%s145 + $0x158] sm:$0xf] %v1183
      %1282 = vst [vmem:[%s145 + $0x15c] sm:$0xf] %v1184
      %1283 = vst [vmem:[%s145 + $0x160] sm:$0xf] %v1185
      %1284 = vst [vmem:[%s145 + $0x164] sm:$0xf] %v1186
      %1285 = vst [vmem:[%s145 + $0x168] sm:$0xf] %v1187
      %1286 = vst [vmem:[%s145 + $0x16c] sm:$0xf] %v1188
      %1287 = vst [vmem:[%s145 + $0x170] sm:$0xf] %v1189
      %1288 = vst [vmem:[%s145 + $0x174] sm:$0xf] %v1190
      %1289 = vst [vmem:[%s145 + $0x178] sm:$0xf] %v1191
      %1290 = vst [vmem:[%s145 + $0x17c] sm:$0xf] %v1192
      %1291 = vst [vmem:[%s145 + $0x180] sm:$0xf] %v1193
      %1292 = vst [vmem:[%s145 + $0x184] sm:$0xf] %v1194
      %s1293 = smul.u32 98, %s13
      %p1294 = scmp.lt.s32.totalorder %s1293, 195
      %s1295 = scalar_select %p1294, %s1293, 195
      %s1296 = smul.addr %s1295, 4
      %s1297 = scalar_lea.vmem %s2, %s1296
      // Predicated region
      $region29: #{encoder_forward.4} parent=27 // pred_check
        %p1298 = pneg %p78
      $region30: #{encoder_forward.4} parent=27 // pred_check_branch
        %1300 = sbr.rel (%p1298) target = $region32
      $region31: #{encoder_forward.4} parent=27 // pred_region
        %s1301 = smul.u32 98, %s13
      $region32: #{encoder_forward.4} parent=27 // pred_fallthru
        _
    $region28: #{encoder_forward.4} parent=5 // pred_fallthru
      _
    %p1302 = scmp.le.s32.totalorder 2, %s8
    // Predicated region
    $region33: #{encoder_forward.4} parent=5 // pred_check
      %p1303 = pneg %p1302
    $region34: #{encoder_forward.4} parent=5 // pred_check_branch
      %1305 = sbr.rel (%p1303) target = $region36
    $region35: #{encoder_forward.4} parent=5 // pred_region
      %s1306 = ssub.s32 %s8, 2
      // Predicated region
      $region37: #{encoder_forward.4} parent=35 // pred_check
        %p1307 = pneg %p84
      $region38: #{encoder_forward.4} parent=35 // pred_check_branch
        %1309 = sbr.rel (%p1307) target = $region40
      $region39: #{encoder_forward.4} parent=35 // pred_region
        %s1310 = smul.u32 98, %s14
        %p1311 = scmp.lt.s32.totalorder %s1310, 195
        %s1312 = scalar_select %p1311, %s1310, 195
        %s1313 = smul.addr %s1312, 4
        %s1314 = scalar_lea.vmem %s2, %s1313
      $region40: #{encoder_forward.4} parent=35 // pred_fallthru
        _
    $region36: #{encoder_forward.4} parent=5 // pred_fallthru
      _
  $region6: #{encoder_forward.4} parent=0 // loop_footer
    %s12 = sadd.s32 1, %s8
  $region7: #{encoder_forward.4} parent=0 // loop_footer_branch
    %7 = sbr.rel target = $region3
  $region8: #{encoder_forward.4} parent=0 // loop_exit
    _

// kernel: encoder_forward.5
$region0: #{encoder_forward.5}
  #allocation0 [shape = 'u32[]', space=smem, size = 0x4, offset = 0x4, fixed_abs, tag = 'smem constant byte address 0x4 - core index']
  #allocation1 [shape = 'u32[72,128]{1,0:T(1,128)}', space=vmem, size = 0x9000, scoped, tag = 'internal scratch']
  %s0 = inlined_call_operand.vmem [shape: bf16[400,512], index: 0, kind: input, shape index: {}]
  %s1 = inlined_call_operand.vmem [shape: bf16[512,128], index: 1, kind: input, shape index: {}]
  %s2 = inlined_call_operand.vmem [shape: f32[1,128], index: 2, kind: input, shape index: {}]
  %s3 = inlined_call_operand.vmem [shape: f32[1,128], index: 3, kind: input, shape index: {}]
  %s4 = inlined_call_operand.vmem [shape: bf16[400,128], index: 4, kind: output, shape index: {}]
  %s5 = sld [smem:[#allocation0]]
  $region26: #{encoder_forward.5} parent=0
    _
  %s7 = ssub.s32 1, %s5
  %s8 = scalar_select 0, %s7, %s5
  // Predicated region
  $region2: #{encoder_forward.5} parent=0 // pred_check
    _
  $region3: #{encoder_forward.5} parent=0 // pred_check_branch
    %10 = sbr.rel (0) target = $region5
  $region4: #{encoder_forward.5} parent=0 // pred_region
    _
  $region5: #{encoder_forward.5} parent=0 // pred_fallthru
    _
  // Predicated region
  $region6: #{encoder_forward.5} parent=0 // pred_check
    _
  $region7: #{encoder_forward.5} parent=0 // pred_check_branch
    %12 = sbr.rel (0) target = $region9
  $region8: #{encoder_forward.5} parent=0 // pred_region
    _
  $region9: #{encoder_forward.5} parent=0 // pred_fallthru
    _
  // Predicated region
  $region10: #{encoder_forward.5} parent=0 // pred_check
    _
  $region11: #{encoder_forward.5} parent=0 // pred_check_branch
    %14 = sbr.rel (0) target = $region13
  $region12: #{encoder_forward.5} parent=0 // pred_region
    _
  $region13: #{encoder_forward.5} parent=0 // pred_fallthru
    _
  // Predicated region
  $region14: #{encoder_forward.5} parent=0 // pred_check
    _
  $region15: #{encoder_forward.5} parent=0 // pred_check_branch
    %16 = sbr.rel (0) target = $region17
  $region16: #{encoder_forward.5} parent=0 // pred_region
    _
  $region17: #{encoder_forward.5} parent=0 // pred_fallthru
    _
  %v17 = vld [vmem:[%s0] sm:$0xff]
  %v18 = vld [vmem:[%s0 + $0x8] sm:$0xff]
  %v19 = vld [vmem:[%s0 + $0x10] sm:$0xff]
  %v20 = vld [vmem:[%s0 + $0x18] sm:$0xff]
  %v21 = vld [vmem:[%s0 + $0x20] sm:$0xff]
  %v22 = vld [vmem:[%s0 + $0x28] sm:$0xff]
  %v23 = vld [vmem:[%s0 + $0x30] sm:$0xff]
  %v24 = vld [vmem:[%s0 + $0x38] sm:$0xff]
  %v25 = vld [vmem:[%s0 + $0x40] sm:$0xff]
  %v26 = vld [vmem:[%s0 + $0x48] sm:$0xff]
  %v27 = vld [vmem:[%s0 + $0x50] sm:$0xff]
  %v28 = vld [vmem:[%s0 + $0x58] sm:$0xff]
  %v29 = vld [vmem:[%s0 + $0x60] sm:$0xff]
  %v30 = vld [vmem:[%s0 + $0x68] sm:$0xff]
  %v31 = vld [vmem:[%s0 + $0x70] sm:$0xff]
  %v32 = vld [vmem:[%s0 + $0x78] sm:$0xff]
  %v33 = vld [vmem:[%s0 + $0x80] sm:$0xff]
  %v34 = vld [vmem:[%s0 + $0x88] sm:$0xff]
  %v35 = vld [vmem:[%s0 + $0x90] sm:$0xff]
  %v36 = vld [vmem:[%s0 + $0x98] sm:$0xff]
  %v37 = vld [vmem:[%s0 + $0xa0] sm:$0xff]
  %v38 = vld [vmem:[%s0 + $0xa8] sm:$0xff]
  %v39 = vld [vmem:[%s0 + $0xb0] sm:$0xff]
  %v40 = vld [vmem:[%s0 + $0xb8] sm:$0xff]
  %v41 = vld [vmem:[%s0 + $0xc0] sm:$0xff]
  %v42 = vld [vmem:[%s0 + $0xc8] sm:$0xff]
  %v43 = vld [vmem:[%s0 + $0xd0] sm:$0xff]
  %v44 = vld [vmem:[%s0 + $0xd8] sm:$0xff]
  %v45 = vld [vmem:[%s0 + $0xe0] sm:$0xff]
  %v46 = vld [vmem:[%s0 + $0xe8] sm:$0xff]
  %v47 = vld [vmem:[%s0 + $0xf0] sm:$0xff]
  %v48 = vld [vmem:[%s0 + $0xf8] sm:$0xff]
  %v49 = vld [vmem:[%s0 + $0x100] sm:$0xff]
  %v50 = vld [vmem:[%s0 + $0x108] sm:$0xff]
  %v51 = vld [vmem:[%s0 + $0x110] sm:$0xff]
  %v52 = vld [vmem:[%s0 + $0x118] sm:$0xff]
  %v53 = vld [vmem:[%s0 + $0x120] sm:$0xff]
  %v54 = vld [vmem:[%s0 + $0x128] sm:$0xff]
  %v55 = vld [vmem:[%s0 + $0x130] sm:$0xff]
  %v56 = vld [vmem:[%s0 + $0x138] sm:$0xff]
  %v57 = vld [vmem:[%s0 + $0x140] sm:$0xff]
  %v58 = vld [vmem:[%s0 + $0x148] sm:$0xff]
  %v59 = vld [vmem:[%s0 + $0x150] sm:$0xff]
  %v60 = vld [vmem:[%s0 + $0x158] sm:$0xff]
  %v61 = vld [vmem:[%s0 + $0x160] sm:$0xff]
  %v62 = vld [vmem:[%s0 + $0x168] sm:$0xff]
  %v63 = vld [vmem:[%s0 + $0x170] sm:$0xff]
  %v64 = vld [vmem:[%s0 + $0x178] sm:$0xff]
  %v65 = vld [vmem:[%s0 + $0x180] sm:$0xff]
  %v66 = vld [vmem:[%s0 + $0x188] sm:$0xff]
  %v67 = vld [vmem:[%s0 + $0x190] sm:$0xff]
  %v68 = vld [vmem:[%s0 + $0x198] sm:$0xff]
  %v69 = vld [vmem:[%s0 + $0x1a0] sm:$0xff]
  %v70 = vld [vmem:[%s0 + $0x1a8] sm:$0xff]
  %v71 = vld [vmem:[%s0 + $0x1b0] sm:$0xff]
  %v72 = vld [vmem:[%s0 + $0x1b8] sm:$0xff]
  %v73 = vld [vmem:[%s0 + $0x1c0] sm:$0xff]
  %v74 = vld [vmem:[%s0 + $0x1c8] sm:$0xff]
  %v75 = vld [vmem:[%s0 + $0x1d0] sm:$0xff]
  %v76 = vld [vmem:[%s0 + $0x1d8] sm:$0xff]
  %v77 = vld [vmem:[%s0 + $0x1e0] sm:$0xff]
  %v78 = vld [vmem:[%s0 + $0x1e8] sm:$0xff]
  %v79 = vld [vmem:[%s0 + $0x1f0] sm:$0xff]
  %v80 = vld [vmem:[%s0 + $0x1f8] sm:$0xff]
  %v81 = vld [vmem:[%s0 + $0x200] sm:$0xff]
  %v82 = vld [vmem:[%s0 + $0x208] sm:$0xff]
  %v83 = vld [vmem:[%s0 + $0x210] sm:$0xff]
  %v84 = vld [vmem:[%s0 + $0x218] sm:$0xff]
  %v85 = vld [vmem:[%s0 + $0x220] sm:$0xff]
  %v86 = vld [vmem:[%s0 + $0x228] sm:$0xff]
  %v87 = vld [vmem:[%s0 + $0x230] sm:$0xff]
  %v88 = vld [vmem:[%s0 + $0x238] sm:$0xff]
  %v89 = vld [vmem:[%s0 + $0x240] sm:$0xff]
  %v90 = vld [vmem:[%s0 + $0x248] sm:$0xff]
  %v91 = vld [vmem:[%s0 + $0x250] sm:$0xff]
  %v92 = vld [vmem:[%s0 + $0x258] sm:$0xff]
  %v93 = vld [vmem:[%s0 + $0x260] sm:$0xff]
  %v94 = vld [vmem:[%s0 + $0x268] sm:$0xff]
  %v95 = vld [vmem:[%s0 + $0x270] sm:$0xff]
  %v96 = vld [vmem:[%s0 + $0x278] sm:$0xff]
  %v97 = vld [vmem:[%s0 + $0x280] sm:$0xff]
  %v98 = vld [vmem:[%s0 + $0x288] sm:$0xff]
  %v99 = vld [vmem:[%s0 + $0x290] sm:$0xff]
  %v100 = vld [vmem:[%s0 + $0x298] sm:$0xff]
  %v101 = vld [vmem:[%s0 + $0x2a0] sm:$0xff]
  %v102 = vld [vmem:[%s0 + $0x2a8] sm:$0xff]
  %v103 = vld [vmem:[%s0 + $0x2b0] sm:$0xff]
  %v104 = vld [vmem:[%s0 + $0x2b8] sm:$0xff]
  %v105 = vld [vmem:[%s0 + $0x2c0] sm:$0xff]
  %v106 = vld [vmem:[%s0 + $0x2c8] sm:$0xff]
  %v107 = vld [vmem:[%s0 + $0x2d0] sm:$0xff]
  %v108 = vld [vmem:[%s0 + $0x2d8] sm:$0xff]
  %v109 = vld [vmem:[%s0 + $0x2e0] sm:$0xff]
  %v110 = vld [vmem:[%s0 + $0x2e8] sm:$0xff]
  %v111 = vld [vmem:[%s0 + $0x2f0] sm:$0xff]
  %v112 = vld [vmem:[%s0 + $0x2f8] sm:$0xff]
  %v113 = vld [vmem:[%s0 + $0x300] sm:$0xff]
  %v114 = vld [vmem:[%s0 + $0x308] sm:$0xff]
  %v115 = vld [vmem:[%s0 + $0x310] sm:$0xff]
  %v116 = vld [vmem:[%s0 + $0x318] sm:$0xff]
  %v117 = vld [vmem:[%s1] sm:$0xf]
  %v118 = vld [vmem:[%s1 + $0x4] sm:$0xf]
  %v119 = vld [vmem:[%s1 + $0x8] sm:$0xf]
  %v120 = vld [vmem:[%s1 + $0xc] sm:$0xf]
  %v121 = vld [vmem:[%s1 + $0x10] sm:$0xf]
  %v122 = vld [vmem:[%s1 + $0x14] sm:$0xf]
  %v123 = vld [vmem:[%s1 + $0x18] sm:$0xf]
  %v124 = vld [vmem:[%s1 + $0x1c] sm:$0xf]
  %v125 = vld [vmem:[%s1 + $0x20] sm:$0xf]
  %v126 = vld [vmem:[%s1 + $0x24] sm:$0xf]
  %v127 = vld [vmem:[%s1 + $0x28] sm:$0xf]
  %v128 = vld [vmem:[%s1 + $0x2c] sm:$0xf]
  %v129 = vld [vmem:[%s1 + $0x30] sm:$0xf]
  %v130 = vld [vmem:[%s1 + $0x34] sm:$0xf]
  %v131 = vld [vmem:[%s1 + $0x38] sm:$0xf]
  %v132 = vld [vmem:[%s1 + $0x3c] sm:$0xf]
  %v133 = vld [vmem:[%s1 + $0x40] sm:$0xf]
  %v134 = vld [vmem:[%s1 + $0x44] sm:$0xf]
  %v135 = vld [vmem:[%s1 + $0x48] sm:$0xf]
  %v136 = vld [vmem:[%s1 + $0x4c] sm:$0xf]
  %v137 = vld [vmem:[%s1 + $0x50] sm:$0xf]
  %v138 = vld [vmem:[%s1 + $0x54] sm:$0xf]
  %v139 = vld [vmem:[%s1 + $0x58] sm:$0xf]
  %v140 = vld [vmem:[%s1 + $0x5c] sm:$0xf]
  %v141 = vld [vmem:[%s1 + $0x60] sm:$0xf]
  %v142 = vld [vmem:[%s1 + $0x64] sm:$0xf]
  %v143 = vld [vmem:[%s1 + $0x68] sm:$0xf]
  %v144 = vld [vmem:[%s1 + $0x6c] sm:$0xf]
  %v145 = vld [vmem:[%s1 + $0x70] sm:$0xf]
  %v146 = vld [vmem:[%s1 + $0x74] sm:$0xf]
  %v147 = vld [vmem:[%s1 + $0x78] sm:$0xf]
  %v148 = vld [vmem:[%s1 + $0x7c] sm:$0xf]
  %v149 = vld [vmem:[%s1 + $0x80] sm:$0xf]
  %v150 = vld [vmem:[%s1 + $0x84] sm:$0xf]
  %v151 = vld [vmem:[%s1 + $0x88] sm:$0xf]
  %v152 = vld [vmem:[%s1 + $0x8c] sm:$0xf]
  %v153 = vld [vmem:[%s1 + $0x90] sm:$0xf]
  %v154 = vld [vmem:[%s1 + $0x94] sm:$0xf]
  %v155 = vld [vmem:[%s1 + $0x98] sm:$0xf]
  %v156 = vld [vmem:[%s1 + $0x9c] sm:$0xf]
  %v157 = vld [vmem:[%s1 + $0xa0] sm:$0xf]
  %v158 = vld [vmem:[%s1 + $0xa4] sm:$0xf]
  %v159 = vld [vmem:[%s1 + $0xa8] sm:$0xf]
  %v160 = vld [vmem:[%s1 + $0xac] sm:$0xf]
  %v161 = vld [vmem:[%s1 + $0xb0] sm:$0xf]
  %v162 = vld [vmem:[%s1 + $0xb4] sm:$0xf]
  %v163 = vld [vmem:[%s1 + $0xb8] sm:$0xf]
  %v164 = vld [vmem:[%s1 + $0xbc] sm:$0xf]
  %v165 = vld [vmem:[%s1 + $0xc0] sm:$0xf]
  %v166 = vld [vmem:[%s1 + $0xc4] sm:$0xf]
  %v167 = vld [vmem:[%s1 + $0xc8] sm:$0xf]
  %v168 = vld [vmem:[%s1 + $0xcc] sm:$0xf]
  %v169 = vld [vmem:[%s1 + $0xd0] sm:$0xf]
  %v170 = vld [vmem:[%s1 + $0xd4] sm:$0xf]
  %v171 = vld [vmem:[%s1 + $0xd8] sm:$0xf]
  %v172 = vld [vmem:[%s1 + $0xdc] sm:$0xf]
  %v173 = vld [vmem:[%s1 + $0xe0] sm:$0xf]
  %v174 = vld [vmem:[%s1 + $0xe4] sm:$0xf]
  %v175 = vld [vmem:[%s1 + $0xe8] sm:$0xf]
  %v176 = vld [vmem:[%s1 + $0xec] sm:$0xf]
  %v177 = vld [vmem:[%s1 + $0xf0] sm:$0xf]
  %v178 = vld [vmem:[%s1 + $0xf4] sm:$0xf]
  %v179 = vld [vmem:[%s1 + $0xf8] sm:$0xf]
  %v180 = vld [vmem:[%s1 + $0xfc] sm:$0xf]
  %v281 = vunpack.c.l.b16 %v17
  %v282 = vunpack.c.h.b16 %v17
  %v283 = vunpack.c.l.b16 %v18
  %v284 = vunpack.c.h.b16 %v18
  %v285 = vunpack.c.l.b16 %v19
  %v286 = vunpack.c.h.b16 %v19
  %v287 = vunpack.c.l.b16 %v20
  %v288 = vunpack.c.h.b16 %v20
  %v289 = vunpack.c.l.b16 %v21
  %v290 = vunpack.c.h.b16 %v21
  %v291 = vunpack.c.l.b16 %v22
  %v292 = vunpack.c.h.b16 %v22
  %v293 = vunpack.c.l.b16 %v23
  %v294 = vunpack.c.h.b16 %v23
  %v295 = vunpack.c.l.b16 %v24
  %v296 = vunpack.c.h.b16 %v24
  %v297 = vunpack.c.l.b16 %v25
  %v298 = vunpack.c.h.b16 %v25
  %v299 = vunpack.c.l.b16 %v26
  %v300 = vunpack.c.h.b16 %v26
  %v301 = vunpack.c.l.b16 %v27
  %v302 = vunpack.c.h.b16 %v27
  %v303 = vunpack.c.l.b16 %v28
  %v304 = vunpack.c.h.b16 %v28
  %v305 = vunpack.c.l.b16 %v29
  %v306 = vunpack.c.h.b16 %v29
  %v307 = vunpack.c.l.b16 %v30
  %v308 = vunpack.c.h.b16 %v30
  %v309 = vunpack.c.l.b16 %v31
  %v310 = vunpack.c.h.b16 %v31
  %v311 = vunpack.c.l.b16 %v32
  %v312 = vunpack.c.h.b16 %v32
  %v313 = vunpack.c.l.b16 %v33
  %v314 = vunpack.c.h.b16 %v33
  %v315 = vunpack.c.l.b16 %v34
  %v316 = vunpack.c.h.b16 %v34
  %v317 = vunpack.c.l.b16 %v35
  %v318 = vunpack.c.h.b16 %v35
  %v319 = vunpack.c.l.b16 %v36
  %v320 = vunpack.c.h.b16 %v36
  %v321 = vunpack.c.l.b16 %v37
  %v322 = vunpack.c.h.b16 %v37
  %v323 = vunpack.c.l.b16 %v38
  %v324 = vunpack.c.h.b16 %v38
  %v325 = vunpack.c.l.b16 %v39
  %v326 = vunpack.c.h.b16 %v39
  %v327 = vunpack.c.l.b16 %v40
  %v328 = vunpack.c.h.b16 %v40
  %v329 = vunpack.c.l.b16 %v41
  %v330 = vunpack.c.h.b16 %v41
  %v331 = vunpack.c.l.b16 %v42
  %v332 = vunpack.c.h.b16 %v42
  %v333 = vunpack.c.l.b16 %v43
  %v334 = vunpack.c.h.b16 %v43
  %v335 = vunpack.c.l.b16 %v44
  %v336 = vunpack.c.h.b16 %v44
  %v337 = vunpack.c.l.b16 %v45
  %v338 = vunpack.c.h.b16 %v45
  %v339 = vunpack.c.l.b16 %v46
  %v340 = vunpack.c.h.b16 %v46
  %v341 = vunpack.c.l.b16 %v47
  %v342 = vunpack.c.h.b16 %v47
  %v343 = vunpack.c.l.b16 %v48
  %v344 = vunpack.c.h.b16 %v48
  %v345 = vunpack.c.l.b16 %v49
  %v346 = vunpack.c.h.b16 %v49
  %v347 = vunpack.c.l.b16 %v50
  %v348 = vunpack.c.h.b16 %v50
  %v349 = vunpack.c.l.b16 %v51
  %v350 = vunpack.c.h.b16 %v51
  %v351 = vunpack.c.l.b16 %v52
  %v352 = vunpack.c.h.b16 %v52
  %v353 = vunpack.c.l.b16 %v53
  %v354 = vunpack.c.h.b16 %v53
  %v355 = vunpack.c.l.b16 %v54
  %v356 = vunpack.c.h.b16 %v54
  %v357 = vunpack.c.l.b16 %v55
  %v358 = vunpack.c.h.b16 %v55
  %v359 = vunpack.c.l.b16 %v56
  %v360 = vunpack.c.h.b16 %v56
  %v361 = vunpack.c.l.b16 %v57
  %v362 = vunpack.c.h.b16 %v57
  %v363 = vunpack.c.l.b16 %v58
  %v364 = vunpack.c.h.b16 %v58
  %v365 = vunpack.c.l.b16 %v59
  %v366 = vunpack.c.h.b16 %v59
  %v367 = vunpack.c.l.b16 %v60
  %v368 = vunpack.c.h.b16 %v60
  %v369 = vunpack.c.l.b16 %v61
  %v370 = vunpack.c.h.b16 %v61
  %v371 = vunpack.c.l.b16 %v62
  %v372 = vunpack.c.h.b16 %v62
  %v373 = vunpack.c.l.b16 %v63
  %v374 = vunpack.c.h.b16 %v63
  %v375 = vunpack.c.l.b16 %v64
  %v376 = vunpack.c.h.b16 %v64
  %v377 = vunpack.c.l.b16 %v65
  %v378 = vunpack.c.h.b16 %v65
  %v379 = vunpack.c.l.b16 %v66
  %v380 = vunpack.c.h.b16 %v66
  %v381 = vunpack.c.l.b16 %v67
  %v382 = vunpack.c.h.b16 %v67
  %v383 = vunpack.c.l.b16 %v68
  %v384 = vunpack.c.h.b16 %v68
  %v385 = vunpack.c.l.b16 %v69
  %v386 = vunpack.c.h.b16 %v69
  %v387 = vunpack.c.l.b16 %v70
  %v388 = vunpack.c.h.b16 %v70
  %v389 = vunpack.c.l.b16 %v71
  %v390 = vunpack.c.h.b16 %v71
  %v391 = vunpack.c.l.b16 %v72
  %v392 = vunpack.c.h.b16 %v72
  %v393 = vunpack.c.l.b16 %v73
  %v394 = vunpack.c.h.b16 %v73
  %v395 = vunpack.c.l.b16 %v74
  %v396 = vunpack.c.h.b16 %v74
  %v397 = vunpack.c.l.b16 %v75
  %v398 = vunpack.c.h.b16 %v75
  %v399 = vunpack.c.l.b16 %v76
  %v400 = vunpack.c.h.b16 %v76
  %v401 = vunpack.c.l.b16 %v77
  %v402 = vunpack.c.h.b16 %v77
  %v403 = vunpack.c.l.b16 %v78
  %v404 = vunpack.c.h.b16 %v78
  %v405 = vunpack.c.l.b16 %v79
  %v406 = vunpack.c.h.b16 %v79
  %v407 = vunpack.c.l.b16 %v80
  %v408 = vunpack.c.h.b16 %v80
  %v409 = vunpack.c.l.b16 %v81
  %v410 = vunpack.c.h.b16 %v81
  %v411 = vunpack.c.l.b16 %v82
  %v412 = vunpack.c.h.b16 %v82
  %v413 = vunpack.c.l.b16 %v83
  %v414 = vunpack.c.h.b16 %v83
  %v415 = vunpack.c.l.b16 %v84
  %v416 = vunpack.c.h.b16 %v84
  %v417 = vunpack.c.l.b16 %v85
  %v418 = vunpack.c.h.b16 %v85
  %v419 = vunpack.c.l.b16 %v86
  %v420 = vunpack.c.h.b16 %v86
  %v421 = vunpack.c.l.b16 %v87
  %v422 = vunpack.c.h.b16 %v87
  %v423 = vunpack.c.l.b16 %v88
  %v424 = vunpack.c.h.b16 %v88
  %v425 = vunpack.c.l.b16 %v89
  %v426 = vunpack.c.h.b16 %v89
  %v427 = vunpack.c.l.b16 %v90
  %v428 = vunpack.c.h.b16 %v90
  %v429 = vunpack.c.l.b16 %v91
  %v430 = vunpack.c.h.b16 %v91
  %v431 = vunpack.c.l.b16 %v92
  %v432 = vunpack.c.h.b16 %v92
  %v433 = vunpack.c.l.b16 %v93
  %v434 = vunpack.c.h.b16 %v93
  %v435 = vunpack.c.l.b16 %v94
  %v436 = vunpack.c.h.b16 %v94
  %v437 = vunpack.c.l.b16 %v95
  %v438 = vunpack.c.h.b16 %v95
  %v439 = vunpack.c.l.b16 %v96
  %v440 = vunpack.c.h.b16 %v96
  %v441 = vunpack.c.l.b16 %v97
  %v442 = vunpack.c.h.b16 %v97
  %v443 = vunpack.c.l.b16 %v98
  %v444 = vunpack.c.h.b16 %v98
  %v445 = vunpack.c.l.b16 %v99
  %v446 = vunpack.c.h.b16 %v99
  %v447 = vunpack.c.l.b16 %v100
  %v448 = vunpack.c.h.b16 %v100
  %v449 = vunpack.c.l.b16 %v101
  %v450 = vunpack.c.h.b16 %v101
  %v451 = vunpack.c.l.b16 %v102
  %v452 = vunpack.c.h.b16 %v102
  %v453 = vunpack.c.l.b16 %v103
  %v454 = vunpack.c.h.b16 %v103
  %v455 = vunpack.c.l.b16 %v104
  %v456 = vunpack.c.h.b16 %v104
  %v457 = vunpack.c.l.b16 %v105
  %v458 = vunpack.c.h.b16 %v105
  %v459 = vunpack.c.l.b16 %v106
  %v460 = vunpack.c.h.b16 %v106
  %v461 = vunpack.c.l.b16 %v107
  %v462 = vunpack.c.h.b16 %v107
  %v463 = vunpack.c.l.b16 %v108
  %v464 = vunpack.c.h.b16 %v108
  %v465 = vunpack.c.l.b16 %v109
  %v466 = vunpack.c.h.b16 %v109
  %v467 = vunpack.c.l.b16 %v110
  %v468 = vunpack.c.h.b16 %v110
  %v469 = vunpack.c.l.b16 %v111
  %v470 = vunpack.c.h.b16 %v111
  %v471 = vunpack.c.l.b16 %v112
  %v472 = vunpack.c.h.b16 %v112
  %v473 = vunpack.c.l.b16 %v113
  %v474 = vunpack.c.h.b16 %v113
  %v475 = vunpack.c.l.b16 %v114
  %v476 = vunpack.c.h.b16 %v114
  %v477 = vunpack.c.l.b16 %v115
  %v478 = vunpack.c.h.b16 %v115
  %v479 = vunpack.c.l.b16 %v116
  %v480 = vunpack.c.h.b16 %v116
  %v481 = vpack.c.b16 %v285, %v281
  %v482 = vpack.c.b16 %v286, %v282
  %v483 = vpack.c.b16 %v287, %v283
  %v484 = vpack.c.b16 %v288, %v284
  %v485 = vpack.c.b16 %v293, %v289
  %v486 = vpack.c.b16 %v294, %v290
  %v487 = vpack.c.b16 %v295, %v291
  %v488 = vpack.c.b16 %v296, %v292
  %v489 = vpack.c.b16 %v301, %v297
  %v490 = vpack.c.b16 %v302, %v298
  %v491 = vpack.c.b16 %v303, %v299
  %v492 = vpack.c.b16 %v304, %v300
  %v493 = vpack.c.b16 %v309, %v305
  %v494 = vpack.c.b16 %v310, %v306
  %v495 = vpack.c.b16 %v311, %v307
  %v496 = vpack.c.b16 %v312, %v308
  %v497 = vpack.c.b16 %v317, %v313
  %v498 = vpack.c.b16 %v318, %v314
  %v499 = vpack.c.b16 %v319, %v315
  %v500 = vpack.c.b16 %v320, %v316
  %v501 = vpack.c.b16 %v325, %v321
  %v502 = vpack.c.b16 %v326, %v322
  %v503 = vpack.c.b16 %v327, %v323
  %v504 = vpack.c.b16 %v328, %v324
  %v505 = vpack.c.b16 %v333, %v329
  %v506 = vpack.c.b16 %v334, %v330
  %v507 = vpack.c.b16 %v335, %v331
  %v508 = vpack.c.b16 %v336, %v332
  %v509 = vpack.c.b16 %v341, %v337
  %v510 = vpack.c.b16 %v342, %v338
  %v511 = vpack.c.b16 %v343, %v339
  %v512 = vpack.c.b16 %v344, %v340
  %v513 = vpack.c.b16 %v349, %v345
  %v514 = vpack.c.b16 %v350, %v346
  %v515 = vpack.c.b16 %v351, %v347
  %v516 = vpack.c.b16 %v352, %v348
  %v517 = vpack.c.b16 %v357, %v353
  %v518 = vpack.c.b16 %v358, %v354
  %v519 = vpack.c.b16 %v359, %v355
  %v520 = vpack.c.b16 %v360, %v356
  %v521 = vpack.c.b16 %v365, %v361
  %v522 = vpack.c.b16 %v366, %v362
  %v523 = vpack.c.b16 %v367, %v363
  %v524 = vpack.c.b16 %v368, %v364
  %v525 = vpack.c.b16 %v373, %v369
  %v526 = vpack.c.b16 %v374, %v370
  %v527 = vpack.c.b16 %v375, %v371
  %v528 = vpack.c.b16 %v376, %v372
  %v529 = vpack.c.b16 %v381, %v377
  %v530 = vpack.c.b16 %v382, %v378
  %v531 = vpack.c.b16 %v383, %v379
  %v532 = vpack.c.b16 %v384, %v380
  %v533 = vpack.c.b16 %v389, %v385
  %v534 = vpack.c.b16 %v390, %v386
  %v535 = vpack.c.b16 %v391, %v387
  %v536 = vpack.c.b16 %v392, %v388
  %v537 = vpack.c.b16 %v397, %v393
  %v538 = vpack.c.b16 %v398, %v394
  %v539 = vpack.c.b16 %v399, %v395
  %v540 = vpack.c.b16 %v400, %v396
  %v541 = vpack.c.b16 %v405, %v401
  %v542 = vpack.c.b16 %v406, %v402
  %v543 = vpack.c.b16 %v407, %v403
  %v544 = vpack.c.b16 %v408, %v404
  %v545 = vpack.c.b16 %v413, %v409
  %v546 = vpack.c.b16 %v414, %v410
  %v547 = vpack.c.b16 %v415, %v411
  %v548 = vpack.c.b16 %v416, %v412
  %v549 = vpack.c.b16 %v421, %v417
  %v550 = vpack.c.b16 %v422, %v418
  %v551 = vpack.c.b16 %v423, %v419
  %v552 = vpack.c.b16 %v424, %v420
  %v553 = vpack.c.b16 %v429, %v425
  %v554 = vpack.c.b16 %v430, %v426
  %v555 = vpack.c.b16 %v431, %v427
  %v556 = vpack.c.b16 %v432, %v428
  %v557 = vpack.c.b16 %v437, %v433
  %v558 = vpack.c.b16 %v438, %v434
  %v559 = vpack.c.b16 %v439, %v435
  %v560 = vpack.c.b16 %v440, %v436
  %v561 = vpack.c.b16 %v445, %v441
  %v562 = vpack.c.b16 %v446, %v442
  %v563 = vpack.c.b16 %v447, %v443
  %v564 = vpack.c.b16 %v448, %v444
  %v565 = vpack.c.b16 %v453, %v449
  %v566 = vpack.c.b16 %v454, %v450
  %v567 = vpack.c.b16 %v455, %v451
  %v568 = vpack.c.b16 %v456, %v452
  %v569 = vpack.c.b16 %v461, %v457
  %v570 = vpack.c.b16 %v462, %v458
  %v571 = vpack.c.b16 %v463, %v459
  %v572 = vpack.c.b16 %v464, %v460
  %v573 = vpack.c.b16 %v469, %v465
  %v574 = vpack.c.b16 %v470, %v466
  %v575 = vpack.c.b16 %v471, %v467
  %v576 = vpack.c.b16 %v472, %v468
  %v577 = vpack.c.b16 %v477, %v473
  %v578 = vpack.c.b16 %v478, %v474
  %v579 = vpack.c.b16 %v479, %v475
  %v580 = vpack.c.b16 %v480, %v476
  %v745 = vunpack.c.l.b16 %v117
  %v746 = vunpack.c.l.b16 %v118
  %v747 = vunpack.c.l.b16 %v119
  %v748 = vunpack.c.l.b16 %v120
  %v749 = vunpack.c.l.b16 %v121
  %v750 = vunpack.c.l.b16 %v122
  %v751 = vunpack.c.l.b16 %v123
  %v752 = vunpack.c.l.b16 %v124
  %v753 = vunpack.c.l.b16 %v125
  %v754 = vunpack.c.l.b16 %v126
  %v755 = vunpack.c.l.b16 %v127
  %v756 = vunpack.c.l.b16 %v128
  %v757 = vunpack.c.l.b16 %v129
  %v758 = vunpack.c.l.b16 %v130
  %v759 = vunpack.c.l.b16 %v131
  %v760 = vunpack.c.l.b16 %v132
  %v761 = vunpack.c.l.b16 %v133
  %v762 = vunpack.c.l.b16 %v134
  %v763 = vunpack.c.l.b16 %v135
  %v764 = vunpack.c.l.b16 %v136
  %v765 = vunpack.c.l.b16 %v137
  %v766 = vunpack.c.l.b16 %v138
  %v767 = vunpack.c.l.b16 %v139
  %v768 = vunpack.c.l.b16 %v140
  %v769 = vunpack.c.l.b16 %v141
  %v770 = vunpack.c.l.b16 %v142
  %v771 = vunpack.c.l.b16 %v143
  %v772 = vunpack.c.l.b16 %v144
  %v773 = vunpack.c.l.b16 %v145
  %v774 = vunpack.c.l.b16 %v146
  %v775 = vunpack.c.l.b16 %v147
  %v776 = vunpack.c.l.b16 %v148
  %v777 = vunpack.c.l.b16 %v149
  %v778 = vunpack.c.l.b16 %v150
  %v779 = vunpack.c.l.b16 %v151
  %v780 = vunpack.c.l.b16 %v152
  %v781 = vunpack.c.l.b16 %v153
  %v782 = vunpack.c.l.b16 %v154
  %v783 = vunpack.c.l.b16 %v155
  %v784 = vunpack.c.l.b16 %v156
  %v785 = vunpack.c.l.b16 %v157
  %v786 = vunpack.c.l.b16 %v158
  %v787 = vunpack.c.l.b16 %v159
  %v788 = vunpack.c.l.b16 %v160
  %v789 = vunpack.c.l.b16 %v161
  %v790 = vunpack.c.l.b16 %v162
  %v791 = vunpack.c.l.b16 %v163
  %v792 = vunpack.c.l.b16 %v164
  %v793 = vunpack.c.l.b16 %v165
  %v794 = vunpack.c.l.b16 %v166
  %v795 = vunpack.c.l.b16 %v167
  %v796 = vunpack.c.l.b16 %v168
  %v797 = vunpack.c.l.b16 %v169
  %v798 = vunpack.c.l.b16 %v170
  %v799 = vunpack.c.l.b16 %v171
  %v800 = vunpack.c.l.b16 %v172
  %v801 = vunpack.c.l.b16 %v173
  %v802 = vunpack.c.l.b16 %v174
  %v803 = vunpack.c.l.b16 %v175
  %v804 = vunpack.c.l.b16 %v176
  %v805 = vunpack.c.l.b16 %v177
  %v806 = vunpack.c.l.b16 %v178
  %v807 = vunpack.c.l.b16 %v179
  %v808 = vunpack.c.l.b16 %v180
  %v809 = vpack.c.b16 %v746, %v745
  %v810 = vpack.c.b16 %v748, %v747
  %v811 = vpack.c.b16 %v750, %v749
  %v812 = vpack.c.b16 %v752, %v751
  %v813 = vpack.c.b16 %v754, %v753
  %v814 = vpack.c.b16 %v756, %v755
  %v815 = vpack.c.b16 %v758, %v757
  %v816 = vpack.c.b16 %v760, %v759
  %v817 = vpack.c.b16 %v762, %v761
  %v818 = vpack.c.b16 %v764, %v763
  %v819 = vpack.c.b16 %v766, %v765
  %v820 = vpack.c.b16 %v768, %v767
  %v821 = vpack.c.b16 %v770, %v769
  %v822 = vpack.c.b16 %v772, %v771
  %v823 = vpack.c.b16 %v774, %v773
  %v824 = vpack.c.b16 %v776, %v775
  %v825 = vpack.c.b16 %v778, %v777
  %v826 = vpack.c.b16 %v780, %v779
  %v827 = vpack.c.b16 %v782, %v781
  %v828 = vpack.c.b16 %v784, %v783
  %v829 = vpack.c.b16 %v786, %v785
  %v830 = vpack.c.b16 %v788, %v787
  %v831 = vpack.c.b16 %v790, %v789
  %v832 = vpack.c.b16 %v792, %v791
  %v833 = vpack.c.b16 %v794, %v793
  %v834 = vpack.c.b16 %v796, %v795
  %v835 = vpack.c.b16 %v798, %v797
  %v836 = vpack.c.b16 %v800, %v799
  %v837 = vpack.c.b16 %v802, %v801
  %v838 = vpack.c.b16 %v804, %v803
  %v839 = vpack.c.b16 %v806, %v805
  %v840 = vpack.c.b16 %v808, %v807
  %873 = vmatpush.bf16.msra.mxu0 %v816
  %874 = vmatpush.bf16.msra.mxu0 %v815
  %875 = vmatpush.bf16.msra.mxu0 %v814
  %876 = vmatpush.bf16.msra.mxu0 %v813
  %877 = vmatpush.bf16.msra.mxu0 %v812
  %878 = vmatpush.bf16.msra.mxu0 %v811
  %879 = vmatpush.bf16.msra.mxu0 %v810
  %880 = vmatpush.bf16.msra.mxu0 %v809
  %881 = vmatmul.bf16.gmra.mxu0 %v481
  %v882 = vpop.f32.mrf.mxu0
  %v883 = vadd.f32 0.0, %v882
  %v884 = vpop.f32.mrf.mxu0
  %v885 = vadd.f32 0.0, %v884
  %886 = vmatmul.bf16.gmra.mxu0 %v485
  %v887 = vpop.f32.mrf.mxu0
  %v888 = vadd.f32 0.0, %v887
  %v889 = vpop.f32.mrf.mxu0
  %v890 = vadd.f32 0.0, %v889
  %891 = vmatmul.bf16.gmra.mxu0 %v489
  %v892 = vpop.f32.mrf.mxu0
  %v893 = vadd.f32 0.0, %v892
  %v894 = vpop.f32.mrf.mxu0
  %v895 = vadd.f32 0.0, %v894
  %896 = vmatmul.bf16.gmra.mxu0 %v493
  %v897 = vpop.f32.mrf.mxu0
  %v898 = vadd.f32 0.0, %v897
  %v899 = vpop.f32.mrf.mxu0
  %v900 = vadd.f32 0.0, %v899
  %901 = vmatmul.bf16.gmra.mxu0 %v497
  %v902 = vpop.f32.mrf.mxu0
  %v903 = vadd.f32 0.0, %v902
  %v904 = vpop.f32.mrf.mxu0
  %v905 = vadd.f32 0.0, %v904
  %906 = vmatmul.bf16.gmra.mxu0 %v501
  %v907 = vpop.f32.mrf.mxu0
  %v908 = vadd.f32 0.0, %v907
  %v909 = vpop.f32.mrf.mxu0
  %v910 = vadd.f32 0.0, %v909
  %911 = vmatmul.bf16.gmra.mxu0 %v505
  %v912 = vpop.f32.mrf.mxu0
  %v913 = vadd.f32 0.0, %v912
  %v914 = vpop.f32.mrf.mxu0
  %v915 = vadd.f32 0.0, %v914
  %916 = vmatmul.bf16.gmra.mxu0 %v509
  %v917 = vpop.f32.mrf.mxu0
  %v918 = vadd.f32 0.0, %v917
  %v919 = vpop.f32.mrf.mxu0
  %v920 = vadd.f32 0.0, %v919
  %921 = vmatmul.bf16.gmra.mxu0 %v513
  %v922 = vpop.f32.mrf.mxu0
  %v923 = vadd.f32 0.0, %v922
  %v924 = vpop.f32.mrf.mxu0
  %v925 = vadd.f32 0.0, %v924
  %926 = vmatmul.bf16.gmra.mxu0 %v517
  %v927 = vpop.f32.mrf.mxu0
  %v928 = vadd.f32 0.0, %v927
  %v929 = vpop.f32.mrf.mxu0
  %v930 = vadd.f32 0.0, %v929
  %931 = vmatmul.bf16.gmra.mxu0 %v521
  %v932 = vpop.f32.mrf.mxu0
  %v933 = vadd.f32 0.0, %v932
  %v934 = vpop.f32.mrf.mxu0
  %v935 = vadd.f32 0.0, %v934
  %936 = vmatmul.bf16.gmra.mxu0 %v525
  %v937 = vpop.f32.mrf.mxu0
  %v938 = vadd.f32 0.0, %v937
  %v939 = vpop.f32.mrf.mxu0
  %v940 = vadd.f32 0.0, %v939
  %941 = vmatmul.bf16.gmra.mxu0 %v529
  %v942 = vpop.f32.mrf.mxu0
  %v943 = vadd.f32 0.0, %v942
  %v944 = vpop.f32.mrf.mxu0
  %v945 = vadd.f32 0.0, %v944
  %946 = vmatmul.bf16.gmra.mxu0 %v533
  %v947 = vpop.f32.mrf.mxu0
  %v948 = vadd.f32 0.0, %v947
  %v949 = vpop.f32.mrf.mxu0
  %v950 = vadd.f32 0.0, %v949
  %951 = vmatmul.bf16.gmra.mxu0 %v537
  %v952 = vpop.f32.mrf.mxu0
  %v953 = vadd.f32 0.0, %v952
  %v954 = vpop.f32.mrf.mxu0
  %v955 = vadd.f32 0.0, %v954
  %956 = vmatmul.bf16.gmra.mxu0 %v541
  %v957 = vpop.f32.mrf.mxu0
  %v958 = vadd.f32 0.0, %v957
  %v959 = vpop.f32.mrf.mxu0
  %v960 = vadd.f32 0.0, %v959
  %961 = vmatmul.bf16.gmra.mxu0 %v545
  %v962 = vpop.f32.mrf.mxu0
  %v963 = vadd.f32 0.0, %v962
  %v964 = vpop.f32.mrf.mxu0
  %v965 = vadd.f32 0.0, %v964
  %966 = vmatmul.bf16.gmra.mxu0 %v549
  %v967 = vpop.f32.mrf.mxu0
  %v968 = vadd.f32 0.0, %v967
  %v969 = vpop.f32.mrf.mxu0
  %v970 = vadd.f32 0.0, %v969
  %971 = vmatmul.bf16.gmra.mxu0 %v553
  %v972 = vpop.f32.mrf.mxu0
  %v973 = vadd.f32 0.0, %v972
  %v974 = vpop.f32.mrf.mxu0
  %v975 = vadd.f32 0.0, %v974
  %976 = vmatmul.bf16.gmra.mxu0 %v557
  %v977 = vpop.f32.mrf.mxu0
  %v978 = vadd.f32 0.0, %v977
  %v979 = vpop.f32.mrf.mxu0
  %v980 = vadd.f32 0.0, %v979
  %981 = vmatmul.bf16.gmra.mxu0 %v561
  %v982 = vpop.f32.mrf.mxu0
  %v983 = vadd.f32 0.0, %v982
  %v984 = vpop.f32.mrf.mxu0
  %v985 = vadd.f32 0.0, %v984
  %986 = vmatmul.bf16.gmra.mxu0 %v565
  %v987 = vpop.f32.mrf.mxu0
  %v988 = vadd.f32 0.0, %v987
  %v989 = vpop.f32.mrf.mxu0
  %v990 = vadd.f32 0.0, %v989
  %991 = vmatmul.bf16.gmra.mxu0 %v569
  %v992 = vpop.f32.mrf.mxu0
  %v993 = vadd.f32 0.0, %v992
  %v994 = vpop.f32.mrf.mxu0
  %v995 = vadd.f32 0.0, %v994
  %996 = vmatmul.bf16.gmra.mxu0 %v573
  %v997 = vpop.f32.mrf.mxu0
  %v998 = vadd.f32 0.0, %v997
  %v999 = vpop.f32.mrf.mxu0
  %v1000 = vadd.f32 0.0, %v999
  %1001 = vmatmul.bf16.gmra.mxu0 %v577
  %v1002 = vpop.f32.mrf.mxu0
  %v1003 = vadd.f32 0.0, %v1002
  %v1004 = vpop.f32.mrf.mxu0
  %v1005 = vadd.f32 0.0, %v1004
  %1006 = vdwg.mxu0
  %1007 = vmatpush.bf16.msra.mxu0 %v824
  %1008 = vmatpush.bf16.msra.mxu0 %v823
  %1009 = vmatpush.bf16.msra.mxu0 %v822
  %1010 = vmatpush.bf16.msra.mxu0 %v821
  %1011 = vmatpush.bf16.msra.mxu0 %v820
  %1012 = vmatpush.bf16.msra.mxu0 %v819
  %1013 = vmatpush.bf16.msra.mxu0 %v818
  %1014 = vmatpush.bf16.msra.mxu0 %v817
  %1015 = vmatmul.bf16.gmra.mxu0 %v482
  %v1016 = vpop.f32.mrf.mxu0
  %v1017 = vadd.f32 %v883, %v1016
  %v1018 = vpop.f32.mrf.mxu0
  %v1019 = vadd.f32 %v885, %v1018
  %1020 = vmatmul.bf16.gmra.mxu0 %v486
  %v1021 = vpop.f32.mrf.mxu0
  %v1022 = vadd.f32 %v888, %v1021
  %v1023 = vpop.f32.mrf.mxu0
  %v1024 = vadd.f32 %v890, %v1023
  %1025 = vmatmul.bf16.gmra.mxu0 %v490
  %v1026 = vpop.f32.mrf.mxu0
  %v1027 = vadd.f32 %v893, %v1026
  %v1028 = vpop.f32.mrf.mxu0
  %v1029 = vadd.f32 %v895, %v1028
  %1030 = vmatmul.bf16.gmra.mxu0 %v494
  %v1031 = vpop.f32.mrf.mxu0
  %v1032 = vadd.f32 %v898, %v1031
  %v1033 = vpop.f32.mrf.mxu0
  %v1034 = vadd.f32 %v900, %v1033
  %1035 = vmatmul.bf16.gmra.mxu0 %v498
  %v1036 = vpop.f32.mrf.mxu0
  %v1037 = vadd.f32 %v903, %v1036
  %v1038 = vpop.f32.mrf.mxu0
  %v1039 = vadd.f32 %v905, %v1038
  %1040 = vmatmul.bf16.gmra.mxu0 %v502
  %v1041 = vpop.f32.mrf.mxu0
  %v1042 = vadd.f32 %v908, %v1041
  %v1043 = vpop.f32.mrf.mxu0
  %v1044 = vadd.f32 %v910, %v1043
  %1045 = vmatmul.bf16.gmra.mxu0 %v506
  %v1046 = vpop.f32.mrf.mxu0
  %v1047 = vadd.f32 %v913, %v1046
  %v1048 = vpop.f32.mrf.mxu0
  %v1049 = vadd.f32 %v915, %v1048
  %1050 = vmatmul.bf16.gmra.mxu0 %v510
  %v1051 = vpop.f32.mrf.mxu0
  %v1052 = vadd.f32 %v918, %v1051
  %v1053 = vpop.f32.mrf.mxu0
  %v1054 = vadd.f32 %v920, %v1053
  %1055 = vmatmul.bf16.gmra.mxu0 %v514
  %v1056 = vpop.f32.mrf.mxu0
  %v1057 = vadd.f32 %v923, %v1056
  %v1058 = vpop.f32.mrf.mxu0
  %v1059 = vadd.f32 %v925, %v1058
  %1060 = vmatmul.bf16.gmra.mxu0 %v518
  %v1061 = vpop.f32.mrf.mxu0
  %v1062 = vadd.f32 %v928, %v1061
  %v1063 = vpop.f32.mrf.mxu0
  %v1064 = vadd.f32 %v930, %v1063
  %1065 = vmatmul.bf16.gmra.mxu0 %v522
  %v1066 = vpop.f32.mrf.mxu0
  %v1067 = vadd.f32 %v933, %v1066
  %v1068 = vpop.f32.mrf.mxu0
  %v1069 = vadd.f32 %v935, %v1068
  %1070 = vmatmul.bf16.gmra.mxu0 %v526
  %v1071 = vpop.f32.mrf.mxu0
  %v1072 = vadd.f32 %v938, %v1071
  %v1073 = vpop.f32.mrf.mxu0
  %v1074 = vadd.f32 %v940, %v1073
  %1075 = vmatmul.bf16.gmra.mxu0 %v530
  %v1076 = vpop.f32.mrf.mxu0
  %v1077 = vadd.f32 %v943, %v1076
  %v1078 = vpop.f32.mrf.mxu0
  %v1079 = vadd.f32 %v945, %v1078
  %1080 = vmatmul.bf16.gmra.mxu0 %v534
  %v1081 = vpop.f32.mrf.mxu0
  %v1082 = vadd.f32 %v948, %v1081
  %v1083 = vpop.f32.mrf.mxu0
  %v1084 = vadd.f32 %v950, %v1083
  %1085 = vmatmul.bf16.gmra.mxu0 %v538
  %v1086 = vpop.f32.mrf.mxu0
  %v1087 = vadd.f32 %v953, %v1086
  %v1088 = vpop.f32.mrf.mxu0
  %v1089 = vadd.f32 %v955, %v1088
  %1090 = vmatmul.bf16.gmra.mxu0 %v542
  %v1091 = vpop.f32.mrf.mxu0
  %v1092 = vadd.f32 %v958, %v1091
  %v1093 = vpop.f32.mrf.mxu0
  %v1094 = vadd.f32 %v960, %v1093
  %1095 = vmatmul.bf16.gmra.mxu0 %v546
  %v1096 = vpop.f32.mrf.mxu0
  %v1097 = vadd.f32 %v963, %v1096
  %v1098 = vpop.f32.mrf.mxu0
  %v1099 = vadd.f32 %v965, %v1098
  %1100 = vmatmul.bf16.gmra.mxu0 %v550
  %v1101 = vpop.f32.mrf.mxu0
  %v1102 = vadd.f32 %v968, %v1101
  %v1103 = vpop.f32.mrf.mxu0
  %v1104 = vadd.f32 %v970, %v1103
  %1105 = vmatmul.bf16.gmra.mxu0 %v554
  %v1106 = vpop.f32.mrf.mxu0
  %v1107 = vadd.f32 %v973, %v1106
  %v1108 = vpop.f32.mrf.mxu0
  %v1109 = vadd.f32 %v975, %v1108
  %1110 = vmatmul.bf16.gmra.mxu0 %v558
  %v1111 = vpop.f32.mrf.mxu0
  %v1112 = vadd.f32 %v978, %v1111
  %v1113 = vpop.f32.mrf.mxu0
  %v1114 = vadd.f32 %v980, %v1113
  %1115 = vmatmul.bf16.gmra.mxu0 %v562
  %v1116 = vpop.f32.mrf.mxu0
  %v1117 = vadd.f32 %v983, %v1116
  %v1118 = vpop.f32.mrf.mxu0
  %v1119 = vadd.f32 %v985, %v1118
  %1120 = vmatmul.bf16.gmra.mxu0 %v566
  %v1121 = vpop.f32.mrf.mxu0
  %v1122 = vadd.f32 %v988, %v1121
  %v1123 = vpop.f32.mrf.mxu0
  %v1124 = vadd.f32 %v990, %v1123
  %1125 = vmatmul.bf16.gmra.mxu0 %v570
  %v1126 = vpop.f32.mrf.mxu0
  %v1127 = vadd.f32 %v993, %v1126
  %v1128 = vpop.f32.mrf.mxu0
  %v1129 = vadd.f32 %v995, %v1128
  %1130 = vmatmul.bf16.gmra.mxu0 %v574
  %v1131 = vpop.f32.mrf.mxu0
  %v1132 = vadd.f32 %v998, %v1131
  %v1133 = vpop.f32.mrf.mxu0
  %v1134 = vadd.f32 %v1000, %v1133
  %1135 = vmatmul.bf16.gmra.mxu0 %v578
  %v1136 = vpop.f32.mrf.mxu0
  %v1137 = vadd.f32 %v1003, %v1136
  %v1138 = vpop.f32.mrf.mxu0
  %v1139 = vadd.f32 %v1005, %v1138
  %1140 = vdwg.mxu0
  %1141 = vmatpush.bf16.msra.mxu0 %v832
  %1142 = vmatpush.bf16.msra.mxu0 %v831
  %1143 = vmatpush.bf16.msra.mxu0 %v830
  %1144 = vmatpush.bf16.msra.mxu0 %v829
  %1145 = vmatpush.bf16.msra.mxu0 %v828
  %1146 = vmatpush.bf16.msra.mxu0 %v827
  %1147 = vmatpush.bf16.msra.mxu0 %v826
  %1148 = vmatpush.bf16.msra.mxu0 %v825
  %1149 = vmatmul.bf16.gmra.mxu0 %v483
  %v1150 = vpop.f32.mrf.mxu0
  %v1151 = vadd.f32 %v1017, %v1150
  %v1152 = vpop.f32.mrf.mxu0
  %v1153 = vadd.f32 %v1019, %v1152
  %1154 = vmatmul.bf16.gmra.mxu0 %v487
  %v1155 = vpop.f32.mrf.mxu0
  %v1156 = vadd.f32 %v1022, %v1155
  %v1157 = vpop.f32.mrf.mxu0
  %v1158 = vadd.f32 %v1024, %v1157
  %1159 = vmatmul.bf16.gmra.mxu0 %v491
  %v1160 = vpop.f32.mrf.mxu0
  %v1161 = vadd.f32 %v1027, %v1160
  %v1162 = vpop.f32.mrf.mxu0
  %v1163 = vadd.f32 %v1029, %v1162
  %1164 = vmatmul.bf16.gmra.mxu0 %v495
  %v1165 = vpop.f32.mrf.mxu0
  %v1166 = vadd.f32 %v1032, %v1165
  %v1167 = vpop.f32.mrf.mxu0
  %v1168 = vadd.f32 %v1034, %v1167
  %1169 = vmatmul.bf16.gmra.mxu0 %v499
  %v1170 = vpop.f32.mrf.mxu0
  %v1171 = vadd.f32 %v1037, %v1170
  %v1172 = vpop.f32.mrf.mxu0
  %v1173 = vadd.f32 %v1039, %v1172
  %1174 = vmatmul.bf16.gmra.mxu0 %v503
  %v1175 = vpop.f32.mrf.mxu0
  %v1176 = vadd.f32 %v1042, %v1175
  %v1177 = vpop.f32.mrf.mxu0
  %v1178 = vadd.f32 %v1044, %v1177
  %1179 = vmatmul.bf16.gmra.mxu0 %v507
  %v1180 = vpop.f32.mrf.mxu0
  %v1181 = vadd.f32 %v1047, %v1180
  %v1182 = vpop.f32.mrf.mxu0
  %v1183 = vadd.f32 %v1049, %v1182
  %1184 = vmatmul.bf16.gmra.mxu0 %v511
  %v1185 = vpop.f32.mrf.mxu0
  %v1186 = vadd.f32 %v1052, %v1185
  %v1187 = vpop.f32.mrf.mxu0
  %v1188 = vadd.f32 %v1054, %v1187
  %1189 = vmatmul.bf16.gmra.mxu0 %v515
  %v1190 = vpop.f32.mrf.mxu0
  %v1191 = vadd.f32 %v1057, %v1190
  %v1192 = vpop.f32.mrf.mxu0
  %v1193 = vadd.f32 %v1059, %v1192
  %1194 = vmatmul.bf16.gmra.mxu0 %v519
  %v1195 = vpop.f32.mrf.mxu0
  %v1196 = vadd.f32 %v1062, %v1195
  %v1197 = vpop.f32.mrf.mxu0
  %v1198 = vadd.f32 %v1064, %v1197
  %1199 = vmatmul.bf16.gmra.mxu0 %v523
  %v1200 = vpop.f32.mrf.mxu0
  %v1201 = vadd.f32 %v1067, %v1200
  %v1202 = vpop.f32.mrf.mxu0
  %v1203 = vadd.f32 %v1069, %v1202
  %1204 = vmatmul.bf16.gmra.mxu0 %v527
  %v1205 = vpop.f32.mrf.mxu0
  %v1206 = vadd.f32 %v1072, %v1205
  %v1207 = vpop.f32.mrf.mxu0
  %v1208 = vadd.f32 %v1074, %v1207
  %1209 = vmatmul.bf16.gmra.mxu0 %v531
  %v1210 = vpop.f32.mrf.mxu0
  %v1211 = vadd.f32 %v1077, %v1210
  %v1212 = vpop.f32.mrf.mxu0
  %v1213 = vadd.f32 %v1079, %v1212
  %1214 = vmatmul.bf16.gmra.mxu0 %v535
  %v1215 = vpop.f32.mrf.mxu0
  %v1216 = vadd.f32 %v1082, %v1215
  %v1217 = vpop.f32.mrf.mxu0
  %v1218 = vadd.f32 %v1084, %v1217
  %1219 = vmatmul.bf16.gmra.mxu0 %v539
  %v1220 = vpop.f32.mrf.mxu0
  %v1221 = vadd.f32 %v1087, %v1220
  %v1222 = vpop.f32.mrf.mxu0
  %v1223 = vadd.f32 %v1089, %v1222
  %1224 = vmatmul.bf16.gmra.mxu0 %v543
  %v1225 = vpop.f32.mrf.mxu0
  %v1226 = vadd.f32 %v1092, %v1225
  %v1227 = vpop.f32.mrf.mxu0
  %v1228 = vadd.f32 %v1094, %v1227
  %1229 = vmatmul.bf16.gmra.mxu0 %v547
  %v1230 = vpop.f32.mrf.mxu0
  %v1231 = vadd.f32 %v1097, %v1230
  %v1232 = vpop.f32.mrf.mxu0
  %v1233 = vadd.f32 %v1099, %v1232
  %1234 = vmatmul.bf16.gmra.mxu0 %v551
  %v1235 = vpop.f32.mrf.mxu0
  %v1236 = vadd.f32 %v1102, %v1235
  %v1237 = vpop.f32.mrf.mxu0
  %v1238 = vadd.f32 %v1104, %v1237
  %1239 = vmatmul.bf16.gmra.mxu0 %v555
  %v1240 = vpop.f32.mrf.mxu0
  %v1241 = vadd.f32 %v1107, %v1240
  %v1242 = vpop.f32.mrf.mxu0
  %v1243 = vadd.f32 %v1109, %v1242
  %1244 = vmatmul.bf16.gmra.mxu0 %v559
  %v1245 = vpop.f32.mrf.mxu0
  %v1246 = vadd.f32 %v1112, %v1245
  %v1247 = vpop.f32.mrf.mxu0
  %v1248 = vadd.f32 %v1114, %v1247
  %1249 = vmatmul.bf16.gmra.mxu0 %v563
  %v1250 = vpop.f32.mrf.mxu0
  %v1251 = vadd.f32 %v1117, %v1250
  %v1252 = vpop.f32.mrf.mxu0
  %v1253 = vadd.f32 %v1119, %v1252
  %1254 = vmatmul.bf16.gmra.mxu0 %v567
  %v1255 = vpop.f32.mrf.mxu0
  %v1256 = vadd.f32 %v1122, %v1255
  %v1257 = vpop.f32.mrf.mxu0
  %v1258 = vadd.f32 %v1124, %v1257
  %1259 = vmatmul.bf16.gmra.mxu0 %v571
  %v1260 = vpop.f32.mrf.mxu0
  %v1261 = vadd.f32 %v1127, %v1260
  %v1262 = vpop.f32.mrf.mxu0
  %v1263 = vadd.f32 %v1129, %v1262
  %1264 = vmatmul.bf16.gmra.mxu0 %v575
  %v1265 = vpop.f32.mrf.mxu0
  %v1266 = vadd.f32 %v1132, %v1265
  %v1267 = vpop.f32.mrf.mxu0
  %v1268 = vadd.f32 %v1134, %v1267
  %1269 = vmatmul.bf16.gmra.mxu0 %v579
  %v1270 = vpop.f32.mrf.mxu0
  %v1271 = vadd.f32 %v1137, %v1270
  %v1272 = vpop.f32.mrf.mxu0
  %v1273 = vadd.f32 %v1139, %v1272
  %1274 = vdwg.mxu0
  %1275 = vmatpush.bf16.msra.mxu0 %v840
  %1276 = vmatpush.bf16.msra.mxu0 %v839
  %1277 = vmatpush.bf16.msra.mxu0 %v838
  %1278 = vmatpush.bf16.msra.mxu0 %v837
  %1279 = vmatpush.bf16.msra.mxu0 %v836
  %1280 = vmatpush.bf16.msra.mxu0 %v835
  %1281 = vmatpush.bf16.msra.mxu0 %v834
  %1282 = vmatpush.bf16.msra.mxu0 %v833
  %1283 = vmatmul.bf16.gmra.mxu0 %v484
  %v1284 = vpop.f32.mrf.mxu0
  %v1285 = vadd.f32 %v1151, %v1284
  %v1286 = vpop.f32.mrf.mxu0
  %v1287 = vadd.f32 %v1153, %v1286
  %1288 = vmatmul.bf16.gmra.mxu0 %v488
  %v1289 = vpop.f32.mrf.mxu0
  %v1290 = vadd.f32 %v1156, %v1289
  %v1291 = vpop.f32.mrf.mxu0
  %v1292 = vadd.f32 %v1158, %v1291
  %1293 = vmatmul.bf16.gmra.mxu0 %v492
  %v1294 = vpop.f32.mrf.mxu0
  %v1295 = vadd.f32 %v1161, %v1294
  %v1296 = vpop.f32.mrf.mxu0
  %v1297 = vadd.f32 %v1163, %v1296
  %1298 = vmatmul.bf16.gmra.mxu0 %v496
  %v1299 = vpop.f32.mrf.mxu0
  %v1300 = vadd.f32 %v1166, %v1299
  %v1301 = vpop.f32.mrf.mxu0
  %v1302 = vadd.f32 %v1168, %v1301
  %1303 = vmatmul.bf16.gmra.mxu0 %v500
  %v1304 = vpop.f32.mrf.mxu0
  %v1305 = vadd.f32 %v1171, %v1304
  %v1306 = vpop.f32.mrf.mxu0
  %v1307 = vadd.f32 %v1173, %v1306
  %1308 = vmatmul.bf16.gmra.mxu0 %v504
  %v1309 = vpop.f32.mrf.mxu0
  %v1310 = vadd.f32 %v1176, %v1309
  %v1311 = vpop.f32.mrf.mxu0
  %v1312 = vadd.f32 %v1178, %v1311
  %1313 = vmatmul.bf16.gmra.mxu0 %v508
  %v1314 = vpop.f32.mrf.mxu0
  %v1315 = vadd.f32 %v1181, %v1314
  %v1316 = vpop.f32.mrf.mxu0
  %v1317 = vadd.f32 %v1183, %v1316
  %1318 = vmatmul.bf16.gmra.mxu0 %v512
  %v1319 = vpop.f32.mrf.mxu0
  %v1320 = vadd.f32 %v1186, %v1319
  %v1321 = vpop.f32.mrf.mxu0
  %v1322 = vadd.f32 %v1188, %v1321
  %1323 = vmatmul.bf16.gmra.mxu0 %v516
  %v1324 = vpop.f32.mrf.mxu0
  %v1325 = vadd.f32 %v1191, %v1324
  %v1326 = vpop.f32.mrf.mxu0
  %v1327 = vadd.f32 %v1193, %v1326
  %1328 = vmatmul.bf16.gmra.mxu0 %v520
  %v1329 = vpop.f32.mrf.mxu0
  %v1330 = vadd.f32 %v1196, %v1329
  %v1331 = vpop.f32.mrf.mxu0
  %v1332 = vadd.f32 %v1198, %v1331
  %1333 = vmatmul.bf16.gmra.mxu0 %v524
  %v1334 = vpop.f32.mrf.mxu0
  %v1335 = vadd.f32 %v1201, %v1334
  %v1336 = vpop.f32.mrf.mxu0
  %v1337 = vadd.f32 %v1203, %v1336
  %1338 = vmatmul.bf16.gmra.mxu0 %v528
  %v1339 = vpop.f32.mrf.mxu0
  %v1340 = vadd.f32 %v1206, %v1339
  %v1341 = vpop.f32.mrf.mxu0
  %v1342 = vadd.f32 %v1208, %v1341
  %1343 = vmatmul.bf16.gmra.mxu0 %v532
  %v1344 = vpop.f32.mrf.mxu0
  %v1345 = vadd.f32 %v1211, %v1344
  %v1346 = vpop.f32.mrf.mxu0
  %v1347 = vadd.f32 %v1213, %v1346
  %1348 = vmatmul.bf16.gmra.mxu0 %v536
  %v1349 = vpop.f32.mrf.mxu0
  %v1350 = vadd.f32 %v1216, %v1349
  %v1351 = vpop.f32.mrf.mxu0
  %v1352 = vadd.f32 %v1218, %v1351
  %1353 = vmatmul.bf16.gmra.mxu0 %v540
  %v1354 = vpop.f32.mrf.mxu0
  %v1355 = vadd.f32 %v1221, %v1354
  %v1356 = vpop.f32.mrf.mxu0
  %v1357 = vadd.f32 %v1223, %v1356
  %1358 = vmatmul.bf16.gmra.mxu0 %v544
  %v1359 = vpop.f32.mrf.mxu0
  %v1360 = vadd.f32 %v1226, %v1359
  %v1361 = vpop.f32.mrf.mxu0
  %v1362 = vadd.f32 %v1228, %v1361
  %1363 = vmatmul.bf16.gmra.mxu0 %v548
  %v1364 = vpop.f32.mrf.mxu0
  %v1365 = vadd.f32 %v1231, %v1364
  %v1366 = vpop.f32.mrf.mxu0
  %v1367 = vadd.f32 %v1233, %v1366
  %1368 = vmatmul.bf16.gmra.mxu0 %v552
  %v1369 = vpop.f32.mrf.mxu0
  %v1370 = vadd.f32 %v1236, %v1369
  %v1371 = vpop.f32.mrf.mxu0
  %v1372 = vadd.f32 %v1238, %v1371
  %1373 = vmatmul.bf16.gmra.mxu0 %v556
  %v1374 = vpop.f32.mrf.mxu0
  %v1375 = vadd.f32 %v1241, %v1374
  %v1376 = vpop.f32.mrf.mxu0
  %v1377 = vadd.f32 %v1243, %v1376
  %1378 = vmatmul.bf16.gmra.mxu0 %v560
  %v1379 = vpop.f32.mrf.mxu0
  %v1380 = vadd.f32 %v1246, %v1379
  %v1381 = vpop.f32.mrf.mxu0
  %v1382 = vadd.f32 %v1248, %v1381
  %1383 = vmatmul.bf16.gmra.mxu0 %v564
  %v1384 = vpop.f32.mrf.mxu0
  %v1385 = vadd.f32 %v1251, %v1384
  %v1386 = vpop.f32.mrf.mxu0
  %v1387 = vadd.f32 %v1253, %v1386
  %1388 = vmatmul.bf16.gmra.mxu0 %v568
  %v1389 = vpop.f32.mrf.mxu0
  %v1390 = vadd.f32 %v1256, %v1389
  %v1391 = vpop.f32.mrf.mxu0
  %v1392 = vadd.f32 %v1258, %v1391
  %1393 = vmatmul.bf16.gmra.mxu0 %v572
  %v1394 = vpop.f32.mrf.mxu0
  %v1395 = vadd.f32 %v1261, %v1394
  %v1396 = vpop.f32.mrf.mxu0
  %v1397 = vadd.f32 %v1263, %v1396
  %1398 = vmatmul.bf16.gmra.mxu0 %v576
  %v1399 = vpop.f32.mrf.mxu0
  %v1400 = vadd.f32 %v1266, %v1399
  %v1401 = vpop.f32.mrf.mxu0
  %v1402 = vadd.f32 %v1268, %v1401
  %1403 = vmatmul.bf16.gmra.mxu0 %v580
  %v1404 = vpop.f32.mrf.mxu0
  %v1405 = vadd.f32 %v1271, %v1404
  %v1406 = vpop.f32.mrf.mxu0
  %v1407 = vadd.f32 %v1273, %v1406
  %1408 = vdwg.mxu0
  %v1409 = vadd.f32 %v1285, %v1287
  %v1410 = vadd.f32 %v1409, %v1290
  %v1411 = vadd.f32 %v1410, %v1292
  %v1412 = vadd.f32 %v1411, %v1295
  %v1413 = vadd.f32 %v1412, %v1297
  %v1414 = vadd.f32 %v1413, %v1300
  %v1415 = vadd.f32 %v1414, %v1302
  %v1416 = vadd.f32 %v1415, %v1305
  %v1417 = vadd.f32 %v1416, %v1307
  %v1418 = vadd.f32 %v1417, %v1310
  %v1419 = vadd.f32 %v1418, %v1312
  %v1420 = vadd.f32 %v1419, %v1315
  %v1421 = vadd.f32 %v1420, %v1317
  %v1422 = vadd.f32 %v1421, %v1320
  %v1423 = vadd.f32 %v1422, %v1322
  %v1424 = vadd.f32 %v1423, %v1325
  %v1425 = vadd.f32 %v1424, %v1327
  %v1426 = vadd.f32 %v1425, %v1330
  %v1427 = vadd.f32 %v1426, %v1332
  %v1428 = vadd.f32 %v1427, %v1335
  %v1429 = vadd.f32 %v1428, %v1337
  %v1430 = vadd.f32 %v1429, %v1340
  %v1431 = vadd.f32 %v1430, %v1342
  %v1432 = vadd.f32 %v1431, %v1345
  %v1433 = vadd.f32 %v1432, %v1347
  %v1434 = vadd.f32 %v1433, %v1350
  %v1435 = vadd.f32 %v1434, %v1352
  %v1436 = vadd.f32 %v1435, %v1355
  %v1437 = vadd.f32 %v1436, %v1357
  %v1438 = vadd.f32 %v1437, %v1360
  %v1439 = vadd.f32 %v1438, %v1362
  %v1440 = vadd.f32 %v1439, %v1365
  %v1441 = vadd.f32 %v1440, %v1367
  %v1442 = vadd.f32 %v1441, %v1370
  %v1443 = vadd.f32 %v1442, %v1372
  %v1444 = vadd.f32 %v1443, %v1375
  %v1445 = vadd.f32 %v1444, %v1377
  %v1446 = vadd.f32 %v1445, %v1380
  %v1447 = vadd.f32 %v1446, %v1382
  %v1448 = vadd.f32 %v1447, %v1385
  %v1449 = vadd.f32 %v1448, %v1387
  %v1450 = vadd.f32 %v1449, %v1390
  %v1451 = vadd.f32 %v1450, %v1392
  %v1452 = vadd.f32 %v1451, %v1395
  %v1453 = vadd.f32 %v1452, %v1397
  %v1454 = vadd.f32 %v1453, %v1400
  %v1455 = vadd.f32 %v1454, %v1402
  %v1456 = vadd.f32 %v1455, %v1405
  %v1457 = vadd.f32 %v1456, %v1407
  %v1458 = vrot.slane %v1457, 4
  %v1459 = vadd.f32 %v1457, %v1458
  %v1460 = vrot.slane %v1459, 2
  %v1461 = vadd.f32 %v1459, %v1460
  %v1462 = vrot.slane %v1461, 1
  %v1463 = vadd.f32 %v1461, %v1462
  %v1464 = vmul.f32 %v1463, 0.0025510204
  %v1465 = vmul.f32 %v1285, %v1285
  %v1466 = vmul.f32 %v1287, %v1287
  %v1467 = vmul.f32 %v1290, %v1290
  %v1468 = vmul.f32 %v1292, %v1292
  %v1469 = vmul.f32 %v1295, %v1295
  %v1470 = vmul.f32 %v1297, %v1297
  %v1471 = vmul.f32 %v1300, %v1300
  %v1472 = vmul.f32 %v1302, %v1302
  %v1473 = vmul.f32 %v1305, %v1305
  %v1474 = vmul.f32 %v1307, %v1307
  %v1475 = vmul.f32 %v1310, %v1310
  %v1476 = vmul.f32 %v1312, %v1312
  %v1477 = vmul.f32 %v1315, %v1315
  %v1478 = vmul.f32 %v1317, %v1317
  %v1479 = vmul.f32 %v1320, %v1320
  %v1480 = vmul.f32 %v1322, %v1322
  %v1481 = vmul.f32 %v1325, %v1325
  %v1482 = vmul.f32 %v1327, %v1327
  %v1483 = vmul.f32 %v1330, %v1330
  %v1484 = vmul.f32 %v1332, %v1332
  %v1485 = vmul.f32 %v1335, %v1335
  %v1486 = vmul.f32 %v1337, %v1337
  %v1487 = vmul.f32 %v1340, %v1340
  %v1488 = vmul.f32 %v1342, %v1342
  %v1489 = vmul.f32 %v1345, %v1345
  %v1490 = vmul.f32 %v1347, %v1347
  %v1491 = vmul.f32 %v1350, %v1350
  %v1492 = vmul.f32 %v1352, %v1352
  %v1493 = vmul.f32 %v1355, %v1355
  %v1494 = vmul.f32 %v1357, %v1357
  %v1495 = vmul.f32 %v1360, %v1360
  %v1496 = vmul.f32 %v1362, %v1362
  %v1497 = vmul.f32 %v1365, %v1365
  %v1498 = vmul.f32 %v1367, %v1367
  %v1499 = vmul.f32 %v1370, %v1370
  %v1500 = vmul.f32 %v1372, %v1372
  %v1501 = vmul.f32 %v1375, %v1375
  %v1502 = vmul.f32 %v1377, %v1377
  %v1503 = vmul.f32 %v1380, %v1380
  %v1504 = vmul.f32 %v1382, %v1382
  %v1505 = vmul.f32 %v1385, %v1385
  %v1506 = vmul.f32 %v1387, %v1387
  %v1507 = vmul.f32 %v1390, %v1390
  %v1508 = vmul.f32 %v1392, %v1392
  %v1509 = vmul.f32 %v1395, %v1395
  %v1510 = vmul.f32 %v1397, %v1397
  %v1511 = vmul.f32 %v1400, %v1400
  %v1512 = vmul.f32 %v1402, %v1402
  %v1513 = vmul.f32 %v1405, %v1405
  %v1514 = vmul.f32 %v1407, %v1407
  %v1515 = vadd.f32 %v1465, %v1466
  %v1516 = vadd.f32 %v1515, %v1467
  %v1517 = vadd.f32 %v1516, %v1468
  %v1518 = vadd.f32 %v1517, %v1469
  %v1519 = vadd.f32 %v1518, %v1470
  %v1520 = vadd.f32 %v1519, %v1471
  %v1521 = vadd.f32 %v1520, %v1472
  %v1522 = vadd.f32 %v1521, %v1473
  %v1523 = vadd.f32 %v1522, %v1474
  %v1524 = vadd.f32 %v1523, %v1475
  %v1525 = vadd.f32 %v1524, %v1476
  %v1526 = vadd.f32 %v1525, %v1477
  %v1527 = vadd.f32 %v1526, %v1478
  %v1528 = vadd.f32 %v1527, %v1479
  %v1529 = vadd.f32 %v1528, %v1480
  %v1530 = vadd.f32 %v1529, %v1481
  %v1531 = vadd.f32 %v1530, %v1482
  %v1532 = vadd.f32 %v1531, %v1483
  %v1533 = vadd.f32 %v1532, %v1484
  %v1534 = vadd.f32 %v1533, %v1485
  %v1535 = vadd.f32 %v1534, %v1486
  %v1536 = vadd.f32 %v1535, %v1487
  %v1537 = vadd.f32 %v1536, %v1488
  %v1538 = vadd.f32 %v1537, %v1489
  %v1539 = vadd.f32 %v1538, %v1490
  %v1540 = vadd.f32 %v1539, %v1491
  %v1541 = vadd.f32 %v1540, %v1492
  %v1542 = vadd.f32 %v1541, %v1493
  %v1543 = vadd.f32 %v1542, %v1494
  %v1544 = vadd.f32 %v1543, %v1495
  %v1545 = vadd.f32 %v1544, %v1496
  %v1546 = vadd.f32 %v1545, %v1497
  %v1547 = vadd.f32 %v1546, %v1498
  %v1548 = vadd.f32 %v1547, %v1499
  %v1549 = vadd.f32 %v1548, %v1500
  %v1550 = vadd.f32 %v1549, %v1501
  %v1551 = vadd.f32 %v1550, %v1502
  %v1552 = vadd.f32 %v1551, %v1503
  %v1553 = vadd.f32 %v1552, %v1504
  %v1554 = vadd.f32 %v1553, %v1505
  %v1555 = vadd.f32 %v1554, %v1506
  %v1556 = vadd.f32 %v1555, %v1507
  %v1557 = vadd.f32 %v1556, %v1508
  %v1558 = vadd.f32 %v1557, %v1509
  %v1559 = vadd.f32 %v1558, %v1510
  %v1560 = vadd.f32 %v1559, %v1511
  %v1561 = vadd.f32 %v1560, %v1512
  %v1562 = vadd.f32 %v1561, %v1513
  %v1563 = vadd.f32 %v1562, %v1514
  %v1564 = vrot.slane %v1563, 4
  %v1565 = vadd.f32 %v1563, %v1564
  %v1566 = vrot.slane %v1565, 2
  %v1567 = vadd.f32 %v1565, %v1566
  %v1568 = vrot.slane %v1567, 1
  %v1569 = vadd.f32 %v1567, %v1568
  %v1570 = vmul.f32 %v1569, 0.0025510204
  %v1571 = vmul.f32 %v1464, %v1464
  %v1572 = vsub.f32 %v1570, %v1571
  %v1573 = vld [vmem:[%s2] sm:$0x1]
  %v1574 = vadd.f32 %v1572, 1e-05
  %v1575 = vrsqrt.pop %v1574
  %v1576 = vmul.f32 %v1575, %v1574
  %v1577 = vmul.f32 %v1576, %v1575
  %v1578 = vmul.f32 0.5, %v1577
  %v1579 = vsub.f32 1.5, %v1578
  %v1580 = vmul.f32 %v1575, %v1579
  %vm1581 = vweird.f32 %v1574
  %vm1582 = vweird.f32 %v1575
  %vm1583 = vmor %vm1581, %vm1582
  %v1584 = vsel %vm1583, %v1575, %v1580
  %v1585 = vmul.f32 %v1573, %v1584
  %v1586 = vld [vmem:[%s3] sm:$0x1]
  %v1587 = vmul.f32 %v1464, %v1585
  %v1588 = vsub.f32 %v1586, %v1587
  %v1590 = vperm.slane %v1585, 0
  %v1592 = vmul.f32 %v1285, %v1590
  %v1593 = vmul.f32 %v1287, %v1590
  %v1594 = vmul.f32 %v1290, %v1590
  %v1595 = vmul.f32 %v1292, %v1590
  %v1596 = vmul.f32 %v1295, %v1590
  %v1597 = vmul.f32 %v1297, %v1590
  %v1598 = vmul.f32 %v1300, %v1590
  %v1599 = vmul.f32 %v1302, %v1590
  %v1600 = vmul.f32 %v1305, %v1590
  %v1601 = vmul.f32 %v1307, %v1590
  %v1602 = vmul.f32 %v1310, %v1590
  %v1603 = vmul.f32 %v1312, %v1590
  %v1604 = vmul.f32 %v1315, %v1590
  %v1605 = vmul.f32 %v1317, %v1590
  %v1606 = vmul.f32 %v1320, %v1590
  %v1607 = vmul.f32 %v1322, %v1590
  %v1608 = vmul.f32 %v1325, %v1590
  %v1609 = vmul.f32 %v1327, %v1590
  %v1610 = vmul.f32 %v1330, %v1590
  %v1611 = vmul.f32 %v1332, %v1590
  %v1612 = vmul.f32 %v1335, %v1590
  %v1613 = vmul.f32 %v1337, %v1590
  %v1614 = vmul.f32 %v1340, %v1590
  %v1615 = vmul.f32 %v1342, %v1590
  %v1616 = vmul.f32 %v1345, %v1590
  %v1617 = vmul.f32 %v1347, %v1590
  %v1618 = vmul.f32 %v1350, %v1590
  %v1619 = vmul.f32 %v1352, %v1590
  %v1620 = vmul.f32 %v1355, %v1590
  %v1621 = vmul.f32 %v1357, %v1590
  %v1622 = vmul.f32 %v1360, %v1590
  %v1623 = vmul.f32 %v1362, %v1590
  %v1624 = vmul.f32 %v1365, %v1590
  %v1625 = vmul.f32 %v1367, %v1590
  %v1626 = vmul.f32 %v1370, %v1590
  %v1627 = vmul.f32 %v1372, %v1590
  %v1628 = vmul.f32 %v1375, %v1590
  %v1629 = vmul.f32 %v1377, %v1590
  %v1630 = vmul.f32 %v1380, %v1590
  %v1631 = vmul.f32 %v1382, %v1590
  %v1632 = vmul.f32 %v1385, %v1590
  %v1633 = vmul.f32 %v1387, %v1590
  %v1634 = vmul.f32 %v1390, %v1590
  %v1635 = vmul.f32 %v1392, %v1590
  %v1636 = vmul.f32 %v1395, %v1590
  %v1637 = vmul.f32 %v1397, %v1590
  %v1638 = vmul.f32 %v1400, %v1590
  %v1639 = vmul.f32 %v1402, %v1590
  %v1640 = vmul.f32 %v1405, %v1590
  %v1641 = vmul.f32 %v1407, %v1590
  %v1643 = vperm.slane %v1588, 0
  %v1645 = vadd.f32 %v1592, %v1643
  %v1646 = vadd.f32 %v1593, %v1643
  %v1647 = vadd.f32 %v1594, %v1643
  %v1648 = vadd.f32 %v1595, %v1643
  %v1649 = vadd.f32 %v1596, %v1643
  %v1650 = vadd.f32 %v1597, %v1643
  %v1651 = vadd.f32 %v1598, %v1643
  %v1652 = vadd.f32 %v1599, %v1643
  %v1653 = vadd.f32 %v1600, %v1643
  %v1654 = vadd.f32 %v1601, %v1643
  %v1655 = vadd.f32 %v1602, %v1643
  %v1656 = vadd.f32 %v1603, %v1643
  %v1657 = vadd.f32 %v1604, %v1643
  %v1658 = vadd.f32 %v1605, %v1643
  %v1659 = vadd.f32 %v1606, %v1643
  %v1660 = vadd.f32 %v1607, %v1643
  %v1661 = vadd.f32 %v1608, %v1643
  %v1662 = vadd.f32 %v1609, %v1643
  %v1663 = vadd.f32 %v1610, %v1643
  %v1664 = vadd.f32 %v1611, %v1643
  %v1665 = vadd.f32 %v1612, %v1643
  %v1666 = vadd.f32 %v1613, %v1643
  %v1667 = vadd.f32 %v1614, %v1643
  %v1668 = vadd.f32 %v1615, %v1643
  %v1669 = vadd.f32 %v1616, %v1643
  %v1670 = vadd.f32 %v1617, %v1643
  %v1671 = vadd.f32 %v1618, %v1643
  %v1672 = vadd.f32 %v1619, %v1643
  %v1673 = vadd.f32 %v1620, %v1643
  %v1674 = vadd.f32 %v1621, %v1643
  %v1675 = vadd.f32 %v1622, %v1643
  %v1676 = vadd.f32 %v1623, %v1643
  %v1677 = vadd.f32 %v1624, %v1643
  %v1678 = vadd.f32 %v1625, %v1643
  %v1679 = vadd.f32 %v1626, %v1643
  %v1680 = vadd.f32 %v1627, %v1643
  %v1681 = vadd.f32 %v1628, %v1643
  %v1682 = vadd.f32 %v1629, %v1643
  %v1683 = vadd.f32 %v1630, %v1643
  %v1684 = vadd.f32 %v1631, %v1643
  %v1685 = vadd.f32 %v1632, %v1643
  %v1686 = vadd.f32 %v1633, %v1643
  %v1687 = vadd.f32 %v1634, %v1643
  %v1688 = vadd.f32 %v1635, %v1643
  %v1689 = vadd.f32 %v1636, %v1643
  %v1690 = vadd.f32 %v1637, %v1643
  %v1691 = vadd.f32 %v1638, %v1643
  %v1692 = vadd.f32 %v1639, %v1643
  %v1693 = vadd.f32 %v1640, %v1643
  %v1694 = vadd.f32 %v1641, %v1643
  %v1695 = vmul.f32 %v1645, 0.2
  %v1696 = vmul.f32 %v1646, 0.2
  %v1697 = vmul.f32 %v1647, 0.2
  %v1698 = vmul.f32 %v1648, 0.2
  %v1699 = vmul.f32 %v1649, 0.2
  %v1700 = vmul.f32 %v1650, 0.2
  %v1701 = vmul.f32 %v1651, 0.2
  %v1702 = vmul.f32 %v1652, 0.2
  %v1703 = vmul.f32 %v1653, 0.2
  %v1704 = vmul.f32 %v1654, 0.2
  %v1705 = vmul.f32 %v1655, 0.2
  %v1706 = vmul.f32 %v1656, 0.2
  %v1707 = vmul.f32 %v1657, 0.2
  %v1708 = vmul.f32 %v1658, 0.2
  %v1709 = vmul.f32 %v1659, 0.2
  %v1710 = vmul.f32 %v1660, 0.2
  %v1711 = vmul.f32 %v1661, 0.2
  %v1712 = vmul.f32 %v1662, 0.2
  %v1713 = vmul.f32 %v1663, 0.2
  %v1714 = vmul.f32 %v1664, 0.2
  %v1715 = vmul.f32 %v1665, 0.2
  %v1716 = vmul.f32 %v1666, 0.2
  %v1717 = vmul.f32 %v1667, 0.2
  %v1718 = vmul.f32 %v1668, 0.2
  %v1719 = vmul.f32 %v1669, 0.2
  %v1720 = vmul.f32 %v1670, 0.2
  %v1721 = vmul.f32 %v1671, 0.2
  %v1722 = vmul.f32 %v1672, 0.2
  %v1723 = vmul.f32 %v1673, 0.2
  %v1724 = vmul.f32 %v1674, 0.2
  %v1725 = vmul.f32 %v1675, 0.2
  %v1726 = vmul.f32 %v1676, 0.2
  %v1727 = vmul.f32 %v1677, 0.2
  %v1728 = vmul.f32 %v1678, 0.2
  %v1729 = vmul.f32 %v1679, 0.2
  %v1730 = vmul.f32 %v1680, 0.2
  %v1731 = vmul.f32 %v1681, 0.2
  %v1732 = vmul.f32 %v1682, 0.2
  %v1733 = vmul.f32 %v1683, 0.2
  %v1734 = vmul.f32 %v1684, 0.2
  %v1735 = vmul.f32 %v1685, 0.2
  %v1736 = vmul.f32 %v1686, 0.2
  %v1737 = vmul.f32 %v1687, 0.2
  %v1738 = vmul.f32 %v1688, 0.2
  %v1739 = vmul.f32 %v1689, 0.2
  %v1740 = vmul.f32 %v1690, 0.2
  %v1741 = vmul.f32 %v1691, 0.2
  %v1742 = vmul.f32 %v1692, 0.2
  %v1743 = vmul.f32 %v1693, 0.2
  %v1744 = vmul.f32 %v1694, 0.2
  %v1745 = vmax.f32 %v1645, %v1695
  %v1746 = vmax.f32 %v1646, %v1696
  %v1747 = vmax.f32 %v1647, %v1697
  %v1748 = vmax.f32 %v1648, %v1698
  %v1749 = vmax.f32 %v1649, %v1699
  %v1750 = vmax.f32 %v1650, %v1700
  %v1751 = vmax.f32 %v1651, %v1701
  %v1752 = vmax.f32 %v1652, %v1702
  %v1753 = vmax.f32 %v1653, %v1703
  %v1754 = vmax.f32 %v1654, %v1704
  %v1755 = vmax.f32 %v1655, %v1705
  %v1756 = vmax.f32 %v1656, %v1706
  %v1757 = vmax.f32 %v1657, %v1707
  %v1758 = vmax.f32 %v1658, %v1708
  %v1759 = vmax.f32 %v1659, %v1709
  %v1760 = vmax.f32 %v1660, %v1710
  %v1761 = vmax.f32 %v1661, %v1711
  %v1762 = vmax.f32 %v1662, %v1712
  %v1763 = vmax.f32 %v1663, %v1713
  %v1764 = vmax.f32 %v1664, %v1714
  %v1765 = vmax.f32 %v1665, %v1715
  %v1766 = vmax.f32 %v1666, %v1716
  %v1767 = vmax.f32 %v1667, %v1717
  %v1768 = vmax.f32 %v1668, %v1718
  %v1769 = vmax.f32 %v1669, %v1719
  %v1770 = vmax.f32 %v1670, %v1720
  %v1771 = vmax.f32 %v1671, %v1721
  %v1772 = vmax.f32 %v1672, %v1722
  %v1773 = vmax.f32 %v1673, %v1723
  %v1774 = vmax.f32 %v1674, %v1724
  %v1775 = vmax.f32 %v1675, %v1725
  %v1776 = vmax.f32 %v1676, %v1726
  %v1777 = vmax.f32 %v1677, %v1727
  %v1778 = vmax.f32 %v1678, %v1728
  %v1779 = vmax.f32 %v1679, %v1729
  %v1780 = vmax.f32 %v1680, %v1730
  %v1781 = vmax.f32 %v1681, %v1731
  %v1782 = vmax.f32 %v1682, %v1732
  %v1783 = vmax.f32 %v1683, %v1733
  %v1784 = vmax.f32 %v1684, %v1734
  %v1785 = vmax.f32 %v1685, %v1735
  %v1786 = vmax.f32 %v1686, %v1736
  %v1787 = vmax.f32 %v1687, %v1737
  %v1788 = vmax.f32 %v1688, %v1738
  %v1789 = vmax.f32 %v1689, %v1739
  %v1790 = vmax.f32 %v1690, %v1740
  %v1791 = vmax.f32 %v1691, %v1741
  %v1792 = vmax.f32 %v1692, %v1742
  %v1793 = vmax.f32 %v1693, %v1743
  %v1794 = vmax.f32 %v1694, %v1744
  %v1795 = vpack.c.bf16 %v1745, %v1745
  %v1796 = vpack.c.bf16 %v1746, %v1746
  %v1797 = vpack.c.bf16 %v1747, %v1747
  %v1798 = vpack.c.bf16 %v1748, %v1748
  %v1799 = vpack.c.bf16 %v1749, %v1749
  %v1800 = vpack.c.bf16 %v1750, %v1750
  %v1801 = vpack.c.bf16 %v1751, %v1751
  %v1802 = vpack.c.bf16 %v1752, %v1752
  %v1803 = vpack.c.bf16 %v1753, %v1753
  %v1804 = vpack.c.bf16 %v1754, %v1754
  %v1805 = vpack.c.bf16 %v1755, %v1755
  %v1806 = vpack.c.bf16 %v1756, %v1756
  %v1807 = vpack.c.bf16 %v1757, %v1757
  %v1808 = vpack.c.bf16 %v1758, %v1758
  %v1809 = vpack.c.bf16 %v1759, %v1759
  %v1810 = vpack.c.bf16 %v1760, %v1760
  %v1811 = vpack.c.bf16 %v1761, %v1761
  %v1812 = vpack.c.bf16 %v1762, %v1762
  %v1813 = vpack.c.bf16 %v1763, %v1763
  %v1814 = vpack.c.bf16 %v1764, %v1764
  %v1815 = vpack.c.bf16 %v1765, %v1765
  %v1816 = vpack.c.bf16 %v1766, %v1766
  %v1817 = vpack.c.bf16 %v1767, %v1767
  %v1818 = vpack.c.bf16 %v1768, %v1768
  %v1819 = vpack.c.bf16 %v1769, %v1769
  %v1820 = vpack.c.bf16 %v1770, %v1770
  %v1821 = vpack.c.bf16 %v1771, %v1771
  %v1822 = vpack.c.bf16 %v1772, %v1772
  %v1823 = vpack.c.bf16 %v1773, %v1773
  %v1824 = vpack.c.bf16 %v1774, %v1774
  %v1825 = vpack.c.bf16 %v1775, %v1775
  %v1826 = vpack.c.bf16 %v1776, %v1776
  %v1827 = vpack.c.bf16 %v1777, %v1777
  %v1828 = vpack.c.bf16 %v1778, %v1778
  %v1829 = vpack.c.bf16 %v1779, %v1779
  %v1830 = vpack.c.bf16 %v1780, %v1780
  %v1831 = vpack.c.bf16 %v1781, %v1781
  %v1832 = vpack.c.bf16 %v1782, %v1782
  %v1833 = vpack.c.bf16 %v1783, %v1783
  %v1834 = vpack.c.bf16 %v1784, %v1784
  %v1835 = vpack.c.bf16 %v1785, %v1785
  %v1836 = vpack.c.bf16 %v1786, %v1786
  %v1837 = vpack.c.bf16 %v1787, %v1787
  %v1838 = vpack.c.bf16 %v1788, %v1788
  %v1839 = vpack.c.bf16 %v1789, %v1789
  %v1840 = vpack.c.bf16 %v1790, %v1790
  %v1841 = vpack.c.bf16 %v1791, %v1791
  %v1842 = vpack.c.bf16 %v1792, %v1792
  %v1843 = vpack.c.bf16 %v1793, %v1793
  %v1844 = vpack.c.bf16 %v1794, %v1794
  %1845 = vst [vmem:[%s4] sm:$0xf] %v1795
  %1846 = vst [vmem:[%s4 + $0x4] sm:$0xf] %v1796
  %1847 = vst [vmem:[%s4 + $0x8] sm:$0xf] %v1797
  %1848 = vst [vmem:[%s4 + $0xc] sm:$0xf] %v1798
  %1849 = vst [vmem:[%s4 + $0x10] sm:$0xf] %v1799
  %1850 = vst [vmem:[%s4 + $0x14] sm:$0xf] %v1800
  %1851 = vst [vmem:[%s4 + $0x18] sm:$0xf] %v1801
  %1852 = vst [vmem:[%s4 + $0x1c] sm:$0xf] %v1802
  %1853 = vst [vmem:[%s4 + $0x20] sm:$0xf] %v1803
  %1854 = vst [vmem:[%s4 + $0x24] sm:$0xf] %v1804
  %1855 = vst [vmem:[%s4 + $0x28] sm:$0xf] %v1805
  %1856 = vst [vmem:[%s4 + $0x2c] sm:$0xf] %v1806
  %1857 = vst [vmem:[%s4 + $0x30] sm:$0xf] %v1807
  %1858 = vst [vmem:[%s4 + $0x34] sm:$0xf] %v1808
  %1859 = vst [vmem:[%s4 + $0x38] sm:$0xf] %v1809
  %1860 = vst [vmem:[%s4 + $0x3c] sm:$0xf] %v1810
  %1861 = vst [vmem:[%s4 + $0x40] sm:$0xf] %v1811
  %1862 = vst [vmem:[%s4 + $0x44] sm:$0xf] %v1812
  %1863 = vst [vmem:[%s4 + $0x48] sm:$0xf] %v1813
  %1864 = vst [vmem:[%s4 + $0x4c] sm:$0xf] %v1814
  %1865 = vst [vmem:[%s4 + $0x50] sm:$0xf] %v1815
  %1866 = vst [vmem:[%s4 + $0x54] sm:$0xf] %v1816
  %1867 = vst [vmem:[%s4 + $0x58] sm:$0xf] %v1817
  %1868 = vst [vmem:[%s4 + $0x5c] sm:$0xf] %v1818
  %1869 = vst [vmem:[%s4 + $0x60] sm:$0xf] %v1819
  %1870 = vst [vmem:[%s4 + $0x64] sm:$0xf] %v1820
  %1871 = vst [vmem:[%s4 + $0x68] sm:$0xf] %v1821
  %1872 = vst [vmem:[%s4 + $0x6c] sm:$0xf] %v1822
  %1873 = vst [vmem:[%s4 + $0x70] sm:$0xf] %v1823
  %1874 = vst [vmem:[%s4 + $0x74] sm:$0xf] %v1824
  %1875 = vst [vmem:[%s4 + $0x78] sm:$0xf] %v1825
  %1876 = vst [vmem:[%s4 + $0x7c] sm:$0xf] %v1826
  %1877 = vst [vmem:[%s4 + $0x80] sm:$0xf] %v1827
  %1878 = vst [vmem:[%s4 + $0x84] sm:$0xf] %v1828
  %1879 = vst [vmem:[%s4 + $0x88] sm:$0xf] %v1829
  %1880 = vst [vmem:[%s4 + $0x8c] sm:$0xf] %v1830
  %1881 = vst [vmem:[%s4 + $0x90] sm:$0xf] %v1831
  %1882 = vst [vmem:[%s4 + $0x94] sm:$0xf] %v1832
  %1883 = vst [vmem:[%s4 + $0x98] sm:$0xf] %v1833
  %1884 = vst [vmem:[%s4 + $0x9c] sm:$0xf] %v1834
  %1885 = vst [vmem:[%s4 + $0xa0] sm:$0xf] %v1835
  %1886 = vst [vmem:[%s4 + $0xa4] sm:$0xf] %v1836
  %1887 = vst [vmem:[%s4 + $0xa8] sm:$0xf] %v1837
  %1888 = vst [vmem:[%s4 + $0xac] sm:$0xf] %v1838
  %1889 = vst [vmem:[%s4 + $0xb0] sm:$0xf] %v1839
  %1890 = vst [vmem:[%s4 + $0xb4] sm:$0xf] %v1840
  %1891 = vst [vmem:[%s4 + $0xb8] sm:$0xf] %v1841
  %1892 = vst [vmem:[%s4 + $0xbc] sm:$0xf] %v1842
  %1893 = vst [vmem:[%s4 + $0xc0] sm:$0xf] %v1843
  %1894 = vst [vmem:[%s4 + $0xc4] sm:$0xf] %v1844
  // Predicated region
  $region18: #{encoder_forward.5} parent=0 // pred_check
    _
  $region19: #{encoder_forward.5} parent=0 // pred_check_branch
    %1896 = sbr.rel (0) target = $region21
  $region20: #{encoder_forward.5} parent=0 // pred_region
    _
  $region21: #{encoder_forward.5} parent=0 // pred_fallthru
    _
  // Predicated region
  $region22: #{encoder_forward.5} parent=0 // pred_check
    _
  $region23: #{encoder_forward.5} parent=0 // pred_check_branch
    %1898 = sbr.rel (0) target = $region25
  $region24: #{encoder_forward.5} parent=0 // pred_region
    _
  $region25: #{encoder_forward.5} parent=0 // pred_fallthru
    _

// kernel: encoder_forward.6
$region0: #{encoder_forward.6}
  #allocation0 [shape = 'u32[]', space=smem, size = 0x4, offset = 0x4, fixed_abs, tag = 'smem constant byte address 0x4 - core index']
  #allocation1 [shape = 'u32[72,128]{1,0:T(1,128)}', space=vmem, size = 0x9000, scoped, tag = 'internal scratch']
  %s0 = inlined_call_operand.vmem [shape: bf16[112,1024], index: 0, kind: input, shape index: {}]
  %s1 = inlined_call_operand.vmem [shape: bf16[1024,128], index: 1, kind: input, shape index: {}]
  %s2 = inlined_call_operand.vmem [shape: f32[1,128], index: 2, kind: input, shape index: {}]
  %s3 = inlined_call_operand.vmem [shape: f32[1,128], index: 3, kind: input, shape index: {}]
  %s4 = inlined_call_operand.vmem [shape: bf16[112,128], index: 4, kind: output, shape index: {}]
  %s5 = sld [smem:[#allocation0]]
  $region26: #{encoder_forward.6} parent=0
    _
  %s7 = ssub.s32 1, %s5
  %s8 = scalar_select 0, %s7, %s5
  // Predicated region
  $region2: #{encoder_forward.6} parent=0 // pred_check
    _
  $region3: #{encoder_forward.6} parent=0 // pred_check_branch
    %10 = sbr.rel (0) target = $region5
  $region4: #{encoder_forward.6} parent=0 // pred_region
    _
  $region5: #{encoder_forward.6} parent=0 // pred_fallthru
    _
  // Predicated region
  $region6: #{encoder_forward.6} parent=0 // pred_check
    _
  $region7: #{encoder_forward.6} parent=0 // pred_check_branch
    %12 = sbr.rel (0) target = $region9
  $region8: #{encoder_forward.6} parent=0 // pred_region
    _
  $region9: #{encoder_forward.6} parent=0 // pred_fallthru
    _
  // Predicated region
  $region10: #{encoder_forward.6} parent=0 // pred_check
    _
  $region11: #{encoder_forward.6} parent=0 // pred_check_branch
    %14 = sbr.rel (0) target = $region13
  $region12: #{encoder_forward.6} parent=0 // pred_region
    _
  $region13: #{encoder_forward.6} parent=0 // pred_fallthru
    _
  // Predicated region
  $region14: #{encoder_forward.6} parent=0 // pred_check
    _
  $region15: #{encoder_forward.6} parent=0 // pred_check_branch
    %16 = sbr.rel (0) target = $region17
  $region16: #{encoder_forward.6} parent=0 // pred_region
    _
  $region17: #{encoder_forward.6} parent=0 // pred_fallthru
    _
  %v17 = vld [vmem:[%s0] sm:$0xff]
  %v18 = vld [vmem:[%s0 + $0x8] sm:$0xff]
  %v19 = vld [vmem:[%s0 + $0x10] sm:$0xff]
  %v20 = vld [vmem:[%s0 + $0x18] sm:$0xff]
  %v21 = vld [vmem:[%s0 + $0x20] sm:$0xff]
  %v22 = vld [vmem:[%s0 + $0x28] sm:$0xff]
  %v23 = vld [vmem:[%s0 + $0x30] sm:$0xff]
  %v24 = vld [vmem:[%s0 + $0x38] sm:$0xff]
  %v25 = vld [vmem:[%s0 + $0x40] sm:$0xff]
  %v26 = vld [vmem:[%s0 + $0x48] sm:$0xff]
  %v27 = vld [vmem:[%s0 + $0x50] sm:$0xff]
  %v28 = vld [vmem:[%s0 + $0x58] sm:$0xff]
  %v29 = vld [vmem:[%s0 + $0x60] sm:$0xff]
  %v30 = vld [vmem:[%s0 + $0x68] sm:$0xff]
  %v31 = vld [vmem:[%s0 + $0x70] sm:$0xff]
  %v32 = vld [vmem:[%s0 + $0x78] sm:$0xff]
  %v33 = vld [vmem:[%s0 + $0x80] sm:$0xff]
  %v34 = vld [vmem:[%s0 + $0x88] sm:$0xff]
  %v35 = vld [vmem:[%s0 + $0x90] sm:$0xff]
  %v36 = vld [vmem:[%s0 + $0x98] sm:$0xff]
  %v37 = vld [vmem:[%s0 + $0xa0] sm:$0xff]
  %v38 = vld [vmem:[%s0 + $0xa8] sm:$0xff]
  %v39 = vld [vmem:[%s0 + $0xb0] sm:$0xff]
  %v40 = vld [vmem:[%s0 + $0xb8] sm:$0xff]
  %v41 = vld [vmem:[%s0 + $0xc0] sm:$0xff]
  %v42 = vld [vmem:[%s0 + $0xc8] sm:$0xff]
  %v43 = vld [vmem:[%s0 + $0xd0] sm:$0xff]
  %v44 = vld [vmem:[%s0 + $0xd8] sm:$0xff]
  %v45 = vld [vmem:[%s0 + $0xe0] sm:$0xff]
  %v46 = vld [vmem:[%s0 + $0xe8] sm:$0xff]
  %v47 = vld [vmem:[%s0 + $0xf0] sm:$0xff]
  %v48 = vld [vmem:[%s0 + $0xf8] sm:$0xff]
  %v49 = vld [vmem:[%s0 + $0x100] sm:$0xff]
  %v50 = vld [vmem:[%s0 + $0x108] sm:$0xff]
  %v51 = vld [vmem:[%s0 + $0x110] sm:$0xff]
  %v52 = vld [vmem:[%s0 + $0x118] sm:$0xff]
  %v53 = vld [vmem:[%s0 + $0x120] sm:$0xff]
  %v54 = vld [vmem:[%s0 + $0x128] sm:$0xff]
  %v55 = vld [vmem:[%s0 + $0x130] sm:$0xff]
  %v56 = vld [vmem:[%s0 + $0x138] sm:$0xff]
  %v57 = vld [vmem:[%s0 + $0x140] sm:$0xff]
  %v58 = vld [vmem:[%s0 + $0x148] sm:$0xff]
  %v59 = vld [vmem:[%s0 + $0x150] sm:$0xff]
  %v60 = vld [vmem:[%s0 + $0x158] sm:$0xff]
  %v61 = vld [vmem:[%s0 + $0x160] sm:$0xff]
  %v62 = vld [vmem:[%s0 + $0x168] sm:$0xff]
  %v63 = vld [vmem:[%s0 + $0x170] sm:$0xff]
  %v64 = vld [vmem:[%s0 + $0x178] sm:$0xff]
  %v65 = vld [vmem:[%s0 + $0x180] sm:$0xff]
  %v66 = vld [vmem:[%s0 + $0x188] sm:$0xff]
  %v67 = vld [vmem:[%s0 + $0x190] sm:$0xff]
  %v68 = vld [vmem:[%s0 + $0x198] sm:$0xff]
  %v69 = vld [vmem:[%s0 + $0x1a0] sm:$0xff]
  %v70 = vld [vmem:[%s0 + $0x1a8] sm:$0xff]
  %v71 = vld [vmem:[%s0 + $0x1b0] sm:$0xff]
  %v72 = vld [vmem:[%s0 + $0x1b8] sm:$0xff]
  %v73 = vld [vmem:[%s1] sm:$0xf]
  %v74 = vld [vmem:[%s1 + $0x4] sm:$0xf]
  %v75 = vld [vmem:[%s1 + $0x8] sm:$0xf]
  %v76 = vld [vmem:[%s1 + $0xc] sm:$0xf]
  %v77 = vld [vmem:[%s1 + $0x10] sm:$0xf]
  %v78 = vld [vmem:[%s1 + $0x14] sm:$0xf]
  %v79 = vld [vmem:[%s1 + $0x18] sm:$0xf]
  %v80 = vld [vmem:[%s1 + $0x1c] sm:$0xf]
  %v81 = vld [vmem:[%s1 + $0x20] sm:$0xf]
  %v82 = vld [vmem:[%s1 + $0x24] sm:$0xf]
  %v83 = vld [vmem:[%s1 + $0x28] sm:$0xf]
  %v84 = vld [vmem:[%s1 + $0x2c] sm:$0xf]
  %v85 = vld [vmem:[%s1 + $0x30] sm:$0xf]
  %v86 = vld [vmem:[%s1 + $0x34] sm:$0xf]
  %v87 = vld [vmem:[%s1 + $0x38] sm:$0xf]
  %v88 = vld [vmem:[%s1 + $0x3c] sm:$0xf]
  %v89 = vld [vmem:[%s1 + $0x40] sm:$0xf]
  %v90 = vld [vmem:[%s1 + $0x44] sm:$0xf]
  %v91 = vld [vmem:[%s1 + $0x48] sm:$0xf]
  %v92 = vld [vmem:[%s1 + $0x4c] sm:$0xf]
  %v93 = vld [vmem:[%s1 + $0x50] sm:$0xf]
  %v94 = vld [vmem:[%s1 + $0x54] sm:$0xf]
  %v95 = vld [vmem:[%s1 + $0x58] sm:$0xf]
  %v96 = vld [vmem:[%s1 + $0x5c] sm:$0xf]
  %v97 = vld [vmem:[%s1 + $0x60] sm:$0xf]
  %v98 = vld [vmem:[%s1 + $0x64] sm:$0xf]
  %v99 = vld [vmem:[%s1 + $0x68] sm:$0xf]
  %v100 = vld [vmem:[%s1 + $0x6c] sm:$0xf]
  %v101 = vld [vmem:[%s1 + $0x70] sm:$0xf]
  %v102 = vld [vmem:[%s1 + $0x74] sm:$0xf]
  %v103 = vld [vmem:[%s1 + $0x78] sm:$0xf]
  %v104 = vld [vmem:[%s1 + $0x7c] sm:$0xf]
  %v105 = vld [vmem:[%s1 + $0x80] sm:$0xf]
  %v106 = vld [vmem:[%s1 + $0x84] sm:$0xf]
  %v107 = vld [vmem:[%s1 + $0x88] sm:$0xf]
  %v108 = vld [vmem:[%s1 + $0x8c] sm:$0xf]
  %v109 = vld [vmem:[%s1 + $0x90] sm:$0xf]
  %v110 = vld [vmem:[%s1 + $0x94] sm:$0xf]
  %v111 = vld [vmem:[%s1 + $0x98] sm:$0xf]
  %v112 = vld [vmem:[%s1 + $0x9c] sm:$0xf]
  %v113 = vld [vmem:[%s1 + $0xa0] sm:$0xf]
  %v114 = vld [vmem:[%s1 + $0xa4] sm:$0xf]
  %v115 = vld [vmem:[%s1 + $0xa8] sm:$0xf]
  %v116 = vld [vmem:[%s1 + $0xac] sm:$0xf]
  %v117 = vld [vmem:[%s1 + $0xb0] sm:$0xf]
  %v118 = vld [vmem:[%s1 + $0xb4] sm:$0xf]
  %v119 = vld [vmem:[%s1 + $0xb8] sm:$0xf]
  %v120 = vld [vmem:[%s1 + $0xbc] sm:$0xf]
  %v121 = vld [vmem:[%s1 + $0xc0] sm:$0xf]
  %v122 = vld [vmem:[%s1 + $0xc4] sm:$0xf]
  %v123 = vld [vmem:[%s1 + $0xc8] sm:$0xf]
  %v124 = vld [vmem:[%s1 + $0xcc] sm:$0xf]
  %v125 = vld [vmem:[%s1 + $0xd0] sm:$0xf]
  %v126 = vld [vmem:[%s1 + $0xd4] sm:$0xf]
  %v127 = vld [vmem:[%s1 + $0xd8] sm:$0xf]
  %v128 = vld [vmem:[%s1 + $0xdc] sm:$0xf]
  %v129 = vld [vmem:[%s1 + $0xe0] sm:$0xf]
  %v130 = vld [vmem:[%s1 + $0xe4] sm:$0xf]
  %v131 = vld [vmem:[%s1 + $0xe8] sm:$0xf]
  %v132 = vld [vmem:[%s1 + $0xec] sm:$0xf]
  %v133 = vld [vmem:[%s1 + $0xf0] sm:$0xf]
  %v134 = vld [vmem:[%s1 + $0xf4] sm:$0xf]
  %v135 = vld [vmem:[%s1 + $0xf8] sm:$0xf]
  %v136 = vld [vmem:[%s1 + $0xfc] sm:$0xf]
  %v137 = vld [vmem:[%s1 + $0x100] sm:$0xf]
  %v138 = vld [vmem:[%s1 + $0x104] sm:$0xf]
  %v139 = vld [vmem:[%s1 + $0x108] sm:$0xf]
  %v140 = vld [vmem:[%s1 + $0x10c] sm:$0xf]
  %v141 = vld [vmem:[%s1 + $0x110] sm:$0xf]
  %v142 = vld [vmem:[%s1 + $0x114] sm:$0xf]
  %v143 = vld [vmem:[%s1 + $0x118] sm:$0xf]
  %v144 = vld [vmem:[%s1 + $0x11c] sm:$0xf]
  %v145 = vld [vmem:[%s1 + $0x120] sm:$0xf]
  %v146 = vld [vmem:[%s1 + $0x124] sm:$0xf]
  %v147 = vld [vmem:[%s1 + $0x128] sm:$0xf]
  %v148 = vld [vmem:[%s1 + $0x12c] sm:$0xf]
  %v149 = vld [vmem:[%s1 + $0x130] sm:$0xf]
  %v150 = vld [vmem:[%s1 + $0x134] sm:$0xf]
  %v151 = vld [vmem:[%s1 + $0x138] sm:$0xf]
  %v152 = vld [vmem:[%s1 + $0x13c] sm:$0xf]
  %v153 = vld [vmem:[%s1 + $0x140] sm:$0xf]
  %v154 = vld [vmem:[%s1 + $0x144] sm:$0xf]
  %v155 = vld [vmem:[%s1 + $0x148] sm:$0xf]
  %v156 = vld [vmem:[%s1 + $0x14c] sm:$0xf]
  %v157 = vld [vmem:[%s1 + $0x150] sm:$0xf]
  %v158 = vld [vmem:[%s1 + $0x154] sm:$0xf]
  %v159 = vld [vmem:[%s1 + $0x158] sm:$0xf]
  %v160 = vld [vmem:[%s1 + $0x15c] sm:$0xf]
  %v161 = vld [vmem:[%s1 + $0x160] sm:$0xf]
  %v162 = vld [vmem:[%s1 + $0x164] sm:$0xf]
  %v163 = vld [vmem:[%s1 + $0x168] sm:$0xf]
  %v164 = vld [vmem:[%s1 + $0x16c] sm:$0xf]
  %v165 = vld [vmem:[%s1 + $0x170] sm:$0xf]
  %v166 = vld [vmem:[%s1 + $0x174] sm:$0xf]
  %v167 = vld [vmem:[%s1 + $0x178] sm:$0xf]
  %v168 = vld [vmem:[%s1 + $0x17c] sm:$0xf]
  %v169 = vld [vmem:[%s1 + $0x180] sm:$0xf]
  %v170 = vld [vmem:[%s1 + $0x184] sm:$0xf]
  %v171 = vld [vmem:[%s1 + $0x188] sm:$0xf]
  %v172 = vld [vmem:[%s1 + $0x18c] sm:$0xf]
  %v173 = vld [vmem:[%s1 + $0x190] sm:$0xf]
  %v174 = vld [vmem:[%s1 + $0x194] sm:$0xf]
  %v175 = vld [vmem:[%s1 + $0x198] sm:$0xf]
  %v176 = vld [vmem:[%s1 + $0x19c] sm:$0xf]
  %v177 = vld [vmem:[%s1 + $0x1a0] sm:$0xf]
  %v178 = vld [vmem:[%s1 + $0x1a4] sm:$0xf]
  %v179 = vld [vmem:[%s1 + $0x1a8] sm:$0xf]
  %v180 = vld [vmem:[%s1 + $0x1ac] sm:$0xf]
  %v181 = vld [vmem:[%s1 + $0x1b0] sm:$0xf]
  %v182 = vld [vmem:[%s1 + $0x1b4] sm:$0xf]
  %v183 = vld [vmem:[%s1 + $0x1b8] sm:$0xf]
  %v184 = vld [vmem:[%s1 + $0x1bc] sm:$0xf]
  %v185 = vld [vmem:[%s1 + $0x1c0] sm:$0xf]
  %v186 = vld [vmem:[%s1 + $0x1c4] sm:$0xf]
  %v187 = vld [vmem:[%s1 + $0x1c8] sm:$0xf]
  %v188 = vld [vmem:[%s1 + $0x1cc] sm:$0xf]
  %v189 = vld [vmem:[%s1 + $0x1d0] sm:$0xf]
  %v190 = vld [vmem:[%s1 + $0x1d4] sm:$0xf]
  %v191 = vld [vmem:[%s1 + $0x1d8] sm:$0xf]
  %v192 = vld [vmem:[%s1 + $0x1dc] sm:$0xf]
  %v193 = vld [vmem:[%s1 + $0x1e0] sm:$0xf]
  %v194 = vld [vmem:[%s1 + $0x1e4] sm:$0xf]
  %v195 = vld [vmem:[%s1 + $0x1e8] sm:$0xf]
  %v196 = vld [vmem:[%s1 + $0x1ec] sm:$0xf]
  %v197 = vld [vmem:[%s1 + $0x1f0] sm:$0xf]
  %v198 = vld [vmem:[%s1 + $0x1f4] sm:$0xf]
  %v199 = vld [vmem:[%s1 + $0x1f8] sm:$0xf]
  %v200 = vld [vmem:[%s1 + $0x1fc] sm:$0xf]
  %v257 = vunpack.c.l.b16 %v17
  %v258 = vunpack.c.h.b16 %v17
  %v259 = vunpack.c.l.b16 %v18
  %v260 = vunpack.c.h.b16 %v18
  %v261 = vunpack.c.l.b16 %v19
  %v262 = vunpack.c.h.b16 %v19
  %v263 = vunpack.c.l.b16 %v20
  %v264 = vunpack.c.h.b16 %v20
  %v265 = vunpack.c.l.b16 %v21
  %v266 = vunpack.c.h.b16 %v21
  %v267 = vunpack.c.l.b16 %v22
  %v268 = vunpack.c.h.b16 %v22
  %v269 = vunpack.c.l.b16 %v23
  %v270 = vunpack.c.h.b16 %v23
  %v271 = vunpack.c.l.b16 %v24
  %v272 = vunpack.c.h.b16 %v24
  %v273 = vunpack.c.l.b16 %v25
  %v274 = vunpack.c.h.b16 %v25
  %v275 = vunpack.c.l.b16 %v26
  %v276 = vunpack.c.h.b16 %v26
  %v277 = vunpack.c.l.b16 %v27
  %v278 = vunpack.c.h.b16 %v27
  %v279 = vunpack.c.l.b16 %v28
  %v280 = vunpack.c.h.b16 %v28
  %v281 = vunpack.c.l.b16 %v29
  %v282 = vunpack.c.h.b16 %v29
  %v283 = vunpack.c.l.b16 %v30
  %v284 = vunpack.c.h.b16 %v30
  %v285 = vunpack.c.l.b16 %v31
  %v286 = vunpack.c.h.b16 %v31
  %v287 = vunpack.c.l.b16 %v32
  %v288 = vunpack.c.h.b16 %v32
  %v289 = vunpack.c.l.b16 %v33
  %v290 = vunpack.c.h.b16 %v33
  %v291 = vunpack.c.l.b16 %v34
  %v292 = vunpack.c.h.b16 %v34
  %v293 = vunpack.c.l.b16 %v35
  %v294 = vunpack.c.h.b16 %v35
  %v295 = vunpack.c.l.b16 %v36
  %v296 = vunpack.c.h.b16 %v36
  %v297 = vunpack.c.l.b16 %v37
  %v298 = vunpack.c.h.b16 %v37
  %v299 = vunpack.c.l.b16 %v38
  %v300 = vunpack.c.h.b16 %v38
  %v301 = vunpack.c.l.b16 %v39
  %v302 = vunpack.c.h.b16 %v39
  %v303 = vunpack.c.l.b16 %v40
  %v304 = vunpack.c.h.b16 %v40
  %v305 = vunpack.c.l.b16 %v41
  %v306 = vunpack.c.h.b16 %v41
  %v307 = vunpack.c.l.b16 %v42
  %v308 = vunpack.c.h.b16 %v42
  %v309 = vunpack.c.l.b16 %v43
  %v310 = vunpack.c.h.b16 %v43
  %v311 = vunpack.c.l.b16 %v44
  %v312 = vunpack.c.h.b16 %v44
  %v313 = vunpack.c.l.b16 %v45
  %v314 = vunpack.c.h.b16 %v45
  %v315 = vunpack.c.l.b16 %v46
  %v316 = vunpack.c.h.b16 %v46
  %v317 = vunpack.c.l.b16 %v47
  %v318 = vunpack.c.h.b16 %v47
  %v319 = vunpack.c.l.b16 %v48
  %v320 = vunpack.c.h.b16 %v48
  %v321 = vunpack.c.l.b16 %v49
  %v322 = vunpack.c.h.b16 %v49
  %v323 = vunpack.c.l.b16 %v50
  %v324 = vunpack.c.h.b16 %v50
  %v325 = vunpack.c.l.b16 %v51
  %v326 = vunpack.c.h.b16 %v51
  %v327 = vunpack.c.l.b16 %v52
  %v328 = vunpack.c.h.b16 %v52
  %v329 = vunpack.c.l.b16 %v53
  %v330 = vunpack.c.h.b16 %v53
  %v331 = vunpack.c.l.b16 %v54
  %v332 = vunpack.c.h.b16 %v54
  %v333 = vunpack.c.l.b16 %v55
  %v334 = vunpack.c.h.b16 %v55
  %v335 = vunpack.c.l.b16 %v56
  %v336 = vunpack.c.h.b16 %v56
  %v337 = vunpack.c.l.b16 %v57
  %v338 = vunpack.c.h.b16 %v57
  %v339 = vunpack.c.l.b16 %v58
  %v340 = vunpack.c.h.b16 %v58
  %v341 = vunpack.c.l.b16 %v59
  %v342 = vunpack.c.h.b16 %v59
  %v343 = vunpack.c.l.b16 %v60
  %v344 = vunpack.c.h.b16 %v60
  %v345 = vunpack.c.l.b16 %v61
  %v346 = vunpack.c.h.b16 %v61
  %v347 = vunpack.c.l.b16 %v62
  %v348 = vunpack.c.h.b16 %v62
  %v349 = vunpack.c.l.b16 %v63
  %v350 = vunpack.c.h.b16 %v63
  %v351 = vunpack.c.l.b16 %v64
  %v352 = vunpack.c.h.b16 %v64
  %v353 = vunpack.c.l.b16 %v65
  %v354 = vunpack.c.h.b16 %v65
  %v355 = vunpack.c.l.b16 %v66
  %v356 = vunpack.c.h.b16 %v66
  %v357 = vunpack.c.l.b16 %v67
  %v358 = vunpack.c.h.b16 %v67
  %v359 = vunpack.c.l.b16 %v68
  %v360 = vunpack.c.h.b16 %v68
  %v361 = vunpack.c.l.b16 %v69
  %v362 = vunpack.c.h.b16 %v69
  %v363 = vunpack.c.l.b16 %v70
  %v364 = vunpack.c.h.b16 %v70
  %v365 = vunpack.c.l.b16 %v71
  %v366 = vunpack.c.h.b16 %v71
  %v367 = vunpack.c.l.b16 %v72
  %v368 = vunpack.c.h.b16 %v72
  %v369 = vpack.c.b16 %v265, %v257
  %v370 = vpack.c.b16 %v266, %v258
  %v371 = vpack.c.b16 %v267, %v259
  %v372 = vpack.c.b16 %v268, %v260
  %v373 = vpack.c.b16 %v269, %v261
  %v374 = vpack.c.b16 %v270, %v262
  %v375 = vpack.c.b16 %v271, %v263
  %v376 = vpack.c.b16 %v272, %v264
  %v377 = vpack.c.b16 %v281, %v273
  %v378 = vpack.c.b16 %v282, %v274
  %v379 = vpack.c.b16 %v283, %v275
  %v380 = vpack.c.b16 %v284, %v276
  %v381 = vpack.c.b16 %v285, %v277
  %v382 = vpack.c.b16 %v286, %v278
  %v383 = vpack.c.b16 %v287, %v279
  %v384 = vpack.c.b16 %v288, %v280
  %v385 = vpack.c.b16 %v297, %v289
  %v386 = vpack.c.b16 %v298, %v290
  %v387 = vpack.c.b16 %v299, %v291
  %v388 = vpack.c.b16 %v300, %v292
  %v389 = vpack.c.b16 %v301, %v293
  %v390 = vpack.c.b16 %v302, %v294
  %v391 = vpack.c.b16 %v303, %v295
  %v392 = vpack.c.b16 %v304, %v296
  %v393 = vpack.c.b16 %v313, %v305
  %v394 = vpack.c.b16 %v314, %v306
  %v395 = vpack.c.b16 %v315, %v307
  %v396 = vpack.c.b16 %v316, %v308
  %v397 = vpack.c.b16 %v317, %v309
  %v398 = vpack.c.b16 %v318, %v310
  %v399 = vpack.c.b16 %v319, %v311
  %v400 = vpack.c.b16 %v320, %v312
  %v401 = vpack.c.b16 %v329, %v321
  %v402 = vpack.c.b16 %v330, %v322
  %v403 = vpack.c.b16 %v331, %v323
  %v404 = vpack.c.b16 %v332, %v324
  %v405 = vpack.c.b16 %v333, %v325
  %v406 = vpack.c.b16 %v334, %v326
  %v407 = vpack.c.b16 %v335, %v327
  %v408 = vpack.c.b16 %v336, %v328
  %v409 = vpack.c.b16 %v345, %v337
  %v410 = vpack.c.b16 %v346, %v338
  %v411 = vpack.c.b16 %v347, %v339
  %v412 = vpack.c.b16 %v348, %v340
  %v413 = vpack.c.b16 %v349, %v341
  %v414 = vpack.c.b16 %v350, %v342
  %v415 = vpack.c.b16 %v351, %v343
  %v416 = vpack.c.b16 %v352, %v344
  %v417 = vpack.c.b16 %v361, %v353
  %v418 = vpack.c.b16 %v362, %v354
  %v419 = vpack.c.b16 %v363, %v355
  %v420 = vpack.c.b16 %v364, %v356
  %v421 = vpack.c.b16 %v365, %v357
  %v422 = vpack.c.b16 %v366, %v358
  %v423 = vpack.c.b16 %v367, %v359
  %v424 = vpack.c.b16 %v368, %v360
  %v609 = vunpack.c.l.b16 %v73
  %v610 = vunpack.c.l.b16 %v74
  %v611 = vunpack.c.l.b16 %v75
  %v612 = vunpack.c.l.b16 %v76
  %v613 = vunpack.c.l.b16 %v77
  %v614 = vunpack.c.l.b16 %v78
  %v615 = vunpack.c.l.b16 %v79
  %v616 = vunpack.c.l.b16 %v80
  %v617 = vunpack.c.l.b16 %v81
  %v618 = vunpack.c.l.b16 %v82
  %v619 = vunpack.c.l.b16 %v83
  %v620 = vunpack.c.l.b16 %v84
  %v621 = vunpack.c.l.b16 %v85
  %v622 = vunpack.c.l.b16 %v86
  %v623 = vunpack.c.l.b16 %v87
  %v624 = vunpack.c.l.b16 %v88
  %v625 = vunpack.c.l.b16 %v89
  %v626 = vunpack.c.l.b16 %v90
  %v627 = vunpack.c.l.b16 %v91
  %v628 = vunpack.c.l.b16 %v92
  %v629 = vunpack.c.l.b16 %v93
  %v630 = vunpack.c.l.b16 %v94
  %v631 = vunpack.c.l.b16 %v95
  %v632 = vunpack.c.l.b16 %v96
  %v633 = vunpack.c.l.b16 %v97
  %v634 = vunpack.c.l.b16 %v98
  %v635 = vunpack.c.l.b16 %v99
  %v636 = vunpack.c.l.b16 %v100
  %v637 = vunpack.c.l.b16 %v101
  %v638 = vunpack.c.l.b16 %v102
  %v639 = vunpack.c.l.b16 %v103
  %v640 = vunpack.c.l.b16 %v104
  %v641 = vunpack.c.l.b16 %v105
  %v642 = vunpack.c.l.b16 %v106
  %v643 = vunpack.c.l.b16 %v107
  %v644 = vunpack.c.l.b16 %v108
  %v645 = vunpack.c.l.b16 %v109
  %v646 = vunpack.c.l.b16 %v110
  %v647 = vunpack.c.l.b16 %v111
  %v648 = vunpack.c.l.b16 %v112
  %v649 = vunpack.c.l.b16 %v113
  %v650 = vunpack.c.l.b16 %v114
  %v651 = vunpack.c.l.b16 %v115
  %v652 = vunpack.c.l.b16 %v116
  %v653 = vunpack.c.l.b16 %v117
  %v654 = vunpack.c.l.b16 %v118
  %v655 = vunpack.c.l.b16 %v119
  %v656 = vunpack.c.l.b16 %v120
  %v657 = vunpack.c.l.b16 %v121
  %v658 = vunpack.c.l.b16 %v122
  %v659 = vunpack.c.l.b16 %v123
  %v660 = vunpack.c.l.b16 %v124
  %v661 = vunpack.c.l.b16 %v125
  %v662 = vunpack.c.l.b16 %v126
  %v663 = vunpack.c.l.b16 %v127
  %v664 = vunpack.c.l.b16 %v128
  %v665 = vunpack.c.l.b16 %v129
  %v666 = vunpack.c.l.b16 %v130
  %v667 = vunpack.c.l.b16 %v131
  %v668 = vunpack.c.l.b16 %v132
  %v669 = vunpack.c.l.b16 %v133
  %v670 = vunpack.c.l.b16 %v134
  %v671 = vunpack.c.l.b16 %v135
  %v672 = vunpack.c.l.b16 %v136
  %v673 = vunpack.c.l.b16 %v137
  %v674 = vunpack.c.l.b16 %v138
  %v675 = vunpack.c.l.b16 %v139
  %v676 = vunpack.c.l.b16 %v140
  %v677 = vunpack.c.l.b16 %v141
  %v678 = vunpack.c.l.b16 %v142
  %v679 = vunpack.c.l.b16 %v143
  %v680 = vunpack.c.l.b16 %v144
  %v681 = vunpack.c.l.b16 %v145
  %v682 = vunpack.c.l.b16 %v146
  %v683 = vunpack.c.l.b16 %v147
  %v684 = vunpack.c.l.b16 %v148
  %v685 = vunpack.c.l.b16 %v149
  %v686 = vunpack.c.l.b16 %v150
  %v687 = vunpack.c.l.b16 %v151
  %v688 = vunpack.c.l.b16 %v152
  %v689 = vunpack.c.l.b16 %v153
  %v690 = vunpack.c.l.b16 %v154
  %v691 = vunpack.c.l.b16 %v155
  %v692 = vunpack.c.l.b16 %v156
  %v693 = vunpack.c.l.b16 %v157
  %v694 = vunpack.c.l.b16 %v158
  %v695 = vunpack.c.l.b16 %v159
  %v696 = vunpack.c.l.b16 %v160
  %v697 = vunpack.c.l.b16 %v161
  %v698 = vunpack.c.l.b16 %v162
  %v699 = vunpack.c.l.b16 %v163
  %v700 = vunpack.c.l.b16 %v164
  %v701 = vunpack.c.l.b16 %v165
  %v702 = vunpack.c.l.b16 %v166
  %v703 = vunpack.c.l.b16 %v167
  %v704 = vunpack.c.l.b16 %v168
  %v705 = vunpack.c.l.b16 %v169
  %v706 = vunpack.c.l.b16 %v170
  %v707 = vunpack.c.l.b16 %v171
  %v708 = vunpack.c.l.b16 %v172
  %v709 = vunpack.c.l.b16 %v173
  %v710 = vunpack.c.l.b16 %v174
  %v711 = vunpack.c.l.b16 %v175
  %v712 = vunpack.c.l.b16 %v176
  %v713 = vunpack.c.l.b16 %v177
  %v714 = vunpack.c.l.b16 %v178
  %v715 = vunpack.c.l.b16 %v179
  %v716 = vunpack.c.l.b16 %v180
  %v717 = vunpack.c.l.b16 %v181
  %v718 = vunpack.c.l.b16 %v182
  %v719 = vunpack.c.l.b16 %v183
  %v720 = vunpack.c.l.b16 %v184
  %v721 = vunpack.c.l.b16 %v185
  %v722 = vunpack.c.l.b16 %v186
  %v723 = vunpack.c.l.b16 %v187
  %v724 = vunpack.c.l.b16 %v188
  %v725 = vunpack.c.l.b16 %v189
  %v726 = vunpack.c.l.b16 %v190
  %v727 = vunpack.c.l.b16 %v191
  %v728 = vunpack.c.l.b16 %v192
  %v729 = vunpack.c.l.b16 %v193
  %v730 = vunpack.c.l.b16 %v194
  %v731 = vunpack.c.l.b16 %v195
  %v732 = vunpack.c.l.b16 %v196
  %v733 = vunpack.c.l.b16 %v197
  %v734 = vunpack.c.l.b16 %v198
  %v735 = vunpack.c.l.b16 %v199
  %v736 = vunpack.c.l.b16 %v200
  %v737 = vpack.c.b16 %v610, %v609
  %v738 = vpack.c.b16 %v612, %v611
  %v739 = vpack.c.b16 %v614, %v613
  %v740 = vpack.c.b16 %v616, %v615
  %v741 = vpack.c.b16 %v618, %v617
  %v742 = vpack.c.b16 %v620, %v619
  %v743 = vpack.c.b16 %v622, %v621
  %v744 = vpack.c.b16 %v624, %v623
  %v745 = vpack.c.b16 %v626, %v625
  %v746 = vpack.c.b16 %v628, %v627
  %v747 = vpack.c.b16 %v630, %v629
  %v748 = vpack.c.b16 %v632, %v631
  %v749 = vpack.c.b16 %v634, %v633
  %v750 = vpack.c.b16 %v636, %v635
  %v751 = vpack.c.b16 %v638, %v637
  %v752 = vpack.c.b16 %v640, %v639
  %v753 = vpack.c.b16 %v642, %v641
  %v754 = vpack.c.b16 %v644, %v643
  %v755 = vpack.c.b16 %v646, %v645
  %v756 = vpack.c.b16 %v648, %v647
  %v757 = vpack.c.b16 %v650, %v649
  %v758 = vpack.c.b16 %v652, %v651
  %v759 = vpack.c.b16 %v654, %v653
  %v760 = vpack.c.b16 %v656, %v655
  %v761 = vpack.c.b16 %v658, %v657
  %v762 = vpack.c.b16 %v660, %v659
  %v763 = vpack.c.b16 %v662, %v661
  %v764 = vpack.c.b16 %v664, %v663
  %v765 = vpack.c.b16 %v666, %v665
  %v766 = vpack.c.b16 %v668, %v667
  %v767 = vpack.c.b16 %v670, %v669
  %v768 = vpack.c.b16 %v672, %v671
  %v769 = vpack.c.b16 %v674, %v673
  %v770 = vpack.c.b16 %v676, %v675
  %v771 = vpack.c.b16 %v678, %v677
  %v772 = vpack.c.b16 %v680, %v679
  %v773 = vpack.c.b16 %v682, %v681
  %v774 = vpack.c.b16 %v684, %v683
  %v775 = vpack.c.b16 %v686, %v685
  %v776 = vpack.c.b16 %v688, %v687
  %v777 = vpack.c.b16 %v690, %v689
  %v778 = vpack.c.b16 %v692, %v691
  %v779 = vpack.c.b16 %v694, %v693
  %v780 = vpack.c.b16 %v696, %v695
  %v781 = vpack.c.b16 %v698, %v697
  %v782 = vpack.c.b16 %v700, %v699
  %v783 = vpack.c.b16 %v702, %v701
  %v784 = vpack.c.b16 %v704, %v703
  %v785 = vpack.c.b16 %v706, %v705
  %v786 = vpack.c.b16 %v708, %v707
  %v787 = vpack.c.b16 %v710, %v709
  %v788 = vpack.c.b16 %v712, %v711
  %v789 = vpack.c.b16 %v714, %v713
  %v790 = vpack.c.b16 %v716, %v715
  %v791 = vpack.c.b16 %v718, %v717
  %v792 = vpack.c.b16 %v720, %v719
  %v793 = vpack.c.b16 %v722, %v721
  %v794 = vpack.c.b16 %v724, %v723
  %v795 = vpack.c.b16 %v726, %v725
  %v796 = vpack.c.b16 %v728, %v727
  %v797 = vpack.c.b16 %v730, %v729
  %v798 = vpack.c.b16 %v732, %v731
  %v799 = vpack.c.b16 %v734, %v733
  %v800 = vpack.c.b16 %v736, %v735
  %865 = vmatpush.bf16.msra.mxu0 %v744
  %866 = vmatpush.bf16.msra.mxu0 %v743
  %867 = vmatpush.bf16.msra.mxu0 %v742
  %868 = vmatpush.bf16.msra.mxu0 %v741
  %869 = vmatpush.bf16.msra.mxu0 %v740
  %870 = vmatpush.bf16.msra.mxu0 %v739
  %871 = vmatpush.bf16.msra.mxu0 %v738
  %872 = vmatpush.bf16.msra.mxu0 %v737
  %873 = vmatmul.bf16.gmra.mxu0 %v369
  %v874 = vpop.f32.mrf.mxu0
  %v875 = vadd.f32 0.0, %v874
  %v876 = vpop.f32.mrf.mxu0
  %v877 = vadd.f32 0.0, %v876
  %878 = vmatmul.bf16.gmra.mxu0 %v377
  %v879 = vpop.f32.mrf.mxu0
  %v880 = vadd.f32 0.0, %v879
  %v881 = vpop.f32.mrf.mxu0
  %v882 = vadd.f32 0.0, %v881
  %883 = vmatmul.bf16.gmra.mxu0 %v385
  %v884 = vpop.f32.mrf.mxu0
  %v885 = vadd.f32 0.0, %v884
  %v886 = vpop.f32.mrf.mxu0
  %v887 = vadd.f32 0.0, %v886
  %888 = vmatmul.bf16.gmra.mxu0 %v393
  %v889 = vpop.f32.mrf.mxu0
  %v890 = vadd.f32 0.0, %v889
  %v891 = vpop.f32.mrf.mxu0
  %v892 = vadd.f32 0.0, %v891
  %893 = vmatmul.bf16.gmra.mxu0 %v401
  %v894 = vpop.f32.mrf.mxu0
  %v895 = vadd.f32 0.0, %v894
  %v896 = vpop.f32.mrf.mxu0
  %v897 = vadd.f32 0.0, %v896
  %898 = vmatmul.bf16.gmra.mxu0 %v409
  %v899 = vpop.f32.mrf.mxu0
  %v900 = vadd.f32 0.0, %v899
  %v901 = vpop.f32.mrf.mxu0
  %v902 = vadd.f32 0.0, %v901
  %903 = vmatmul.bf16.gmra.mxu0 %v417
  %v904 = vpop.f32.mrf.mxu0
  %v905 = vadd.f32 0.0, %v904
  %v906 = vpop.f32.mrf.mxu0
  %v907 = vadd.f32 0.0, %v906
  %908 = vdwg.mxu0
  %909 = vmatpush.bf16.msra.mxu0 %v752
  %910 = vmatpush.bf16.msra.mxu0 %v751
  %911 = vmatpush.bf16.msra.mxu0 %v750
  %912 = vmatpush.bf16.msra.mxu0 %v749
  %913 = vmatpush.bf16.msra.mxu0 %v748
  %914 = vmatpush.bf16.msra.mxu0 %v747
  %915 = vmatpush.bf16.msra.mxu0 %v746
  %916 = vmatpush.bf16.msra.mxu0 %v745
  %917 = vmatmul.bf16.gmra.mxu0 %v370
  %v918 = vpop.f32.mrf.mxu0
  %v919 = vadd.f32 %v875, %v918
  %v920 = vpop.f32.mrf.mxu0
  %v921 = vadd.f32 %v877, %v920
  %922 = vmatmul.bf16.gmra.mxu0 %v378
  %v923 = vpop.f32.mrf.mxu0
  %v924 = vadd.f32 %v880, %v923
  %v925 = vpop.f32.mrf.mxu0
  %v926 = vadd.f32 %v882, %v925
  %927 = vmatmul.bf16.gmra.mxu0 %v386
  %v928 = vpop.f32.mrf.mxu0
  %v929 = vadd.f32 %v885, %v928
  %v930 = vpop.f32.mrf.mxu0
  %v931 = vadd.f32 %v887, %v930
  %932 = vmatmul.bf16.gmra.mxu0 %v394
  %v933 = vpop.f32.mrf.mxu0
  %v934 = vadd.f32 %v890, %v933
  %v935 = vpop.f32.mrf.mxu0
  %v936 = vadd.f32 %v892, %v935
  %937 = vmatmul.bf16.gmra.mxu0 %v402
  %v938 = vpop.f32.mrf.mxu0
  %v939 = vadd.f32 %v895, %v938
  %v940 = vpop.f32.mrf.mxu0
  %v941 = vadd.f32 %v897, %v940
  %942 = vmatmul.bf16.gmra.mxu0 %v410
  %v943 = vpop.f32.mrf.mxu0
  %v944 = vadd.f32 %v900, %v943
  %v945 = vpop.f32.mrf.mxu0
  %v946 = vadd.f32 %v902, %v945
  %947 = vmatmul.bf16.gmra.mxu0 %v418
  %v948 = vpop.f32.mrf.mxu0
  %v949 = vadd.f32 %v905, %v948
  %v950 = vpop.f32.mrf.mxu0
  %v951 = vadd.f32 %v907, %v950
  %952 = vdwg.mxu0
  %953 = vmatpush.bf16.msra.mxu0 %v760
  %954 = vmatpush.bf16.msra.mxu0 %v759
  %955 = vmatpush.bf16.msra.mxu0 %v758
  %956 = vmatpush.bf16.msra.mxu0 %v757
  %957 = vmatpush.bf16.msra.mxu0 %v756
  %958 = vmatpush.bf16.msra.mxu0 %v755
  %959 = vmatpush.bf16.msra.mxu0 %v754
  %960 = vmatpush.bf16.msra.mxu0 %v753
  %961 = vmatmul.bf16.gmra.mxu0 %v371
  %v962 = vpop.f32.mrf.mxu0
  %v963 = vadd.f32 %v919, %v962
  %v964 = vpop.f32.mrf.mxu0
  %v965 = vadd.f32 %v921, %v964
  %966 = vmatmul.bf16.gmra.mxu0 %v379
  %v967 = vpop.f32.mrf.mxu0
  %v968 = vadd.f32 %v924, %v967
  %v969 = vpop.f32.mrf.mxu0
  %v970 = vadd.f32 %v926, %v969
  %971 = vmatmul.bf16.gmra.mxu0 %v387
  %v972 = vpop.f32.mrf.mxu0
  %v973 = vadd.f32 %v929, %v972
  %v974 = vpop.f32.mrf.mxu0
  %v975 = vadd.f32 %v931, %v974
  %976 = vmatmul.bf16.gmra.mxu0 %v395
  %v977 = vpop.f32.mrf.mxu0
  %v978 = vadd.f32 %v934, %v977
  %v979 = vpop.f32.mrf.mxu0
  %v980 = vadd.f32 %v936, %v979
  %981 = vmatmul.bf16.gmra.mxu0 %v403
  %v982 = vpop.f32.mrf.mxu0
  %v983 = vadd.f32 %v939, %v982
  %v984 = vpop.f32.mrf.mxu0
  %v985 = vadd.f32 %v941, %v984
  %986 = vmatmul.bf16.gmra.mxu0 %v411
  %v987 = vpop.f32.mrf.mxu0
  %v988 = vadd.f32 %v944, %v987
  %v989 = vpop.f32.mrf.mxu0
  %v990 = vadd.f32 %v946, %v989
  %991 = vmatmul.bf16.gmra.mxu0 %v419
  %v992 = vpop.f32.mrf.mxu0
  %v993 = vadd.f32 %v949, %v992
  %v994 = vpop.f32.mrf.mxu0
  %v995 = vadd.f32 %v951, %v994
  %996 = vdwg.mxu0
  %997 = vmatpush.bf16.msra.mxu0 %v768
  %998 = vmatpush.bf16.msra.mxu0 %v767
  %999 = vmatpush.bf16.msra.mxu0 %v766
  %1000 = vmatpush.bf16.msra.mxu0 %v765
  %1001 = vmatpush.bf16.msra.mxu0 %v764
  %1002 = vmatpush.bf16.msra.mxu0 %v763
  %1003 = vmatpush.bf16.msra.mxu0 %v762
  %1004 = vmatpush.bf16.msra.mxu0 %v761
  %1005 = vmatmul.bf16.gmra.mxu0 %v372
  %v1006 = vpop.f32.mrf.mxu0
  %v1007 = vadd.f32 %v963, %v1006
  %v1008 = vpop.f32.mrf.mxu0
  %v1009 = vadd.f32 %v965, %v1008
  %1010 = vmatmul.bf16.gmra.mxu0 %v380
  %v1011 = vpop.f32.mrf.mxu0
  %v1012 = vadd.f32 %v968, %v1011
  %v1013 = vpop.f32.mrf.mxu0
  %v1014 = vadd.f32 %v970, %v1013
  %1015 = vmatmul.bf16.gmra.mxu0 %v388
  %v1016 = vpop.f32.mrf.mxu0
  %v1017 = vadd.f32 %v973, %v1016
  %v1018 = vpop.f32.mrf.mxu0
  %v1019 = vadd.f32 %v975, %v1018
  %1020 = vmatmul.bf16.gmra.mxu0 %v396
  %v1021 = vpop.f32.mrf.mxu0
  %v1022 = vadd.f32 %v978, %v1021
  %v1023 = vpop.f32.mrf.mxu0
  %v1024 = vadd.f32 %v980, %v1023
  %1025 = vmatmul.bf16.gmra.mxu0 %v404
  %v1026 = vpop.f32.mrf.mxu0
  %v1027 = vadd.f32 %v983, %v1026
  %v1028 = vpop.f32.mrf.mxu0
  %v1029 = vadd.f32 %v985, %v1028
  %1030 = vmatmul.bf16.gmra.mxu0 %v412
  %v1031 = vpop.f32.mrf.mxu0
  %v1032 = vadd.f32 %v988, %v1031
  %v1033 = vpop.f32.mrf.mxu0
  %v1034 = vadd.f32 %v990, %v1033
  %1035 = vmatmul.bf16.gmra.mxu0 %v420
  %v1036 = vpop.f32.mrf.mxu0
  %v1037 = vadd.f32 %v993, %v1036
  %v1038 = vpop.f32.mrf.mxu0
  %v1039 = vadd.f32 %v995, %v1038
  %1040 = vdwg.mxu0
  %1041 = vmatpush.bf16.msra.mxu0 %v776
  %1042 = vmatpush.bf16.msra.mxu0 %v775
  %1043 = vmatpush.bf16.msra.mxu0 %v774
  %1044 = vmatpush.bf16.msra.mxu0 %v773
  %1045 = vmatpush.bf16.msra.mxu0 %v772
  %1046 = vmatpush.bf16.msra.mxu0 %v771
  %1047 = vmatpush.bf16.msra.mxu0 %v770
  %1048 = vmatpush.bf16.msra.mxu0 %v769
  %1049 = vmatmul.bf16.gmra.mxu0 %v373
  %v1050 = vpop.f32.mrf.mxu0
  %v1051 = vadd.f32 %v1007, %v1050
  %v1052 = vpop.f32.mrf.mxu0
  %v1053 = vadd.f32 %v1009, %v1052
  %1054 = vmatmul.bf16.gmra.mxu0 %v381
  %v1055 = vpop.f32.mrf.mxu0
  %v1056 = vadd.f32 %v1012, %v1055
  %v1057 = vpop.f32.mrf.mxu0
  %v1058 = vadd.f32 %v1014, %v1057
  %1059 = vmatmul.bf16.gmra.mxu0 %v389
  %v1060 = vpop.f32.mrf.mxu0
  %v1061 = vadd.f32 %v1017, %v1060
  %v1062 = vpop.f32.mrf.mxu0
  %v1063 = vadd.f32 %v1019, %v1062
  %1064 = vmatmul.bf16.gmra.mxu0 %v397
  %v1065 = vpop.f32.mrf.mxu0
  %v1066 = vadd.f32 %v1022, %v1065
  %v1067 = vpop.f32.mrf.mxu0
  %v1068 = vadd.f32 %v1024, %v1067
  %1069 = vmatmul.bf16.gmra.mxu0 %v405
  %v1070 = vpop.f32.mrf.mxu0
  %v1071 = vadd.f32 %v1027, %v1070
  %v1072 = vpop.f32.mrf.mxu0
  %v1073 = vadd.f32 %v1029, %v1072
  %1074 = vmatmul.bf16.gmra.mxu0 %v413
  %v1075 = vpop.f32.mrf.mxu0
  %v1076 = vadd.f32 %v1032, %v1075
  %v1077 = vpop.f32.mrf.mxu0
  %v1078 = vadd.f32 %v1034, %v1077
  %1079 = vmatmul.bf16.gmra.mxu0 %v421
  %v1080 = vpop.f32.mrf.mxu0
  %v1081 = vadd.f32 %v1037, %v1080
  %v1082 = vpop.f32.mrf.mxu0
  %v1083 = vadd.f32 %v1039, %v1082
  %1084 = vdwg.mxu0
  %1085 = vmatpush.bf16.msra.mxu0 %v784
  %1086 = vmatpush.bf16.msra.mxu0 %v783
  %1087 = vmatpush.bf16.msra.mxu0 %v782
  %1088 = vmatpush.bf16.msra.mxu0 %v781
  %1089 = vmatpush.bf16.msra.mxu0 %v780
  %1090 = vmatpush.bf16.msra.mxu0 %v779
  %1091 = vmatpush.bf16.msra.mxu0 %v778
  %1092 = vmatpush.bf16.msra.mxu0 %v777
  %1093 = vmatmul.bf16.gmra.mxu0 %v374
  %v1094 = vpop.f32.mrf.mxu0
  %v1095 = vadd.f32 %v1051, %v1094
  %v1096 = vpop.f32.mrf.mxu0
  %v1097 = vadd.f32 %v1053, %v1096
  %1098 = vmatmul.bf16.gmra.mxu0 %v382
  %v1099 = vpop.f32.mrf.mxu0
  %v1100 = vadd.f32 %v1056, %v1099
  %v1101 = vpop.f32.mrf.mxu0
  %v1102 = vadd.f32 %v1058, %v1101
  %1103 = vmatmul.bf16.gmra.mxu0 %v390
  %v1104 = vpop.f32.mrf.mxu0
  %v1105 = vadd.f32 %v1061, %v1104
  %v1106 = vpop.f32.mrf.mxu0
  %v1107 = vadd.f32 %v1063, %v1106
  %1108 = vmatmul.bf16.gmra.mxu0 %v398
  %v1109 = vpop.f32.mrf.mxu0
  %v1110 = vadd.f32 %v1066, %v1109
  %v1111 = vpop.f32.mrf.mxu0
  %v1112 = vadd.f32 %v1068, %v1111
  %1113 = vmatmul.bf16.gmra.mxu0 %v406
  %v1114 = vpop.f32.mrf.mxu0
  %v1115 = vadd.f32 %v1071, %v1114
  %v1116 = vpop.f32.mrf.mxu0
  %v1117 = vadd.f32 %v1073, %v1116
  %1118 = vmatmul.bf16.gmra.mxu0 %v414
  %v1119 = vpop.f32.mrf.mxu0
  %v1120 = vadd.f32 %v1076, %v1119
  %v1121 = vpop.f32.mrf.mxu0
  %v1122 = vadd.f32 %v1078, %v1121
  %1123 = vmatmul.bf16.gmra.mxu0 %v422
  %v1124 = vpop.f32.mrf.mxu0
  %v1125 = vadd.f32 %v1081, %v1124
  %v1126 = vpop.f32.mrf.mxu0
  %v1127 = vadd.f32 %v1083, %v1126
  %1128 = vdwg.mxu0
  %1129 = vmatpush.bf16.msra.mxu0 %v792
  %1130 = vmatpush.bf16.msra.mxu0 %v791
  %1131 = vmatpush.bf16.msra.mxu0 %v790
  %1132 = vmatpush.bf16.msra.mxu0 %v789
  %1133 = vmatpush.bf16.msra.mxu0 %v788
  %1134 = vmatpush.bf16.msra.mxu0 %v787
  %1135 = vmatpush.bf16.msra.mxu0 %v786
  %1136 = vmatpush.bf16.msra.mxu0 %v785
  %1137 = vmatmul.bf16.gmra.mxu0 %v375
  %v1138 = vpop.f32.mrf.mxu0
  %v1139 = vadd.f32 %v1095, %v1138
  %v1140 = vpop.f32.mrf.mxu0
  %v1141 = vadd.f32 %v1097, %v1140
  %1142 = vmatmul.bf16.gmra.mxu0 %v383
  %v1143 = vpop.f32.mrf.mxu0
  %v1144 = vadd.f32 %v1100, %v1143
  %v1145 = vpop.f32.mrf.mxu0
  %v1146 = vadd.f32 %v1102, %v1145
  %1147 = vmatmul.bf16.gmra.mxu0 %v391
  %v1148 = vpop.f32.mrf.mxu0
  %v1149 = vadd.f32 %v1105, %v1148
  %v1150 = vpop.f32.mrf.mxu0
  %v1151 = vadd.f32 %v1107, %v1150
  %1152 = vmatmul.bf16.gmra.mxu0 %v399
  %v1153 = vpop.f32.mrf.mxu0
  %v1154 = vadd.f32 %v1110, %v1153
  %v1155 = vpop.f32.mrf.mxu0
  %v1156 = vadd.f32 %v1112, %v1155
  %1157 = vmatmul.bf16.gmra.mxu0 %v407
  %v1158 = vpop.f32.mrf.mxu0
  %v1159 = vadd.f32 %v1115, %v1158
  %v1160 = vpop.f32.mrf.mxu0
  %v1161 = vadd.f32 %v1117, %v1160
  %1162 = vmatmul.bf16.gmra.mxu0 %v415
  %v1163 = vpop.f32.mrf.mxu0
  %v1164 = vadd.f32 %v1120, %v1163
  %v1165 = vpop.f32.mrf.mxu0
  %v1166 = vadd.f32 %v1122, %v1165
  %1167 = vmatmul.bf16.gmra.mxu0 %v423
  %v1168 = vpop.f32.mrf.mxu0
  %v1169 = vadd.f32 %v1125, %v1168
  %v1170 = vpop.f32.mrf.mxu0
  %v1171 = vadd.f32 %v1127, %v1170
  %1172 = vdwg.mxu0
  %1173 = vmatpush.bf16.msra.mxu0 %v800
  %1174 = vmatpush.bf16.msra.mxu0 %v799
  %1175 = vmatpush.bf16.msra.mxu0 %v798
  %1176 = vmatpush.bf16.msra.mxu0 %v797
  %1177 = vmatpush.bf16.msra.mxu0 %v796
  %1178 = vmatpush.bf16.msra.mxu0 %v795
  %1179 = vmatpush.bf16.msra.mxu0 %v794
  %1180 = vmatpush.bf16.msra.mxu0 %v793
  %1181 = vmatmul.bf16.gmra.mxu0 %v376
  %v1182 = vpop.f32.mrf.mxu0
  %v1183 = vadd.f32 %v1139, %v1182
  %v1184 = vpop.f32.mrf.mxu0
  %v1185 = vadd.f32 %v1141, %v1184
  %1186 = vmatmul.bf16.gmra.mxu0 %v384
  %v1187 = vpop.f32.mrf.mxu0
  %v1188 = vadd.f32 %v1144, %v1187
  %v1189 = vpop.f32.mrf.mxu0
  %v1190 = vadd.f32 %v1146, %v1189
  %1191 = vmatmul.bf16.gmra.mxu0 %v392
  %v1192 = vpop.f32.mrf.mxu0
  %v1193 = vadd.f32 %v1149, %v1192
  %v1194 = vpop.f32.mrf.mxu0
  %v1195 = vadd.f32 %v1151, %v1194
  %1196 = vmatmul.bf16.gmra.mxu0 %v400
  %v1197 = vpop.f32.mrf.mxu0
  %v1198 = vadd.f32 %v1154, %v1197
  %v1199 = vpop.f32.mrf.mxu0
  %v1200 = vadd.f32 %v1156, %v1199
  %1201 = vmatmul.bf16.gmra.mxu0 %v408
  %v1202 = vpop.f32.mrf.mxu0
  %v1203 = vadd.f32 %v1159, %v1202
  %v1204 = vpop.f32.mrf.mxu0
  %v1205 = vadd.f32 %v1161, %v1204
  %1206 = vmatmul.bf16.gmra.mxu0 %v416
  %v1207 = vpop.f32.mrf.mxu0
  %v1208 = vadd.f32 %v1164, %v1207
  %v1209 = vpop.f32.mrf.mxu0
  %v1210 = vadd.f32 %v1166, %v1209
  %1211 = vmatmul.bf16.gmra.mxu0 %v424
  %v1212 = vpop.f32.mrf.mxu0
  %v1213 = vadd.f32 %v1169, %v1212
  %v1214 = vpop.f32.mrf.mxu0
  %v1215 = vadd.f32 %v1171, %v1214
  %1216 = vdwg.mxu0
  %v1217 = vadd.f32 %v1183, %v1185
  %v1218 = vadd.f32 %v1217, %v1188
  %v1219 = vadd.f32 %v1218, %v1190
  %v1220 = vadd.f32 %v1219, %v1193
  %v1221 = vadd.f32 %v1220, %v1195
  %v1222 = vadd.f32 %v1221, %v1198
  %v1223 = vadd.f32 %v1222, %v1200
  %v1224 = vadd.f32 %v1223, %v1203
  %v1225 = vadd.f32 %v1224, %v1205
  %v1226 = vadd.f32 %v1225, %v1208
  %v1227 = vadd.f32 %v1226, %v1210
  %v1228 = vadd.f32 %v1227, %v1213
  %v1229 = vadd.f32 %v1228, %v1215
  %v1230 = vrot.slane %v1229, 4
  %v1231 = vadd.f32 %v1229, %v1230
  %v1232 = vrot.slane %v1231, 2
  %v1233 = vadd.f32 %v1231, %v1232
  %v1234 = vrot.slane %v1233, 1
  %v1235 = vadd.f32 %v1233, %v1234
  %v1236 = vmul.f32 %v1235, 0.010204081
  %v1237 = vmul.f32 %v1183, %v1183
  %v1238 = vmul.f32 %v1185, %v1185
  %v1239 = vmul.f32 %v1188, %v1188
  %v1240 = vmul.f32 %v1190, %v1190
  %v1241 = vmul.f32 %v1193, %v1193
  %v1242 = vmul.f32 %v1195, %v1195
  %v1243 = vmul.f32 %v1198, %v1198
  %v1244 = vmul.f32 %v1200, %v1200
  %v1245 = vmul.f32 %v1203, %v1203
  %v1246 = vmul.f32 %v1205, %v1205
  %v1247 = vmul.f32 %v1208, %v1208
  %v1248 = vmul.f32 %v1210, %v1210
  %v1249 = vmul.f32 %v1213, %v1213
  %v1250 = vmul.f32 %v1215, %v1215
  %v1251 = vadd.f32 %v1237, %v1238
  %v1252 = vadd.f32 %v1251, %v1239
  %v1253 = vadd.f32 %v1252, %v1240
  %v1254 = vadd.f32 %v1253, %v1241
  %v1255 = vadd.f32 %v1254, %v1242
  %v1256 = vadd.f32 %v1255, %v1243
  %v1257 = vadd.f32 %v1256, %v1244
  %v1258 = vadd.f32 %v1257, %v1245
  %v1259 = vadd.f32 %v1258, %v1246
  %v1260 = vadd.f32 %v1259, %v1247
  %v1261 = vadd.f32 %v1260, %v1248
  %v1262 = vadd.f32 %v1261, %v1249
  %v1263 = vadd.f32 %v1262, %v1250
  %v1264 = vrot.slane %v1263, 4
  %v1265 = vadd.f32 %v1263, %v1264
  %v1266 = vrot.slane %v1265, 2
  %v1267 = vadd.f32 %v1265, %v1266
  %v1268 = vrot.slane %v1267, 1
  %v1269 = vadd.f32 %v1267, %v1268
  %v1270 = vmul.f32 %v1269, 0.010204081
  %v1271 = vmul.f32 %v1236, %v1236
  %v1272 = vsub.f32 %v1270, %v1271
  %v1273 = vld [vmem:[%s2] sm:$0x1]
  %v1274 = vadd.f32 %v1272, 1e-05
  %v1275 = vrsqrt.pop %v1274
  %v1276 = vmul.f32 %v1275, %v1274
  %v1277 = vmul.f32 %v1276, %v1275
  %v1278 = vmul.f32 0.5, %v1277
  %v1279 = vsub.f32 1.5, %v1278
  %v1280 = vmul.f32 %v1275, %v1279
  %vm1281 = vweird.f32 %v1274
  %vm1282 = vweird.f32 %v1275
  %vm1283 = vmor %vm1281, %vm1282
  %v1284 = vsel %vm1283, %v1275, %v1280
  %v1285 = vmul.f32 %v1273, %v1284
  %v1286 = vld [vmem:[%s3] sm:$0x1]
  %v1287 = vmul.f32 %v1236, %v1285
  %v1288 = vsub.f32 %v1286, %v1287
  %v1290 = vperm.slane %v1285, 0
  %v1292 = vmul.f32 %v1183, %v1290
  %v1293 = vmul.f32 %v1185, %v1290
  %v1294 = vmul.f32 %v1188, %v1290
  %v1295 = vmul.f32 %v1190, %v1290
  %v1296 = vmul.f32 %v1193, %v1290
  %v1297 = vmul.f32 %v1195, %v1290
  %v1298 = vmul.f32 %v1198, %v1290
  %v1299 = vmul.f32 %v1200, %v1290
  %v1300 = vmul.f32 %v1203, %v1290
  %v1301 = vmul.f32 %v1205, %v1290
  %v1302 = vmul.f32 %v1208, %v1290
  %v1303 = vmul.f32 %v1210, %v1290
  %v1304 = vmul.f32 %v1213, %v1290
  %v1305 = vmul.f32 %v1215, %v1290
  %v1307 = vperm.slane %v1288, 0
  %v1309 = vadd.f32 %v1292, %v1307
  %v1310 = vadd.f32 %v1293, %v1307
  %v1311 = vadd.f32 %v1294, %v1307
  %v1312 = vadd.f32 %v1295, %v1307
  %v1313 = vadd.f32 %v1296, %v1307
  %v1314 = vadd.f32 %v1297, %v1307
  %v1315 = vadd.f32 %v1298, %v1307
  %v1316 = vadd.f32 %v1299, %v1307
  %v1317 = vadd.f32 %v1300, %v1307
  %v1318 = vadd.f32 %v1301, %v1307
  %v1319 = vadd.f32 %v1302, %v1307
  %v1320 = vadd.f32 %v1303, %v1307
  %v1321 = vadd.f32 %v1304, %v1307
  %v1322 = vadd.f32 %v1305, %v1307
  %v1323 = vmul.f32 %v1309, 0.2
  %v1324 = vmul.f32 %v1310, 0.2
  %v1325 = vmul.f32 %v1311, 0.2
  %v1326 = vmul.f32 %v1312, 0.2
  %v1327 = vmul.f32 %v1313, 0.2
  %v1328 = vmul.f32 %v1314, 0.2
  %v1329 = vmul.f32 %v1315, 0.2
  %v1330 = vmul.f32 %v1316, 0.2
  %v1331 = vmul.f32 %v1317, 0.2
  %v1332 = vmul.f32 %v1318, 0.2
  %v1333 = vmul.f32 %v1319, 0.2
  %v1334 = vmul.f32 %v1320, 0.2
  %v1335 = vmul.f32 %v1321, 0.2
  %v1336 = vmul.f32 %v1322, 0.2
  %v1337 = vmax.f32 %v1309, %v1323
  %v1338 = vmax.f32 %v1310, %v1324
  %v1339 = vmax.f32 %v1311, %v1325
  %v1340 = vmax.f32 %v1312, %v1326
  %v1341 = vmax.f32 %v1313, %v1327
  %v1342 = vmax.f32 %v1314, %v1328
  %v1343 = vmax.f32 %v1315, %v1329
  %v1344 = vmax.f32 %v1316, %v1330
  %v1345 = vmax.f32 %v1317, %v1331
  %v1346 = vmax.f32 %v1318, %v1332
  %v1347 = vmax.f32 %v1319, %v1333
  %v1348 = vmax.f32 %v1320, %v1334
  %v1349 = vmax.f32 %v1321, %v1335
  %v1350 = vmax.f32 %v1322, %v1336
  %v1351 = vpack.c.bf16 %v1337, %v1337
  %v1352 = vpack.c.bf16 %v1338, %v1338
  %v1353 = vpack.c.bf16 %v1339, %v1339
  %v1354 = vpack.c.bf16 %v1340, %v1340
  %v1355 = vpack.c.bf16 %v1341, %v1341
  %v1356 = vpack.c.bf16 %v1342, %v1342
  %v1357 = vpack.c.bf16 %v1343, %v1343
  %v1358 = vpack.c.bf16 %v1344, %v1344
  %v1359 = vpack.c.bf16 %v1345, %v1345
  %v1360 = vpack.c.bf16 %v1346, %v1346
  %v1361 = vpack.c.bf16 %v1347, %v1347
  %v1362 = vpack.c.bf16 %v1348, %v1348
  %v1363 = vpack.c.bf16 %v1349, %v1349
  %v1364 = vpack.c.bf16 %v1350, %v1350
  %1365 = vst [vmem:[%s4] sm:$0xf] %v1351
  %1366 = vst [vmem:[%s4 + $0x4] sm:$0xf] %v1352
  %1367 = vst [vmem:[%s4 + $0x8] sm:$0xf] %v1353
  %1368 = vst [vmem:[%s4 + $0xc] sm:$0xf] %v1354
  %1369 = vst [vmem:[%s4 + $0x10] sm:$0xf] %v1355
  %1370 = vst [vmem:[%s4 + $0x14] sm:$0xf] %v1356
  %1371 = vst [vmem:[%s4 + $0x18] sm:$0xf] %v1357
  %1372 = vst [vmem:[%s4 + $0x1c] sm:$0xf] %v1358
  %1373 = vst [vmem:[%s4 + $0x20] sm:$0xf] %v1359
  %1374 = vst [vmem:[%s4 + $0x24] sm:$0xf] %v1360
  %1375 = vst [vmem:[%s4 + $0x28] sm:$0xf] %v1361
  %1376 = vst [vmem:[%s4 + $0x2c] sm:$0xf] %v1362
  %1377 = vst [vmem:[%s4 + $0x30] sm:$0xf] %v1363
  %1378 = vst [vmem:[%s4 + $0x34] sm:$0xf] %v1364
  // Predicated region
  $region18: #{encoder_forward.6} parent=0 // pred_check
    _
  $region19: #{encoder_forward.6} parent=0 // pred_check_branch
    %1380 = sbr.rel (0) target = $region21
  $region20: #{encoder_forward.6} parent=0 // pred_region
    _
  $region21: #{encoder_forward.6} parent=0 // pred_fallthru
    _
  // Predicated region
  $region22: #{encoder_forward.6} parent=0 // pred_check
    _
  $region23: #{encoder_forward.6} parent=0 // pred_check_branch
    %1382 = sbr.rel (0) target = $region25
  $region24: #{encoder_forward.6} parent=0 // pred_region
    _
  $region25: #{encoder_forward.6} parent=0 // pred_fallthru
    _

// kernel: encoder_forward.7
$region0: #{encoder_forward.7}
  #allocation0 [shape = 'u32[]', space=smem, size = 0x4, offset = 0x4, fixed_abs, tag = 'smem constant byte address 0x4 - core index']
  #allocation1 [shape = 'u32[72,128]{1,0:T(1,128)}', space=vmem, size = 0x9000, scoped, tag = 'internal scratch']
  %s0 = inlined_call_operand.vmem [shape: bf16[32,1024], index: 0, kind: input, shape index: {}]
  %s1 = inlined_call_operand.vmem [shape: bf16[1024,128], index: 1, kind: input, shape index: {}]
  %s2 = inlined_call_operand.hbm [shape: f32[32,128], index: 2, kind: output, shape index: {}]
  %s3 = sld [smem:[#allocation0]]
  $region18: #{encoder_forward.7} parent=0
    _
  %s5 = ssub.s32 1, %s3
  %s6 = scalar_select 0, %s5, %s3
  $region1: #{encoder_forward.7} parent=0
    #allocation2 [shape = 'u8[16384]{0}', space=vmem, size = 0x4000, scoped, tag = 'output window, operand 0, single buffered']
    #allocation3 [shape = 's32[1]{0}', space=sflag, size = 0x4, scoped, tag = 'scoped memory for encoder_forward.7']
    %7 = vsyncpa [#allocation3], 0
    // Predicated region
    $region2: #{encoder_forward.7} parent=1 // pred_check
      _
    $region3: #{encoder_forward.7} parent=1 // pred_check_branch
      %9 = sbr.rel (0) target = $region5
    $region4: #{encoder_forward.7} parent=1 // pred_region
      _
    $region5: #{encoder_forward.7} parent=1 // pred_fallthru
      _
    // Predicated region
    $region6: #{encoder_forward.7} parent=1 // pred_check
      _
    $region7: #{encoder_forward.7} parent=1 // pred_check_branch
      %11 = sbr.rel (0) target = $region9
    $region8: #{encoder_forward.7} parent=1 // pred_region
      _
    $region9: #{encoder_forward.7} parent=1 // pred_fallthru
      _
    %v12 = vld [vmem:[%s0] sm:$0xff]
    %v13 = vld [vmem:[%s0 + $0x8] sm:$0xff]
    %v14 = vld [vmem:[%s0 + $0x10] sm:$0xff]
    %v15 = vld [vmem:[%s0 + $0x18] sm:$0xff]
    %v16 = vld [vmem:[%s0 + $0x20] sm:$0xff]
    %v17 = vld [vmem:[%s0 + $0x28] sm:$0xff]
    %v18 = vld [vmem:[%s0 + $0x30] sm:$0xff]
    %v19 = vld [vmem:[%s0 + $0x38] sm:$0xff]
    %v20 = vld [vmem:[%s0 + $0x40] sm:$0xff]
    %v21 = vld [vmem:[%s0 + $0x48] sm:$0xff]
    %v22 = vld [vmem:[%s0 + $0x50] sm:$0xff]
    %v23 = vld [vmem:[%s0 + $0x58] sm:$0xff]
    %v24 = vld [vmem:[%s0 + $0x60] sm:$0xff]
    %v25 = vld [vmem:[%s0 + $0x68] sm:$0xff]
    %v26 = vld [vmem:[%s0 + $0x70] sm:$0xff]
    %v27 = vld [vmem:[%s0 + $0x78] sm:$0xff]
    %v28 = vld [vmem:[%s1] sm:$0xf]
    %v29 = vld [vmem:[%s1 + $0x4] sm:$0xf]
    %v30 = vld [vmem:[%s1 + $0x8] sm:$0xf]
    %v31 = vld [vmem:[%s1 + $0xc] sm:$0xf]
    %v32 = vld [vmem:[%s1 + $0x10] sm:$0xf]
    %v33 = vld [vmem:[%s1 + $0x14] sm:$0xf]
    %v34 = vld [vmem:[%s1 + $0x18] sm:$0xf]
    %v35 = vld [vmem:[%s1 + $0x1c] sm:$0xf]
    %v36 = vld [vmem:[%s1 + $0x20] sm:$0xf]
    %v37 = vld [vmem:[%s1 + $0x24] sm:$0xf]
    %v38 = vld [vmem:[%s1 + $0x28] sm:$0xf]
    %v39 = vld [vmem:[%s1 + $0x2c] sm:$0xf]
    %v40 = vld [vmem:[%s1 + $0x30] sm:$0xf]
    %v41 = vld [vmem:[%s1 + $0x34] sm:$0xf]
    %v42 = vld [vmem:[%s1 + $0x38] sm:$0xf]
    %v43 = vld [vmem:[%s1 + $0x3c] sm:$0xf]
    %v44 = vld [vmem:[%s1 + $0x40] sm:$0xf]
    %v45 = vld [vmem:[%s1 + $0x44] sm:$0xf]
    %v46 = vld [vmem:[%s1 + $0x48] sm:$0xf]
    %v47 = vld [vmem:[%s1 + $0x4c] sm:$0xf]
    %v48 = vld [vmem:[%s1 + $0x50] sm:$0xf]
    %v49 = vld [vmem:[%s1 + $0x54] sm:$0xf]
    %v50 = vld [vmem:[%s1 + $0x58] sm:$0xf]
    %v51 = vld [vmem:[%s1 + $0x5c] sm:$0xf]
    %v52 = vld [vmem:[%s1 + $0x60] sm:$0xf]
    %v53 = vld [vmem:[%s1 + $0x64] sm:$0xf]
    %v54 = vld [vmem:[%s1 + $0x68] sm:$0xf]
    %v55 = vld [vmem:[%s1 + $0x6c] sm:$0xf]
    %v56 = vld [vmem:[%s1 + $0x70] sm:$0xf]
    %v57 = vld [vmem:[%s1 + $0x74] sm:$0xf]
    %v58 = vld [vmem:[%s1 + $0x78] sm:$0xf]
    %v59 = vld [vmem:[%s1 + $0x7c] sm:$0xf]
    %v60 = vld [vmem:[%s1 + $0x80] sm:$0xf]
    %v61 = vld [vmem:[%s1 + $0x84] sm:$0xf]
    %v62 = vld [vmem:[%s1 + $0x88] sm:$0xf]
    %v63 = vld [vmem:[%s1 + $0x8c] sm:$0xf]
    %v64 = vld [vmem:[%s1 + $0x90] sm:$0xf]
    %v65 = vld [vmem:[%s1 + $0x94] sm:$0xf]
    %v66 = vld [vmem:[%s1 + $0x98] sm:$0xf]
    %v67 = vld [vmem:[%s1 + $0x9c] sm:$0xf]
    %v68 = vld [vmem:[%s1 + $0xa0] sm:$0xf]
    %v69 = vld [vmem:[%s1 + $0xa4] sm:$0xf]
    %v70 = vld [vmem:[%s1 + $0xa8] sm:$0xf]
    %v71 = vld [vmem:[%s1 + $0xac] sm:$0xf]
    %v72 = vld [vmem:[%s1 + $0xb0] sm:$0xf]
    %v73 = vld [vmem:[%s1 + $0xb4] sm:$0xf]
    %v74 = vld [vmem:[%s1 + $0xb8] sm:$0xf]
    %v75 = vld [vmem:[%s1 + $0xbc] sm:$0xf]
    %v76 = vld [vmem:[%s1 + $0xc0] sm:$0xf]
    %v77 = vld [vmem:[%s1 + $0xc4] sm:$0xf]
    %v78 = vld [vmem:[%s1 + $0xc8] sm:$0xf]
    %v79 = vld [vmem:[%s1 + $0xcc] sm:$0xf]
    %v80 = vld [vmem:[%s1 + $0xd0] sm:$0xf]
    %v81 = vld [vmem:[%s1 + $0xd4] sm:$0xf]
    %v82 = vld [vmem:[%s1 + $0xd8] sm:$0xf]
    %v83 = vld [vmem:[%s1 + $0xdc] sm:$0xf]
    %v84 = vld [vmem:[%s1 + $0xe0] sm:$0xf]
    %v85 = vld [vmem:[%s1 + $0xe4] sm:$0xf]
    %v86 = vld [vmem:[%s1 + $0xe8] sm:$0xf]
    %v87 = vld [vmem:[%s1 + $0xec] sm:$0xf]
    %v88 = vld [vmem:[%s1 + $0xf0] sm:$0xf]
    %v89 = vld [vmem:[%s1 + $0xf4] sm:$0xf]
    %v90 = vld [vmem:[%s1 + $0xf8] sm:$0xf]
    %v91 = vld [vmem:[%s1 + $0xfc] sm:$0xf]
    %v92 = vld [vmem:[%s1 + $0x100] sm:$0xf]
    %v93 = vld [vmem:[%s1 + $0x104] sm:$0xf]
    %v94 = vld [vmem:[%s1 + $0x108] sm:$0xf]
    %v95 = vld [vmem:[%s1 + $0x10c] sm:$0xf]
    %v96 = vld [vmem:[%s1 + $0x110] sm:$0xf]
    %v97 = vld [vmem:[%s1 + $0x114] sm:$0xf]
    %v98 = vld [vmem:[%s1 + $0x118] sm:$0xf]
    %v99 = vld [vmem:[%s1 + $0x11c] sm:$0xf]
    %v100 = vld [vmem:[%s1 + $0x120] sm:$0xf]
    %v101 = vld [vmem:[%s1 + $0x124] sm:$0xf]
    %v102 = vld [vmem:[%s1 + $0x128] sm:$0xf]
    %v103 = vld [vmem:[%s1 + $0x12c] sm:$0xf]
    %v104 = vld [vmem:[%s1 + $0x130] sm:$0xf]
    %v105 = vld [vmem:[%s1 + $0x134] sm:$0xf]
    %v106 = vld [vmem:[%s1 + $0x138] sm:$0xf]
    %v107 = vld [vmem:[%s1 + $0x13c] sm:$0xf]
    %v108 = vld [vmem:[%s1 + $0x140] sm:$0xf]
    %v109 = vld [vmem:[%s1 + $0x144] sm:$0xf]
    %v110 = vld [vmem:[%s1 + $0x148] sm:$0xf]
    %v111 = vld [vmem:[%s1 + $0x14c] sm:$0xf]
    %v112 = vld [vmem:[%s1 + $0x150] sm:$0xf]
    %v113 = vld [vmem:[%s1 + $0x154] sm:$0xf]
    %v114 = vld [vmem:[%s1 + $0x158] sm:$0xf]
    %v115 = vld [vmem:[%s1 + $0x15c] sm:$0xf]
    %v116 = vld [vmem:[%s1 + $0x160] sm:$0xf]
    %v117 = vld [vmem:[%s1 + $0x164] sm:$0xf]
    %v118 = vld [vmem:[%s1 + $0x168] sm:$0xf]
    %v119 = vld [vmem:[%s1 + $0x16c] sm:$0xf]
    %v120 = vld [vmem:[%s1 + $0x170] sm:$0xf]
    %v121 = vld [vmem:[%s1 + $0x174] sm:$0xf]
    %v122 = vld [vmem:[%s1 + $0x178] sm:$0xf]
    %v123 = vld [vmem:[%s1 + $0x17c] sm:$0xf]
    %v124 = vld [vmem:[%s1 + $0x180] sm:$0xf]
    %v125 = vld [vmem:[%s1 + $0x184] sm:$0xf]
    %v126 = vld [vmem:[%s1 + $0x188] sm:$0xf]
    %v127 = vld [vmem:[%s1 + $0x18c] sm:$0xf]
    %v128 = vld [vmem:[%s1 + $0x190] sm:$0xf]
    %v129 = vld [vmem:[%s1 + $0x194] sm:$0xf]
    %v130 = vld [vmem:[%s1 + $0x198] sm:$0xf]
    %v131 = vld [vmem:[%s1 + $0x19c] sm:$0xf]
    %v132 = vld [vmem:[%s1 + $0x1a0] sm:$0xf]
    %v133 = vld [vmem:[%s1 + $0x1a4] sm:$0xf]
    %v134 = vld [vmem:[%s1 + $0x1a8] sm:$0xf]
    %v135 = vld [vmem:[%s1 + $0x1ac] sm:$0xf]
    %v136 = vld [vmem:[%s1 + $0x1b0] sm:$0xf]
    %v137 = vld [vmem:[%s1 + $0x1b4] sm:$0xf]
    %v138 = vld [vmem:[%s1 + $0x1b8] sm:$0xf]
    %v139 = vld [vmem:[%s1 + $0x1bc] sm:$0xf]
    %v140 = vld [vmem:[%s1 + $0x1c0] sm:$0xf]
    %v141 = vld [vmem:[%s1 + $0x1c4] sm:$0xf]
    %v142 = vld [vmem:[%s1 + $0x1c8] sm:$0xf]
    %v143 = vld [vmem:[%s1 + $0x1cc] sm:$0xf]
    %v144 = vld [vmem:[%s1 + $0x1d0] sm:$0xf]
    %v145 = vld [vmem:[%s1 + $0x1d4] sm:$0xf]
    %v146 = vld [vmem:[%s1 + $0x1d8] sm:$0xf]
    %v147 = vld [vmem:[%s1 + $0x1dc] sm:$0xf]
    %v148 = vld [vmem:[%s1 + $0x1e0] sm:$0xf]
    %v149 = vld [vmem:[%s1 + $0x1e4] sm:$0xf]
    %v150 = vld [vmem:[%s1 + $0x1e8] sm:$0xf]
    %v151 = vld [vmem:[%s1 + $0x1ec] sm:$0xf]
    %v152 = vld [vmem:[%s1 + $0x1f0] sm:$0xf]
    %v153 = vld [vmem:[%s1 + $0x1f4] sm:$0xf]
    %v154 = vld [vmem:[%s1 + $0x1f8] sm:$0xf]
    %v155 = vld [vmem:[%s1 + $0x1fc] sm:$0xf]
    %v172 = vunpack.c.l.b16 %v12
    %v173 = vunpack.c.h.b16 %v12
    %v174 = vunpack.c.l.b16 %v13
    %v175 = vunpack.c.h.b16 %v13
    %v176 = vunpack.c.l.b16 %v14
    %v177 = vunpack.c.h.b16 %v14
    %v178 = vunpack.c.l.b16 %v15
    %v179 = vunpack.c.h.b16 %v15
    %v180 = vunpack.c.l.b16 %v16
    %v181 = vunpack.c.h.b16 %v16
    %v182 = vunpack.c.l.b16 %v17
    %v183 = vunpack.c.h.b16 %v17
    %v184 = vunpack.c.l.b16 %v18
    %v185 = vunpack.c.h.b16 %v18
    %v186 = vunpack.c.l.b16 %v19
    %v187 = vunpack.c.h.b16 %v19
    %v188 = vunpack.c.l.b16 %v20
    %v189 = vunpack.c.h.b16 %v20
    %v190 = vunpack.c.l.b16 %v21
    %v191 = vunpack.c.h.b16 %v21
    %v192 = vunpack.c.l.b16 %v22
    %v193 = vunpack.c.h.b16 %v22
    %v194 = vunpack.c.l.b16 %v23
    %v195 = vunpack.c.h.b16 %v23
    %v196 = vunpack.c.l.b16 %v24
    %v197 = vunpack.c.h.b16 %v24
    %v198 = vunpack.c.l.b16 %v25
    %v199 = vunpack.c.h.b16 %v25
    %v200 = vunpack.c.l.b16 %v26
    %v201 = vunpack.c.h.b16 %v26
    %v202 = vunpack.c.l.b16 %v27
    %v203 = vunpack.c.h.b16 %v27
    %v204 = vpack.c.b16 %v180, %v172
    %v205 = vpack.c.b16 %v181, %v173
    %v206 = vpack.c.b16 %v182, %v174
    %v207 = vpack.c.b16 %v183, %v175
    %v208 = vpack.c.b16 %v184, %v176
    %v209 = vpack.c.b16 %v185, %v177
    %v210 = vpack.c.b16 %v186, %v178
    %v211 = vpack.c.b16 %v187, %v179
    %v212 = vpack.c.b16 %v196, %v188
    %v213 = vpack.c.b16 %v197, %v189
    %v214 = vpack.c.b16 %v198, %v190
    %v215 = vpack.c.b16 %v199, %v191
    %v216 = vpack.c.b16 %v200, %v192
    %v217 = vpack.c.b16 %v201, %v193
    %v218 = vpack.c.b16 %v202, %v194
    %v219 = vpack.c.b16 %v203, %v195
    %v364 = vunpack.c.l.b16 %v28
    %v365 = vunpack.c.l.b16 %v29
    %v366 = vunpack.c.l.b16 %v30
    %v367 = vunpack.c.l.b16 %v31
    %v368 = vunpack.c.l.b16 %v32
    %v369 = vunpack.c.l.b16 %v33
    %v370 = vunpack.c.l.b16 %v34
    %v371 = vunpack.c.l.b16 %v35
    %v372 = vunpack.c.l.b16 %v36
    %v373 = vunpack.c.l.b16 %v37
    %v374 = vunpack.c.l.b16 %v38
    %v375 = vunpack.c.l.b16 %v39
    %v376 = vunpack.c.l.b16 %v40
    %v377 = vunpack.c.l.b16 %v41
    %v378 = vunpack.c.l.b16 %v42
    %v379 = vunpack.c.l.b16 %v43
    %v380 = vunpack.c.l.b16 %v44
    %v381 = vunpack.c.l.b16 %v45
    %v382 = vunpack.c.l.b16 %v46
    %v383 = vunpack.c.l.b16 %v47
    %v384 = vunpack.c.l.b16 %v48
    %v385 = vunpack.c.l.b16 %v49
    %v386 = vunpack.c.l.b16 %v50
    %v387 = vunpack.c.l.b16 %v51
    %v388 = vunpack.c.l.b16 %v52
    %v389 = vunpack.c.l.b16 %v53
    %v390 = vunpack.c.l.b16 %v54
    %v391 = vunpack.c.l.b16 %v55
    %v392 = vunpack.c.l.b16 %v56
    %v393 = vunpack.c.l.b16 %v57
    %v394 = vunpack.c.l.b16 %v58
    %v395 = vunpack.c.l.b16 %v59
    %v396 = vunpack.c.l.b16 %v60
    %v397 = vunpack.c.l.b16 %v61
    %v398 = vunpack.c.l.b16 %v62
    %v399 = vunpack.c.l.b16 %v63
    %v400 = vunpack.c.l.b16 %v64
    %v401 = vunpack.c.l.b16 %v65
    %v402 = vunpack.c.l.b16 %v66
    %v403 = vunpack.c.l.b16 %v67
    %v404 = vunpack.c.l.b16 %v68
    %v405 = vunpack.c.l.b16 %v69
    %v406 = vunpack.c.l.b16 %v70
    %v407 = vunpack.c.l.b16 %v71
    %v408 = vunpack.c.l.b16 %v72
    %v409 = vunpack.c.l.b16 %v73
    %v410 = vunpack.c.l.b16 %v74
    %v411 = vunpack.c.l.b16 %v75
    %v412 = vunpack.c.l.b16 %v76
    %v413 = vunpack.c.l.b16 %v77
    %v414 = vunpack.c.l.b16 %v78
    %v415 = vunpack.c.l.b16 %v79
    %v416 = vunpack.c.l.b16 %v80
    %v417 = vunpack.c.l.b16 %v81
    %v418 = vunpack.c.l.b16 %v82
    %v419 = vunpack.c.l.b16 %v83
    %v420 = vunpack.c.l.b16 %v84
    %v421 = vunpack.c.l.b16 %v85
    %v422 = vunpack.c.l.b16 %v86
    %v423 = vunpack.c.l.b16 %v87
    %v424 = vunpack.c.l.b16 %v88
    %v425 = vunpack.c.l.b16 %v89
    %v426 = vunpack.c.l.b16 %v90
    %v427 = vunpack.c.l.b16 %v91
    %v428 = vunpack.c.l.b16 %v92
    %v429 = vunpack.c.l.b16 %v93
    %v430 = vunpack.c.l.b16 %v94
    %v431 = vunpack.c.l.b16 %v95
    %v432 = vunpack.c.l.b16 %v96
    %v433 = vunpack.c.l.b16 %v97
    %v434 = vunpack.c.l.b16 %v98
    %v435 = vunpack.c.l.b16 %v99
    %v436 = vunpack.c.l.b16 %v100
    %v437 = vunpack.c.l.b16 %v101
    %v438 = vunpack.c.l.b16 %v102
    %v439 = vunpack.c.l.b16 %v103
    %v440 = vunpack.c.l.b16 %v104
    %v441 = vunpack.c.l.b16 %v105
    %v442 = vunpack.c.l.b16 %v106
    %v443 = vunpack.c.l.b16 %v107
    %v444 = vunpack.c.l.b16 %v108
    %v445 = vunpack.c.l.b16 %v109
    %v446 = vunpack.c.l.b16 %v110
    %v447 = vunpack.c.l.b16 %v111
    %v448 = vunpack.c.l.b16 %v112
    %v449 = vunpack.c.l.b16 %v113
    %v450 = vunpack.c.l.b16 %v114
    %v451 = vunpack.c.l.b16 %v115
    %v452 = vunpack.c.l.b16 %v116
    %v453 = vunpack.c.l.b16 %v117
    %v454 = vunpack.c.l.b16 %v118
    %v455 = vunpack.c.l.b16 %v119
    %v456 = vunpack.c.l.b16 %v120
    %v457 = vunpack.c.l.b16 %v121
    %v458 = vunpack.c.l.b16 %v122
    %v459 = vunpack.c.l.b16 %v123
    %v460 = vunpack.c.l.b16 %v124
    %v461 = vunpack.c.l.b16 %v125
    %v462 = vunpack.c.l.b16 %v126
    %v463 = vunpack.c.l.b16 %v127
    %v464 = vunpack.c.l.b16 %v128
    %v465 = vunpack.c.l.b16 %v129
    %v466 = vunpack.c.l.b16 %v130
    %v467 = vunpack.c.l.b16 %v131
    %v468 = vunpack.c.l.b16 %v132
    %v469 = vunpack.c.l.b16 %v133
    %v470 = vunpack.c.l.b16 %v134
    %v471 = vunpack.c.l.b16 %v135
    %v472 = vunpack.c.l.b16 %v136
    %v473 = vunpack.c.l.b16 %v137
    %v474 = vunpack.c.l.b16 %v138
    %v475 = vunpack.c.l.b16 %v139
    %v476 = vunpack.c.l.b16 %v140
    %v477 = vunpack.c.l.b16 %v141
    %v478 = vunpack.c.l.b16 %v142
    %v479 = vunpack.c.l.b16 %v143
    %v480 = vunpack.c.l.b16 %v144
    %v481 = vunpack.c.l.b16 %v145
    %v482 = vunpack.c.l.b16 %v146
    %v483 = vunpack.c.l.b16 %v147
    %v484 = vunpack.c.l.b16 %v148
    %v485 = vunpack.c.l.b16 %v149
    %v486 = vunpack.c.l.b16 %v150
    %v487 = vunpack.c.l.b16 %v151
    %v488 = vunpack.c.l.b16 %v152
    %v489 = vunpack.c.l.b16 %v153
    %v490 = vunpack.c.l.b16 %v154
    %v491 = vunpack.c.l.b16 %v155
    %v492 = vpack.c.b16 %v365, %v364
    %v493 = vpack.c.b16 %v367, %v366
    %v494 = vpack.c.b16 %v369, %v368
    %v495 = vpack.c.b16 %v371, %v370
    %v496 = vpack.c.b16 %v373, %v372
    %v497 = vpack.c.b16 %v375, %v374
    %v498 = vpack.c.b16 %v377, %v376
    %v499 = vpack.c.b16 %v379, %v378
    %v500 = vpack.c.b16 %v381, %v380
    %v501 = vpack.c.b16 %v383, %v382
    %v502 = vpack.c.b16 %v385, %v384
    %v503 = vpack.c.b16 %v387, %v386
    %v504 = vpack.c.b16 %v389, %v388
    %v505 = vpack.c.b16 %v391, %v390
    %v506 = vpack.c.b16 %v393, %v392
    %v507 = vpack.c.b16 %v395, %v394
    %v508 = vpack.c.b16 %v397, %v396
    %v509 = vpack.c.b16 %v399, %v398
    %v510 = vpack.c.b16 %v401, %v400
    %v511 = vpack.c.b16 %v403, %v402
    %v512 = vpack.c.b16 %v405, %v404
    %v513 = vpack.c.b16 %v407, %v406
    %v514 = vpack.c.b16 %v409, %v408
    %v515 = vpack.c.b16 %v411, %v410
    %v516 = vpack.c.b16 %v413, %v412
    %v517 = vpack.c.b16 %v415, %v414
    %v518 = vpack.c.b16 %v417, %v416
    %v519 = vpack.c.b16 %v419, %v418
    %v520 = vpack.c.b16 %v421, %v420
    %v521 = vpack.c.b16 %v423, %v422
    %v522 = vpack.c.b16 %v425, %v424
    %v523 = vpack.c.b16 %v427, %v426
    %v524 = vpack.c.b16 %v429, %v428
    %v525 = vpack.c.b16 %v431, %v430
    %v526 = vpack.c.b16 %v433, %v432
    %v527 = vpack.c.b16 %v435, %v434
    %v528 = vpack.c.b16 %v437, %v436
    %v529 = vpack.c.b16 %v439, %v438
    %v530 = vpack.c.b16 %v441, %v440
    %v531 = vpack.c.b16 %v443, %v442
    %v532 = vpack.c.b16 %v445, %v444
    %v533 = vpack.c.b16 %v447, %v446
    %v534 = vpack.c.b16 %v449, %v448
    %v535 = vpack.c.b16 %v451, %v450
    %v536 = vpack.c.b16 %v453, %v452
    %v537 = vpack.c.b16 %v455, %v454
    %v538 = vpack.c.b16 %v457, %v456
    %v539 = vpack.c.b16 %v459, %v458
    %v540 = vpack.c.b16 %v461, %v460
    %v541 = vpack.c.b16 %v463, %v462
    %v542 = vpack.c.b16 %v465, %v464
    %v543 = vpack.c.b16 %v467, %v466
    %v544 = vpack.c.b16 %v469, %v468
    %v545 = vpack.c.b16 %v471, %v470
    %v546 = vpack.c.b16 %v473, %v472
    %v547 = vpack.c.b16 %v475, %v474
    %v548 = vpack.c.b16 %v477, %v476
    %v549 = vpack.c.b16 %v479, %v478
    %v550 = vpack.c.b16 %v481, %v480
    %v551 = vpack.c.b16 %v483, %v482
    %v552 = vpack.c.b16 %v485, %v484
    %v553 = vpack.c.b16 %v487, %v486
    %v554 = vpack.c.b16 %v489, %v488
    %v555 = vpack.c.b16 %v491, %v490
    %620 = vmatpush.bf16.msra.mxu0 %v499
    %621 = vmatpush.bf16.msra.mxu0 %v498
    %622 = vmatpush.bf16.msra.mxu0 %v497
    %623 = vmatpush.bf16.msra.mxu0 %v496
    %624 = vmatpush.bf16.msra.mxu0 %v495
    %625 = vmatpush.bf16.msra.mxu0 %v494
    %626 = vmatpush.bf16.msra.mxu0 %v493
    %627 = vmatpush.bf16.msra.mxu0 %v492
    %628 = vmatmul.bf16.gmra.mxu0 %v204
    %v629 = vpop.f32.mrf.mxu0
    %v630 = vadd.f32 0.0, %v629
    %v631 = vpop.f32.mrf.mxu0
    %v632 = vadd.f32 0.0, %v631
    %633 = vmatmul.bf16.gmra.mxu0 %v212
    %v634 = vpop.f32.mrf.mxu0
    %v635 = vadd.f32 0.0, %v634
    %v636 = vpop.f32.mrf.mxu0
    %v637 = vadd.f32 0.0, %v636
    %638 = vdwg.mxu0
    %639 = vmatpush.bf16.msra.mxu0 %v507
    %640 = vmatpush.bf16.msra.mxu0 %v506
    %641 = vmatpush.bf16.msra.mxu0 %v505
    %642 = vmatpush.bf16.msra.mxu0 %v504
    %643 = vmatpush.bf16.msra.mxu0 %v503
    %644 = vmatpush.bf16.msra.mxu0 %v502
    %645 = vmatpush.bf16.msra.mxu0 %v501
    %646 = vmatpush.bf16.msra.mxu0 %v500
    %647 = vmatmul.bf16.gmra.mxu0 %v205
    %v648 = vpop.f32.mrf.mxu0
    %v649 = vadd.f32 %v630, %v648
    %v650 = vpop.f32.mrf.mxu0
    %v651 = vadd.f32 %v632, %v650
    %652 = vmatmul.bf16.gmra.mxu0 %v213
    %v653 = vpop.f32.mrf.mxu0
    %v654 = vadd.f32 %v635, %v653
    %v655 = vpop.f32.mrf.mxu0
    %v656 = vadd.f32 %v637, %v655
    %657 = vdwg.mxu0
    %658 = vmatpush.bf16.msra.mxu0 %v515
    %659 = vmatpush.bf16.msra.mxu0 %v514
    %660 = vmatpush.bf16.msra.mxu0 %v513
    %661 = vmatpush.bf16.msra.mxu0 %v512
    %662 = vmatpush.bf16.msra.mxu0 %v511
    %663 = vmatpush.bf16.msra.mxu0 %v510
    %664 = vmatpush.bf16.msra.mxu0 %v509
    %665 = vmatpush.bf16.msra.mxu0 %v508
    %666 = vmatmul.bf16.gmra.mxu0 %v206
    %v667 = vpop.f32.mrf.mxu0
    %v668 = vadd.f32 %v649, %v667
    %v669 = vpop.f32.mrf.mxu0
    %v670 = vadd.f32 %v651, %v669
    %671 = vmatmul.bf16.gmra.mxu0 %v214
    %v672 = vpop.f32.mrf.mxu0
    %v673 = vadd.f32 %v654, %v672
    %v674 = vpop.f32.mrf.mxu0
    %v675 = vadd.f32 %v656, %v674
    %676 = vdwg.mxu0
    %677 = vmatpush.bf16.msra.mxu0 %v523
    %678 = vmatpush.bf16.msra.mxu0 %v522
    %679 = vmatpush.bf16.msra.mxu0 %v521
    %680 = vmatpush.bf16.msra.mxu0 %v520
    %681 = vmatpush.bf16.msra.mxu0 %v519
    %682 = vmatpush.bf16.msra.mxu0 %v518
    %683 = vmatpush.bf16.msra.mxu0 %v517
    %684 = vmatpush.bf16.msra.mxu0 %v516
    %685 = vmatmul.bf16.gmra.mxu0 %v207
    %v686 = vpop.f32.mrf.mxu0
    %v687 = vadd.f32 %v668, %v686
    %v688 = vpop.f32.mrf.mxu0
    %v689 = vadd.f32 %v670, %v688
    %690 = vmatmul.bf16.gmra.mxu0 %v215
    %v691 = vpop.f32.mrf.mxu0
    %v692 = vadd.f32 %v673, %v691
    %v693 = vpop.f32.mrf.mxu0
    %v694 = vadd.f32 %v675, %v693
    %695 = vdwg.mxu0
    %696 = vmatpush.bf16.msra.mxu0 %v531
    %697 = vmatpush.bf16.msra.mxu0 %v530
    %698 = vmatpush.bf16.msra.mxu0 %v529
    %699 = vmatpush.bf16.msra.mxu0 %v528
    %700 = vmatpush.bf16.msra.mxu0 %v527
    %701 = vmatpush.bf16.msra.mxu0 %v526
    %702 = vmatpush.bf16.msra.mxu0 %v525
    %703 = vmatpush.bf16.msra.mxu0 %v524
    %704 = vmatmul.bf16.gmra.mxu0 %v208
    %v705 = vpop.f32.mrf.mxu0
    %v706 = vadd.f32 %v687, %v705
    %v707 = vpop.f32.mrf.mxu0
    %v708 = vadd.f32 %v689, %v707
    %709 = vmatmul.bf16.gmra.mxu0 %v216
    %v710 = vpop.f32.mrf.mxu0
    %v711 = vadd.f32 %v692, %v710
    %v712 = vpop.f32.mrf.mxu0
    %v713 = vadd.f32 %v694, %v712
    %714 = vdwg.mxu0
    %715 = vmatpush.bf16.msra.mxu0 %v539
    %716 = vmatpush.bf16.msra.mxu0 %v538
    %717 = vmatpush.bf16.msra.mxu0 %v537
    %718 = vmatpush.bf16.msra.mxu0 %v536
    %719 = vmatpush.bf16.msra.mxu0 %v535
    %720 = vmatpush.bf16.msra.mxu0 %v534
    %721 = vmatpush.bf16.msra.mxu0 %v533
    %722 = vmatpush.bf16.msra.mxu0 %v532
    %723 = vmatmul.bf16.gmra.mxu0 %v209
    %v724 = vpop.f32.mrf.mxu0
    %v725 = vadd.f32 %v706, %v724
    %v726 = vpop.f32.mrf.mxu0
    %v727 = vadd.f32 %v708, %v726
    %728 = vmatmul.bf16.gmra.mxu0 %v217
    %v729 = vpop.f32.mrf.mxu0
    %v730 = vadd.f32 %v711, %v729
    %v731 = vpop.f32.mrf.mxu0
    %v732 = vadd.f32 %v713, %v731
    %733 = vdwg.mxu0
    %734 = vmatpush.bf16.msra.mxu0 %v547
    %735 = vmatpush.bf16.msra.mxu0 %v546
    %736 = vmatpush.bf16.msra.mxu0 %v545
    %737 = vmatpush.bf16.msra.mxu0 %v544
    %738 = vmatpush.bf16.msra.mxu0 %v543
    %739 = vmatpush.bf16.msra.mxu0 %v542
    %740 = vmatpush.bf16.msra.mxu0 %v541
    %741 = vmatpush.bf16.msra.mxu0 %v540
    %742 = vmatmul.bf16.gmra.mxu0 %v210
    %v743 = vpop.f32.mrf.mxu0
    %v744 = vadd.f32 %v725, %v743
    %v745 = vpop.f32.mrf.mxu0
    %v746 = vadd.f32 %v727, %v745
    %747 = vmatmul.bf16.gmra.mxu0 %v218
    %v748 = vpop.f32.mrf.mxu0
    %v749 = vadd.f32 %v730, %v748
    %v750 = vpop.f32.mrf.mxu0
    %v751 = vadd.f32 %v732, %v750
    %752 = vdwg.mxu0
    %753 = vmatpush.bf16.msra.mxu0 %v555
    %754 = vmatpush.bf16.msra.mxu0 %v554
    %755 = vmatpush.bf16.msra.mxu0 %v553
    %756 = vmatpush.bf16.msra.mxu0 %v552
    %757 = vmatpush.bf16.msra.mxu0 %v551
    %758 = vmatpush.bf16.msra.mxu0 %v550
    %759 = vmatpush.bf16.msra.mxu0 %v549
    %760 = vmatpush.bf16.msra.mxu0 %v548
    %761 = vmatmul.bf16.gmra.mxu0 %v211
    %v762 = vpop.f32.mrf.mxu0
    %v763 = vadd.f32 %v744, %v762
    %v764 = vpop.f32.mrf.mxu0
    %v765 = vadd.f32 %v746, %v764
    %766 = vmatmul.bf16.gmra.mxu0 %v219
    %v767 = vpop.f32.mrf.mxu0
    %v768 = vadd.f32 %v749, %v767
    %v769 = vpop.f32.mrf.mxu0
    %v770 = vadd.f32 %v751, %v769
    %771 = vdwg.mxu0
    %772 = vst [vmem:[#allocation2] sm:$0xff] %v763
    %773 = vst [vmem:[#allocation2 + $0x8] sm:$0xff] %v765
    %774 = vst [vmem:[#allocation2 + $0x10] sm:$0xff] %v768
    %775 = vst [vmem:[#allocation2 + $0x18] sm:$0xff] %v770
    // Predicated region
    $region10: #{encoder_forward.7} parent=1 // pred_check
      _
    $region11: #{encoder_forward.7} parent=1 // pred_check_branch
      %777 = sbr.rel (0) target = $region13
    $region12: #{encoder_forward.7} parent=1 // pred_region
      %779 = vsyncadd [#allocation3], 0
      %s780 = sshll.u32 [#allocation2], 4
      %s781 = int_to_ptr.vmem [resolvable:$true] %s780
      %s782 = sshll.u32 %s2, 4
      %s783 = int_to_ptr.hbm [resolvable:$true] %s782
      %788 = dma.vmem_to_hbm [thread:$0]  %s781, 512, %s783, [#allocation3], 128, 128, 8
    $region13: #{encoder_forward.7} parent=1 // pred_fallthru
      _
    // Predicated region
    $region14: #{encoder_forward.7} parent=1 // pred_check
      _
    $region15: #{encoder_forward.7} parent=1 // pred_check_branch
      %790 = sbr.rel (0) target = $region17
    $region16: #{encoder_forward.7} parent=1 // pred_region
      %792 = dma.done [#allocation3], 512
    $region17: #{encoder_forward.7} parent=1 // pred_fallthru
      _
    %793 = vsyncpa [#allocation3], 1

</llo_original>
